<compile_context>
chip_gen: v7x
topology: tpu7x:2x2x1
jax: 0.10.0
libtpu: 0.0.40
codegen_flags: <defaults>
</compile_context>

<pallas_src>
import functools

import jax
import jax.numpy as jnp
import numpy as np
from jax.experimental import pallas as pl
from jax.experimental.pallas import tpu as pltpu

F32 = jnp.float32
VMEM_SPEC = pl.BlockSpec(memory_space=pltpu.MemorySpace.VMEM)
ANY_SPEC = pl.BlockSpec(memory_space=pl.ANY)

EXT2 = 7  # max |row shift| for conv2 window reads on the 6x6 (d,h) padded grid

# 128-lane-aligned offsets into the packed bias/shift vector (one small DMA).
OFF_S1, LEN_S1 = 0, 160      # conv1 BN shift, tiled over 8 w positions
OFF_S2, LEN_S2 = 256, 80     # conv2 BN shift, tiled over 4 w positions
OFF_B1, LEN_B1 = 384, 400    # linear1 bias
OFF_B2, LEN_B2 = 896, 200    # linear2 bias
OFF_B3, LEN_B3 = 1152, 200   # linear3 bias
OFF_B4, LEN_B4 = 1408, 1     # linear4 bias
VEC_W = 1536


# ----------------------------------------------------------------------------
# Fused forward kernel (single TensorCore, everything in VMEM)
# ----------------------------------------------------------------------------
def _fused_forward_kernel(N, win_ref, m1_ref, vec_ref, lw4_ref,
                          m2_hbm, lw1_hbm, lw2_hbm, lw3_hbm,
                          o_ref,
                          yw, x2e, y2s, m2v, lw1v, lw2v, lw3v, sems):
    """Scratch row layouts (channels / (w, c) on lanes):
         yw  : (N*64, 80)                rows=(n, d, h) dense,     lanes=(w_pool, c)
         x2e : (EXT2 + N*36 + EXT2, 120) rows=(n, d2_pad, h2_pad), lanes=(w2_pad, c)
         y2s : (N*36, 80)                rows=(n, d2_pad, h2_pad), lanes=(w2, c)
    """
    # -------- kick off weight prefetch; overlapped with conv1 / pooling --------
    cp_m2 = pltpu.make_async_copy(m2_hbm, m2v, sems.at[0])
    cp_l1 = pltpu.make_async_copy(lw1_hbm, lw1v, sems.at[1])
    cp_l2 = pltpu.make_async_copy(lw2_hbm, lw2v, sems.at[2])
    cp_l3 = pltpu.make_async_copy(lw3_hbm, lw3v, sems.at[3])
    cp_m2.start()
    cp_l1.start()
    cp_l2.start()
    cp_l3.start()

    # Zero the padded conv2 input grid (its zero border IS the conv2 padding).
    x2e[...] = jnp.zeros(x2e.shape, F32)

    # -------- conv1 (+ folded BN scale): one K=90 matmul per sample, then
    #          shift + ReLU + W-maxpool(2,2), one coalesced (64,80) store each --------
    shift1 = vec_ref[:, OFF_S1:OFF_S1 + LEN_S1]
    for n in range(N):
        y1 = jnp.dot(win_ref[pl.ds(n * 64, 64), :], m1_ref[...],
                     preferred_element_type=F32)                      # (64, 160)
        y1 = jnp.maximum(y1 + shift1, 0.0)
        yw[pl.ds(n * 64, 64), :] = jnp.concatenate(
            [jnp.maximum(y1[:, (2 * w) * 20:(2 * w) * 20 + 20],
                         y1[:, (2 * w + 1) * 20:(2 * w + 1) * 20 + 20])
             for w in range(4)], axis=1)                              # (64, 80)

    # -------- MaxPool3d(2, 2) over D/H (W already pooled on lanes) -> padded conv2 grid
    #          one (4, 80) slab store per (n, dq) --------
    for n in range(N):
        for dq in range(4):
            a = yw[pl.ds(n * 64 + (2 * dq) * 8, 8), :]                # d = 2*dq,   h=0..7
            b = yw[pl.ds(n * 64 + (2 * dq + 1) * 8, 8), :]            # d = 2*dq+1, h=0..7
            m = jnp.maximum(a, b)                                     # (8, 80)
            hp = jnp.concatenate(
                [jnp.maximum(m[2 * hq:2 * hq + 1, :], m[2 * hq + 1:2 * hq + 2, :])
                 for hq in range(4)], axis=0)                         # (4, 80) rows = hq
            r0 = EXT2 + n * 36 + (dq + 1) * 6 + 1
            x2e[pl.ds(r0, 4), 20:100] = hp

    # -------- conv2 (+ folded BN scale): 9 banded K=120 matmuls, back-to-back --------
    cp_m2.wait()
    R2 = N * 36
    y2 = jnp.zeros((R2, 80), F32)                                     # lanes = (w2, c)
    for kd in range(3):
        for kh in range(3):
            delta = (kd - 1) * 6 + (kh - 1)
            y2 = y2 + jnp.dot(x2e[pl.ds(EXT2 + delta, R2), :],
                              m2v[kd * 3 + kh],
                              preferred_element_type=F32)
    y2s[...] = jnp.maximum(y2 + vec_ref[:, OFF_S2:OFF_S2 + LEN_S2], 0.0)

    # -------- MaxPool3d(2,1) 4^3->3^3 + AdaptiveAvgPool3d(2) + flatten, in registers ----
    feat_rows = []
    for n in range(N):
        # wp[d2]: (4, 60) rows=h2, lanes=(w3, c) with the stride-1 W maxpool applied
        wp = []
        for d2 in range(4):
            rd = y2s[pl.ds(n * 36 + (d2 + 1) * 6 + 1, 4), :]          # (4, 80)
            wp.append(jnp.concatenate(
                [jnp.maximum(rd[:, w * 20:(w + 1) * 20],
                             rd[:, (w + 1) * 20:(w + 2) * 20]) for w in range(3)],
                axis=1))
        pd = [jnp.maximum(wp[d3], wp[d3 + 1]) for d3 in range(3)]     # D pool (4, 60)
        p3 = [jnp.maximum(pd[d3][0:3, :], pd[d3][1:4, :])             # H pool (3, 60)
              for d3 in range(3)]
        blocks = []
        for da in range(2):                                           # adaptive avg 3->2
            s = p3[da] + p3[da + 1]                                   # (3, 60)
            sh = s[0:2, :] + s[1:3, :]                                # (2, 60) rows = ha
            sw = jnp.concatenate([sh[:, 0:20] + sh[:, 20:40],
                                  sh[:, 20:40] + sh[:, 40:60]],
                                 axis=1) * 0.125                      # (2, 40) = (wa, c)
            blocks.extend([sw[0:1, :], sw[1:2, :]])                   # (da, ha) order
        feat_rows.append(jnp.concatenate(blocks, axis=1))             # (1, 160) (d,h,w,c)
    h = jnp.concatenate(feat_rows, axis=0)                            # (N, 160)

    # -------- fused 4-layer MLP head --------
    # TODO(synk): the three Dropout(p=0.5) layers are identity here (eval-mode semantics).
    cp_l1.wait()
    cp_l2.wait()
    cp_l3.wait()
    h = jnp.maximum(jnp.dot(h, lw1v[...], preferred_element_type=F32)
                    + vec_ref[:, OFF_B1:OFF_B1 + LEN_B1], 0.0)
    h = jnp.maximum(jnp.dot(h, lw2v[...], preferred_element_type=F32)
                    + vec_ref[:, OFF_B2:OFF_B2 + LEN_B2], 0.0)
    h = jnp.maximum(jnp.dot(h, lw3v[...], preferred_element_type=F32)
                    + vec_ref[:, OFF_B3:OFF_B3 + LEN_B3], 0.0)
    o_ref[...] = (jnp.dot(h, lw4_ref[...], preferred_element_type=F32)
                  + vec_ref[:, OFF_B4:OFF_B4 + LEN_B4])


def moudle1_forward(x_ncdhw, p):
    """x_ncdhw: (N, 1, 8, 8, 8) float32 (PyTorch NCDHW). Returns (N, 1)."""
    N, Cin, D, H, W = x_ncdhw.shape
    assert (Cin, D, H, W) == (1, 8, 8, 8), "kernel is sized for (N, 1, 8, 8, 8) input"
    x = x_ncdhw.reshape(N, 8, 8, 8).astype(F32)

    # Host/XLA-side LAYOUT only (zero-pad + (d,h) 3x3 window concat); all FLOPs stay
    # in-kernel.  Rows = (n, d_out, h_out); lanes = (tap kd*3+kh, padded w 0..9) -> 90.
    xp = jnp.pad(x, ((0, 0), (1, 1), (1, 1), (1, 1)))
    win = jnp.concatenate([xp[:, kd:kd + 8, kh:kh + 8, :]
                           for kd in range(3) for kh in range(3)],
                          axis=-1).reshape(N * 64, 90)

    kernel = functools.partial(_fused_forward_kernel, N)
    scratch = [
        pltpu.VMEM((N * 64, 80), F32),               # yw : conv1 out, W-pooled
        pltpu.VMEM((2 * EXT2 + N * 36, 120), F32),   # x2e: padded conv2 input grid
        pltpu.VMEM((N * 36, 80), F32),               # y2s: conv2 output (post BN+ReLU)
        pltpu.VMEM(p["m2"].shape, F32),              # m2v : prefetched conv2 weights
        pltpu.VMEM(p["lw1"].shape, F32),             # lw1v: prefetched MLP weights
        pltpu.VMEM(p["lw2"].shape, F32),
        pltpu.VMEM(p["lw3"].shape, F32),
        pltpu.SemaphoreType.DMA((4,)),
    ]
    return pl.pallas_call(
        kernel,
        out_shape=jax.ShapeDtypeStruct((N, 1), F32),
        in_specs=[VMEM_SPEC, VMEM_SPEC, VMEM_SPEC, VMEM_SPEC,
                  ANY_SPEC, ANY_SPEC, ANY_SPEC, ANY_SPEC],
        out_specs=VMEM_SPEC,
        scratch_shapes=scratch,
    )(win, p["m1"], p["vec"], p["lw4"], p["m2"], p["lw1"], p["lw2"], p["lw3"])


# ----------------------------------------------------------------------------
# Host-side weight preparation (BN folding + banded conv matrices)
# ----------------------------------------------------------------------------
def fold_bn(conv_bias, gamma, beta, run_mean, run_var, eps=1e-5):
    scale = gamma / jnp.sqrt(run_var + eps)
    shift = (conv_bias - run_mean) * scale + beta
    return scale.astype(F32), shift.astype(F32)


def _banded_conv1(w1, scale):
    """w1: (3,3,3,20) in (kd,kh,kw,cout) order. Returns a stacked (90, 160) banded
    matrix (BN scale folded in). Operand lanes = (tap, w_pad); output lanes = (w, c)."""
    w = np.asarray(w1) * np.asarray(scale)[None, None, None, :]
    m = np.zeros((9, 10, 8 * 20), np.float32)
    for kd in range(3):
        for kh in range(3):
            for wo in range(8):
                for kw in range(3):
                    m[kd * 3 + kh, wo + kw, wo * 20:(wo + 1) * 20] = w[kd, kh, kw]
    return jnp.asarray(m.reshape(90, 160))


def _banded_conv2(w2, scale):
    """w2: (3,3,3,20,20) in (kd,kh,kw,cin,cout) order. Returns (9, 120, 80)."""
    w = np.asarray(w2) * np.asarray(scale)[None, None, None, None, :]
    m = np.zeros((9, 6 * 20, 4 * 20), np.float32)
    for kd in range(3):
        for kh in range(3):
            for wo in range(4):
                for kw in range(3):
                    wi = wo + kw
                    m[kd * 3 + kh, wi * 20:(wi + 1) * 20, wo * 20:(wo + 1) * 20] = w[kd, kh, kw]
    return jnp.asarray(m)


def _pack_vec(shift1, shift2, lb1, lb2, lb3, lb4):
    """Pack all per-channel shifts / biases on 128-lane aligned offsets (one DMA)."""
    v = np.zeros((1, VEC_W), np.float32)
    v[0, OFF_S1:OFF_S1 + LEN_S1] = np.tile(np.asarray(shift1), 8)
    v[0, OFF_S2:OFF_S2 + LEN_S2] = np.tile(np.asarray(shift2), 4)
    v[0, OFF_B1:OFF_B1 + LEN_B1] = np.asarray(lb1)
    v[0, OFF_B2:OFF_B2 + LEN_B2] = np.asarray(lb2)
    v[0, OFF_B3:OFF_B3 + LEN_B3] = np.asarray(lb3)
    v[0, OFF_B4:OFF_B4 + LEN_B4] = np.asarray(lb4)
    return jnp.asarray(v)


def init_params(key):
    """Deterministic synthetic parameters (shapes from Moudle1.__init__), repacked for
    the fused kernel.  NOTE: real PyTorch Conv3d weights (cout,cin,kd,kh,kw) must be
    permuted to (kd,kh,kw,cin,cout) before _banded_conv*; a real Linear(link, dense1)
    weight must also have its input rows permuted from torch flatten order (c,d,h,w)
    to this kernel's (d,h,w,c) order."""
    C1, C2 = 20, 20
    dense1, dense2, dense3, dens_out = 400, 200, 200, 1
    ks = jax.random.split(key, 20)

    # conv1 + BN1
    w1 = jax.random.normal(ks[0], (3, 3, 3, C1), F32) * 0.1          # (kd,kh,kw,cout), cin=1
    cb1 = jax.random.normal(ks[1], (C1,), F32) * 0.01
    g1 = 1.0 + 0.1 * jax.random.normal(ks[2], (C1,), F32)
    be1 = 0.1 * jax.random.normal(ks[3], (C1,), F32)
    rm1 = 0.1 * jax.random.normal(ks[4], (C1,), F32)
    rv1 = 1.0 + 0.1 * jnp.abs(jax.random.normal(ks[5], (C1,), F32))
    scale1, shift1 = fold_bn(cb1, g1, be1, rm1, rv1)

    # conv2 + BN2
    w2 = jax.random.normal(ks[6], (3, 3, 3, C1, C2), F32) * 0.05     # (kd,kh,kw,cin,cout)
    cb2 = jax.random.normal(ks[7], (C2,), F32) * 0.01
    g2 = 1.0 + 0.1 * jax.random.normal(ks[8], (C2,), F32)
    be2 = 0.1 * jax.random.normal(ks[9], (C2,), F32)
    rm2 = 0.1 * jax.random.normal(ks[10], (C2,), F32)
    rv2 = 1.0 + 0.1 * jnp.abs(jax.random.normal(ks[11], (C2,), F32))
    scale2, shift2 = fold_bn(cb2, g2, be2, rm2, rv2)

    # MLP head (stored as (in, out); lw1 rows in the kernel's (d,h,w,c) flatten order)
    lw1 = jax.random.normal(ks[12], (160, dense1), F32) * 0.05
    lb1 = jax.random.normal(ks[13], (dense1,), F32) * 0.01
    lw2 = jax.random.normal(ks[14], (dense1, dense2), F32) * 0.05
    lb2 = jax.random.normal(ks[15], (dense2,), F32) * 0.01
    lw3 = jax.random.normal(ks[16], (dense2, dense3), F32) * 0.05
    lb3 = jax.random.normal(ks[17], (dense3,), F32) * 0.01
    lw4 = jax.random.normal(ks[18], (dense3, dens_out), F32) * 0.05
    lb4 = jax.random.normal(ks[19], (dens_out,), F32) * 0.01

    return {
        "m1": _banded_conv1(w1, scale1),                 # (90, 160)
        "m2": _banded_conv2(w2, scale2),                 # (9, 120, 80)
        "vec": _pack_vec(shift1, shift2, lb1, lb2, lb3, lb4),   # (1, 1536)
        "lw1": lw1, "lw2": lw2, "lw3": lw3, "lw4": lw4,
    }


if __name__ == "__main__":
    key = jax.random.PRNGKey(0)
    k_param, k_x = jax.random.split(key)
    params = init_params(k_param)
    x = jax.random.normal(k_x, (2, 1, 8, 8, 8), F32)       # (N, C, D, H, W)

    out = moudle1_forward(x, params)
    out = jax.block_until_ready(out)
    assert out.shape == (2, 1) and out.dtype == jnp.float32
    print("KERNEL_OK")
</pallas_src>

<mosaic_0001>
module attributes {stable_mosaic.version = 11 : i64} {
  func.func @_fused_forward_kernel(%arg0: memref<128x90xf32, #tpu.memory_space<vmem>>, %arg1: memref<90x160xf32, #tpu.memory_space<vmem>>, %arg2: memref<1x1536xf32, #tpu.memory_space<vmem>>, %arg3: memref<200x1xf32, #tpu.memory_space<vmem>>, %arg4: memref<9x120x80xf32, #tpu.memory_space<any>>, %arg5: memref<160x400xf32, #tpu.memory_space<any>>, %arg6: memref<400x200xf32, #tpu.memory_space<any>>, %arg7: memref<200x200xf32, #tpu.memory_space<any>>, %arg8: memref<2x1xf32, #tpu.memory_space<vmem>>, %arg9: memref<128x80xf32, #tpu.memory_space<vmem>>, %arg10: memref<86x120xf32, #tpu.memory_space<vmem>>, %arg11: memref<72x80xf32, #tpu.memory_space<vmem>>, %arg12: memref<9x120x80xf32, #tpu.memory_space<vmem>>, %arg13: memref<160x400xf32, #tpu.memory_space<vmem>>, %arg14: memref<400x200xf32, #tpu.memory_space<vmem>>, %arg15: memref<200x200xf32, #tpu.memory_space<vmem>>, %arg16: memref<4x!tpu.dma_semaphore, #tpu.memory_space<semaphore_mem>>) attributes {dimension_semantics = [], scalar_prefetch = 0 : i64, scratch_operands = 8 : i64, tpu.core_type = #tpu.core_type<tc>} {
    %c0_i32 = arith.constant 0 : i32
    %0 = tpu.memref_slice %arg16[%c0_i32] : memref<4x!tpu.dma_semaphore, #tpu.memory_space<semaphore_mem>> -> memref<1x!tpu.dma_semaphore, #tpu.memory_space<semaphore_mem>>
    %1 = tpu.memref_squeeze %0 : memref<1x!tpu.dma_semaphore, #tpu.memory_space<semaphore_mem>> -> memref<!tpu.dma_semaphore, #tpu.memory_space<semaphore_mem>>
    tpu.enqueue_dma source(%arg4 : memref<9x120x80xf32, #tpu.memory_space<any>>) target(%arg12 : memref<9x120x80xf32, #tpu.memory_space<vmem>>) target_semaphore(%1 : memref<!tpu.dma_semaphore, #tpu.memory_space<semaphore_mem>>)
    %c1_i32 = arith.constant 1 : i32
    %2 = tpu.memref_slice %arg16[%c1_i32] : memref<4x!tpu.dma_semaphore, #tpu.memory_space<semaphore_mem>> -> memref<1x!tpu.dma_semaphore, #tpu.memory_space<semaphore_mem>>
    %3 = tpu.memref_squeeze %2 : memref<1x!tpu.dma_semaphore, #tpu.memory_space<semaphore_mem>> -> memref<!tpu.dma_semaphore, #tpu.memory_space<semaphore_mem>>
    tpu.enqueue_dma source(%arg5 : memref<160x400xf32, #tpu.memory_space<any>>) target(%arg13 : memref<160x400xf32, #tpu.memory_space<vmem>>) target_semaphore(%3 : memref<!tpu.dma_semaphore, #tpu.memory_space<semaphore_mem>>)
    %c2_i32 = arith.constant 2 : i32
    %4 = tpu.memref_slice %arg16[%c2_i32] : memref<4x!tpu.dma_semaphore, #tpu.memory_space<semaphore_mem>> -> memref<1x!tpu.dma_semaphore, #tpu.memory_space<semaphore_mem>>
    %5 = tpu.memref_squeeze %4 : memref<1x!tpu.dma_semaphore, #tpu.memory_space<semaphore_mem>> -> memref<!tpu.dma_semaphore, #tpu.memory_space<semaphore_mem>>
    tpu.enqueue_dma source(%arg6 : memref<400x200xf32, #tpu.memory_space<any>>) target(%arg14 : memref<400x200xf32, #tpu.memory_space<vmem>>) target_semaphore(%5 : memref<!tpu.dma_semaphore, #tpu.memory_space<semaphore_mem>>)
    %c3_i32 = arith.constant 3 : i32
    %6 = tpu.memref_slice %arg16[%c3_i32] : memref<4x!tpu.dma_semaphore, #tpu.memory_space<semaphore_mem>> -> memref<1x!tpu.dma_semaphore, #tpu.memory_space<semaphore_mem>>
    %7 = tpu.memref_squeeze %6 : memref<1x!tpu.dma_semaphore, #tpu.memory_space<semaphore_mem>> -> memref<!tpu.dma_semaphore, #tpu.memory_space<semaphore_mem>>
    tpu.enqueue_dma source(%arg7 : memref<200x200xf32, #tpu.memory_space<any>>) target(%arg15 : memref<200x200xf32, #tpu.memory_space<vmem>>) target_semaphore(%7 : memref<!tpu.dma_semaphore, #tpu.memory_space<semaphore_mem>>)
    %cst = arith.constant 0.000000e+00 : f32
    %8 = vector.broadcast %cst : f32 to vector<86x120xf32>
    %c0 = arith.constant 0 : index
    %c0_0 = arith.constant 0 : index
    %9 = vector.load %arg10[%c0, %c0_0] : memref<86x120xf32, #tpu.memory_space<vmem>>, vector<86x120xf32>
    tpu.vector_store %arg10[%c0, %c0_0], %8 {strides = array<i32>} : memref<86x120xf32, #tpu.memory_space<vmem>>, vector<86x120xf32>,
    %c0_1 = arith.constant 0 : index
    %c0_2 = arith.constant 0 : index
    %10 = vector.load %arg2[%c0_1, %c0_2] : memref<1x1536xf32, #tpu.memory_space<vmem>>, vector<1x160xf32>
    %c0_3 = arith.constant 0 : index
    %c0_4 = arith.constant 0 : index
    %11 = vector.load %arg0[%c0_3, %c0_4] : memref<128x90xf32, #tpu.memory_space<vmem>>, vector<64x90xf32>
    %c0_5 = arith.constant 0 : index
    %c0_6 = arith.constant 0 : index
    %12 = vector.load %arg1[%c0_5, %c0_6] : memref<90x160xf32, #tpu.memory_space<vmem>>, vector<90x160xf32>
    %cst_7 = arith.constant dense<0.000000e+00> : vector<64x160xf32>
    %13 = tpu.matmul %11, %12, %cst_7 {dimension_numbers = #tpu.dot_dimension_numbers<[1], [0], [0], [1], [0, 0, 1, 1], [], []>} : vector<64x90xf32>, vector<90x160xf32>, vector<64x160xf32> -> vector<64x160xf32>
    %14 = vector.broadcast %10 : vector<1x160xf32> to vector<64x160xf32>
    %15 = arith.addf %13, %14 : vector<64x160xf32>
    %cst_8 = arith.constant 0.000000e+00 : f32
    %16 = vector.broadcast %cst_8 : f32 to vector<64x160xf32>
    %17 = arith.maximumf %15, %16 : vector<64x160xf32>
    %18 = vector.extract_strided_slice %17 {offsets = [0, 0], sizes = [64, 20], strides = [1, 1]} : vector<64x160xf32> to vector<64x20xf32>
    %19 = vector.extract_strided_slice %17 {offsets = [0, 20], sizes = [64, 20], strides = [1, 1]} : vector<64x160xf32> to vector<64x20xf32>
    %20 = arith.maximumf %18, %19 : vector<64x20xf32>
    %21 = vector.extract_strided_slice %17 {offsets = [0, 40], sizes = [64, 20], strides = [1, 1]} : vector<64x160xf32> to vector<64x20xf32>
    %22 = vector.extract_strided_slice %17 {offsets = [0, 60], sizes = [64, 20], strides = [1, 1]} : vector<64x160xf32> to vector<64x20xf32>
    %23 = arith.maximumf %21, %22 : vector<64x20xf32>
    %24 = vector.extract_strided_slice %17 {offsets = [0, 80], sizes = [64, 20], strides = [1, 1]} : vector<64x160xf32> to vector<64x20xf32>
    %25 = vector.extract_strided_slice %17 {offsets = [0, 100], sizes = [64, 20], strides = [1, 1]} : vector<64x160xf32> to vector<64x20xf32>
    %26 = arith.maximumf %24, %25 : vector<64x20xf32>
    %27 = vector.extract_strided_slice %17 {offsets = [0, 120], sizes = [64, 20], strides = [1, 1]} : vector<64x160xf32> to vector<64x20xf32>
    %28 = vector.extract_strided_slice %17 {offsets = [0, 140], sizes = [64, 20], strides = [1, 1]} : vector<64x160xf32> to vector<64x20xf32>
    %29 = arith.maximumf %27, %28 : vector<64x20xf32>
    %30 = tpu.concatenate %20, %23, %26, %29 in 1 : vector<64x20xf32>, vector<64x20xf32>, vector<64x20xf32>, vector<64x20xf32> -> vector<64x80xf32>
    %c0_9 = arith.constant 0 : index
    %c0_10 = arith.constant 0 : index
    %31 = vector.load %arg9[%c0_9, %c0_10] : memref<128x80xf32, #tpu.memory_space<vmem>>, vector<64x80xf32>
    tpu.vector_store %arg9[%c0_9, %c0_10], %30 {strides = array<i32>} : memref<128x80xf32, #tpu.memory_space<vmem>>, vector<64x80xf32>,
    %c64 = arith.constant 64 : index
    %c0_11 = arith.constant 0 : index
    %32 = vector.load %arg0[%c64, %c0_11] : memref<128x90xf32, #tpu.memory_space<vmem>>, vector<64x90xf32>
    %c0_12 = arith.constant 0 : index
    %c0_13 = arith.constant 0 : index
    %33 = vector.load %arg1[%c0_12, %c0_13] : memref<90x160xf32, #tpu.memory_space<vmem>>, vector<90x160xf32>
    %cst_14 = arith.constant dense<0.000000e+00> : vector<64x160xf32>
    %34 = tpu.matmul %32, %33, %cst_14 {dimension_numbers = #tpu.dot_dimension_numbers<[1], [0], [0], [1], [0, 0, 1, 1], [], []>} : vector<64x90xf32>, vector<90x160xf32>, vector<64x160xf32> -> vector<64x160xf32>
    %35 = vector.broadcast %10 : vector<1x160xf32> to vector<64x160xf32>
    %36 = arith.addf %34, %35 : vector<64x160xf32>
    %cst_15 = arith.constant 0.000000e+00 : f32
    %37 = vector.broadcast %cst_15 : f32 to vector<64x160xf32>
    %38 = arith.maximumf %36, %37 : vector<64x160xf32>
    %39 = vector.extract_strided_slice %38 {offsets = [0, 0], sizes = [64, 20], strides = [1, 1]} : vector<64x160xf32> to vector<64x20xf32>
    %40 = vector.extract_strided_slice %38 {offsets = [0, 20], sizes = [64, 20], strides = [1, 1]} : vector<64x160xf32> to vector<64x20xf32>
    %41 = arith.maximumf %39, %40 : vector<64x20xf32>
    %42 = vector.extract_strided_slice %38 {offsets = [0, 40], sizes = [64, 20], strides = [1, 1]} : vector<64x160xf32> to vector<64x20xf32>
    %43 = vector.extract_strided_slice %38 {offsets = [0, 60], sizes = [64, 20], strides = [1, 1]} : vector<64x160xf32> to vector<64x20xf32>
    %44 = arith.maximumf %42, %43 : vector<64x20xf32>
    %45 = vector.extract_strided_slice %38 {offsets = [0, 80], sizes = [64, 20], strides = [1, 1]} : vector<64x160xf32> to vector<64x20xf32>
    %46 = vector.extract_strided_slice %38 {offsets = [0, 100], sizes = [64, 20], strides = [1, 1]} : vector<64x160xf32> to vector<64x20xf32>
    %47 = arith.maximumf %45, %46 : vector<64x20xf32>
    %48 = vector.extract_strided_slice %38 {offsets = [0, 120], sizes = [64, 20], strides = [1, 1]} : vector<64x160xf32> to vector<64x20xf32>
    %49 = vector.extract_strided_slice %38 {offsets = [0, 140], sizes = [64, 20], strides = [1, 1]} : vector<64x160xf32> to vector<64x20xf32>
    %50 = arith.maximumf %48, %49 : vector<64x20xf32>
    %51 = tpu.concatenate %41, %44, %47, %50 in 1 : vector<64x20xf32>, vector<64x20xf32>, vector<64x20xf32>, vector<64x20xf32> -> vector<64x80xf32>
    %c64_16 = arith.constant 64 : index
    %c0_17 = arith.constant 0 : index
    %52 = vector.load %arg9[%c64_16, %c0_17] : memref<128x80xf32, #tpu.memory_space<vmem>>, vector<64x80xf32>
    tpu.vector_store %arg9[%c64_16, %c0_17], %51 {strides = array<i32>} : memref<128x80xf32, #tpu.memory_space<vmem>>, vector<64x80xf32>,
    %c0_18 = arith.constant 0 : index
    %c0_19 = arith.constant 0 : index
    %53 = vector.load %arg9[%c0_18, %c0_19] : memref<128x80xf32, #tpu.memory_space<vmem>>, vector<8x80xf32>
    %c8 = arith.constant 8 : index
    %c0_20 = arith.constant 0 : index
    %54 = vector.load %arg9[%c8, %c0_20] : memref<128x80xf32, #tpu.memory_space<vmem>>, vector<8x80xf32>
    %55 = arith.maximumf %53, %54 : vector<8x80xf32>
    %56 = vector.extract_strided_slice %55 {offsets = [0, 0], sizes = [1, 80], strides = [1, 1]} : vector<8x80xf32> to vector<1x80xf32>
    %57 = vector.extract_strided_slice %55 {offsets = [1, 0], sizes = [1, 80], strides = [1, 1]} : vector<8x80xf32> to vector<1x80xf32>
    %58 = arith.maximumf %56, %57 : vector<1x80xf32>
    %59 = vector.extract_strided_slice %55 {offsets = [2, 0], sizes = [1, 80], strides = [1, 1]} : vector<8x80xf32> to vector<1x80xf32>
    %60 = vector.extract_strided_slice %55 {offsets = [3, 0], sizes = [1, 80], strides = [1, 1]} : vector<8x80xf32> to vector<1x80xf32>
    %61 = arith.maximumf %59, %60 : vector<1x80xf32>
    %62 = vector.extract_strided_slice %55 {offsets = [4, 0], sizes = [1, 80], strides = [1, 1]} : vector<8x80xf32> to vector<1x80xf32>
    %63 = vector.extract_strided_slice %55 {offsets = [5, 0], sizes = [1, 80], strides = [1, 1]} : vector<8x80xf32> to vector<1x80xf32>
    %64 = arith.maximumf %62, %63 : vector<1x80xf32>
    %65 = vector.extract_strided_slice %55 {offsets = [6, 0], sizes = [1, 80], strides = [1, 1]} : vector<8x80xf32> to vector<1x80xf32>
    %66 = vector.extract_strided_slice %55 {offsets = [7, 0], sizes = [1, 80], strides = [1, 1]} : vector<8x80xf32> to vector<1x80xf32>
    %67 = arith.maximumf %65, %66 : vector<1x80xf32>
    %68 = tpu.concatenate %58, %61, %64, %67 in 0 : vector<1x80xf32>, vector<1x80xf32>, vector<1x80xf32>, vector<1x80xf32> -> vector<4x80xf32>
    %c14 = arith.constant 14 : index
    %c20 = arith.constant 20 : index
    %69 = vector.load %arg10[%c14, %c20] : memref<86x120xf32, #tpu.memory_space<vmem>>, vector<4x80xf32>
    tpu.vector_store %arg10[%c14, %c20], %68 {strides = array<i32>} : memref<86x120xf32, #tpu.memory_space<vmem>>, vector<4x80xf32>,
    %c16 = arith.constant 16 : index
    %c0_21 = arith.constant 0 : index
    %70 = vector.load %arg9[%c16, %c0_21] : memref<128x80xf32, #tpu.memory_space<vmem>>, vector<8x80xf32>
    %c24 = arith.constant 24 : index
    %c0_22 = arith.constant 0 : index
    %71 = vector.load %arg9[%c24, %c0_22] : memref<128x80xf32, #tpu.memory_space<vmem>>, vector<8x80xf32>
    %72 = arith.maximumf %70, %71 : vector<8x80xf32>
    %73 = vector.extract_strided_slice %72 {offsets = [0, 0], sizes = [1, 80], strides = [1, 1]} : vector<8x80xf32> to vector<1x80xf32>
    %74 = vector.extract_strided_slice %72 {offsets = [1, 0], sizes = [1, 80], strides = [1, 1]} : vector<8x80xf32> to vector<1x80xf32>
    %75 = arith.maximumf %73, %74 : vector<1x80xf32>
    %76 = vector.extract_strided_slice %72 {offsets = [2, 0], sizes = [1, 80], strides = [1, 1]} : vector<8x80xf32> to vector<1x80xf32>
    %77 = vector.extract_strided_slice %72 {offsets = [3, 0], sizes = [1, 80], strides = [1, 1]} : vector<8x80xf32> to vector<1x80xf32>
    %78 = arith.maximumf %76, %77 : vector<1x80xf32>
    %79 = vector.extract_strided_slice %72 {offsets = [4, 0], sizes = [1, 80], strides = [1, 1]} : vector<8x80xf32> to vector<1x80xf32>
    %80 = vector.extract_strided_slice %72 {offsets = [5, 0], sizes = [1, 80], strides = [1, 1]} : vector<8x80xf32> to vector<1x80xf32>
    %81 = arith.maximumf %79, %80 : vector<1x80xf32>
    %82 = vector.extract_strided_slice %72 {offsets = [6, 0], sizes = [1, 80], strides = [1, 1]} : vector<8x80xf32> to vector<1x80xf32>
    %83 = vector.extract_strided_slice %72 {offsets = [7, 0], sizes = [1, 80], strides = [1, 1]} : vector<8x80xf32> to vector<1x80xf32>
    %84 = arith.maximumf %82, %83 : vector<1x80xf32>
    %85 = tpu.concatenate %75, %78, %81, %84 in 0 : vector<1x80xf32>, vector<1x80xf32>, vector<1x80xf32>, vector<1x80xf32> -> vector<4x80xf32>
    %c20_23 = arith.constant 20 : index
    %c20_24 = arith.constant 20 : index
    %86 = vector.load %arg10[%c20_23, %c20_24] : memref<86x120xf32, #tpu.memory_space<vmem>>, vector<4x80xf32>
    tpu.vector_store %arg10[%c20_23, %c20_24], %85 {strides = array<i32>} : memref<86x120xf32, #tpu.memory_space<vmem>>, vector<4x80xf32>,
    %c32 = arith.constant 32 : index
    %c0_25 = arith.constant 0 : index
    %87 = vector.load %arg9[%c32, %c0_25] : memref<128x80xf32, #tpu.memory_space<vmem>>, vector<8x80xf32>
    %c40 = arith.constant 40 : index
    %c0_26 = arith.constant 0 : index
    %88 = vector.load %arg9[%c40, %c0_26] : memref<128x80xf32, #tpu.memory_space<vmem>>, vector<8x80xf32>
    %89 = arith.maximumf %87, %88 : vector<8x80xf32>
    %90 = vector.extract_strided_slice %89 {offsets = [0, 0], sizes = [1, 80], strides = [1, 1]} : vector<8x80xf32> to vector<1x80xf32>
    %91 = vector.extract_strided_slice %89 {offsets = [1, 0], sizes = [1, 80], strides = [1, 1]} : vector<8x80xf32> to vector<1x80xf32>
    %92 = arith.maximumf %90, %91 : vector<1x80xf32>
    %93 = vector.extract_strided_slice %89 {offsets = [2, 0], sizes = [1, 80], strides = [1, 1]} : vector<8x80xf32> to vector<1x80xf32>
    %94 = vector.extract_strided_slice %89 {offsets = [3, 0], sizes = [1, 80], strides = [1, 1]} : vector<8x80xf32> to vector<1x80xf32>
    %95 = arith.maximumf %93, %94 : vector<1x80xf32>
    %96 = vector.extract_strided_slice %89 {offsets = [4, 0], sizes = [1, 80], strides = [1, 1]} : vector<8x80xf32> to vector<1x80xf32>
    %97 = vector.extract_strided_slice %89 {offsets = [5, 0], sizes = [1, 80], strides = [1, 1]} : vector<8x80xf32> to vector<1x80xf32>
    %98 = arith.maximumf %96, %97 : vector<1x80xf32>
    %99 = vector.extract_strided_slice %89 {offsets = [6, 0], sizes = [1, 80], strides = [1, 1]} : vector<8x80xf32> to vector<1x80xf32>
    %100 = vector.extract_strided_slice %89 {offsets = [7, 0], sizes = [1, 80], strides = [1, 1]} : vector<8x80xf32> to vector<1x80xf32>
    %101 = arith.maximumf %99, %100 : vector<1x80xf32>
    %102 = tpu.concatenate %92, %95, %98, %101 in 0 : vector<1x80xf32>, vector<1x80xf32>, vector<1x80xf32>, vector<1x80xf32> -> vector<4x80xf32>
    %c26 = arith.constant 26 : index
    %c20_27 = arith.constant 20 : index
    %103 = vector.load %arg10[%c26, %c20_27] : memref<86x120xf32, #tpu.memory_space<vmem>>, vector<4x80xf32>
    tpu.vector_store %arg10[%c26, %c20_27], %102 {strides = array<i32>} : memref<86x120xf32, #tpu.memory_space<vmem>>, vector<4x80xf32>,
    %c48 = arith.constant 48 : index
    %c0_28 = arith.constant 0 : index
    %104 = vector.load %arg9[%c48, %c0_28] : memref<128x80xf32, #tpu.memory_space<vmem>>, vector<8x80xf32>
    %c56 = arith.constant 56 : index
    %c0_29 = arith.constant 0 : index
    %105 = vector.load %arg9[%c56, %c0_29] : memref<128x80xf32, #tpu.memory_space<vmem>>, vector<8x80xf32>
    %106 = arith.maximumf %104, %105 : vector<8x80xf32>
    %107 = vector.extract_strided_slice %106 {offsets = [0, 0], sizes = [1, 80], strides = [1, 1]} : vector<8x80xf32> to vector<1x80xf32>
    %108 = vector.extract_strided_slice %106 {offsets = [1, 0], sizes = [1, 80], strides = [1, 1]} : vector<8x80xf32> to vector<1x80xf32>
    %109 = arith.maximumf %107, %108 : vector<1x80xf32>
    %110 = vector.extract_strided_slice %106 {offsets = [2, 0], sizes = [1, 80], strides = [1, 1]} : vector<8x80xf32> to vector<1x80xf32>
    %111 = vector.extract_strided_slice %106 {offsets = [3, 0], sizes = [1, 80], strides = [1, 1]} : vector<8x80xf32> to vector<1x80xf32>
    %112 = arith.maximumf %110, %111 : vector<1x80xf32>
    %113 = vector.extract_strided_slice %106 {offsets = [4, 0], sizes = [1, 80], strides = [1, 1]} : vector<8x80xf32> to vector<1x80xf32>
    %114 = vector.extract_strided_slice %106 {offsets = [5, 0], sizes = [1, 80], strides = [1, 1]} : vector<8x80xf32> to vector<1x80xf32>
    %115 = arith.maximumf %113, %114 : vector<1x80xf32>
    %116 = vector.extract_strided_slice %106 {offsets = [6, 0], sizes = [1, 80], strides = [1, 1]} : vector<8x80xf32> to vector<1x80xf32>
    %117 = vector.extract_strided_slice %106 {offsets = [7, 0], sizes = [1, 80], strides = [1, 1]} : vector<8x80xf32> to vector<1x80xf32>
    %118 = arith.maximumf %116, %117 : vector<1x80xf32>
    %119 = tpu.concatenate %109, %112, %115, %118 in 0 : vector<1x80xf32>, vector<1x80xf32>, vector<1x80xf32>, vector<1x80xf32> -> vector<4x80xf32>
    %c32_30 = arith.constant 32 : index
    %c20_31 = arith.constant 20 : index
    %120 = vector.load %arg10[%c32_30, %c20_31] : memref<86x120xf32, #tpu.memory_space<vmem>>, vector<4x80xf32>
    tpu.vector_store %arg10[%c32_30, %c20_31], %119 {strides = array<i32>} : memref<86x120xf32, #tpu.memory_space<vmem>>, vector<4x80xf32>,
    %c64_32 = arith.constant 64 : index
    %c0_33 = arith.constant 0 : index
    %121 = vector.load %arg9[%c64_32, %c0_33] : memref<128x80xf32, #tpu.memory_space<vmem>>, vector<8x80xf32>
    %c72 = arith.constant 72 : index
    %c0_34 = arith.constant 0 : index
    %122 = vector.load %arg9[%c72, %c0_34] : memref<128x80xf32, #tpu.memory_space<vmem>>, vector<8x80xf32>
    %123 = arith.maximumf %121, %122 : vector<8x80xf32>
    %124 = vector.extract_strided_slice %123 {offsets = [0, 0], sizes = [1, 80], strides = [1, 1]} : vector<8x80xf32> to vector<1x80xf32>
    %125 = vector.extract_strided_slice %123 {offsets = [1, 0], sizes = [1, 80], strides = [1, 1]} : vector<8x80xf32> to vector<1x80xf32>
    %126 = arith.maximumf %124, %125 : vector<1x80xf32>
    %127 = vector.extract_strided_slice %123 {offsets = [2, 0], sizes = [1, 80], strides = [1, 1]} : vector<8x80xf32> to vector<1x80xf32>
    %128 = vector.extract_strided_slice %123 {offsets = [3, 0], sizes = [1, 80], strides = [1, 1]} : vector<8x80xf32> to vector<1x80xf32>
    %129 = arith.maximumf %127, %128 : vector<1x80xf32>
    %130 = vector.extract_strided_slice %123 {offsets = [4, 0], sizes = [1, 80], strides = [1, 1]} : vector<8x80xf32> to vector<1x80xf32>
    %131 = vector.extract_strided_slice %123 {offsets = [5, 0], sizes = [1, 80], strides = [1, 1]} : vector<8x80xf32> to vector<1x80xf32>
    %132 = arith.maximumf %130, %131 : vector<1x80xf32>
    %133 = vector.extract_strided_slice %123 {offsets = [6, 0], sizes = [1, 80], strides = [1, 1]} : vector<8x80xf32> to vector<1x80xf32>
    %134 = vector.extract_strided_slice %123 {offsets = [7, 0], sizes = [1, 80], strides = [1, 1]} : vector<8x80xf32> to vector<1x80xf32>
    %135 = arith.maximumf %133, %134 : vector<1x80xf32>
    %136 = tpu.concatenate %126, %129, %132, %135 in 0 : vector<1x80xf32>, vector<1x80xf32>, vector<1x80xf32>, vector<1x80xf32> -> vector<4x80xf32>
    %c50 = arith.constant 50 : index
    %c20_35 = arith.constant 20 : index
    %137 = vector.load %arg10[%c50, %c20_35] : memref<86x120xf32, #tpu.memory_space<vmem>>, vector<4x80xf32>
    tpu.vector_store %arg10[%c50, %c20_35], %136 {strides = array<i32>} : memref<86x120xf32, #tpu.memory_space<vmem>>, vector<4x80xf32>,
    %c80 = arith.constant 80 : index
    %c0_36 = arith.constant 0 : index
    %138 = vector.load %arg9[%c80, %c0_36] : memref<128x80xf32, #tpu.memory_space<vmem>>, vector<8x80xf32>
    %c88 = arith.constant 88 : index
    %c0_37 = arith.constant 0 : index
    %139 = vector.load %arg9[%c88, %c0_37] : memref<128x80xf32, #tpu.memory_space<vmem>>, vector<8x80xf32>
    %140 = arith.maximumf %138, %139 : vector<8x80xf32>
    %141 = vector.extract_strided_slice %140 {offsets = [0, 0], sizes = [1, 80], strides = [1, 1]} : vector<8x80xf32> to vector<1x80xf32>
    %142 = vector.extract_strided_slice %140 {offsets = [1, 0], sizes = [1, 80], strides = [1, 1]} : vector<8x80xf32> to vector<1x80xf32>
    %143 = arith.maximumf %141, %142 : vector<1x80xf32>
    %144 = vector.extract_strided_slice %140 {offsets = [2, 0], sizes = [1, 80], strides = [1, 1]} : vector<8x80xf32> to vector<1x80xf32>
    %145 = vector.extract_strided_slice %140 {offsets = [3, 0], sizes = [1, 80], strides = [1, 1]} : vector<8x80xf32> to vector<1x80xf32>
    %146 = arith.maximumf %144, %145 : vector<1x80xf32>
    %147 = vector.extract_strided_slice %140 {offsets = [4, 0], sizes = [1, 80], strides = [1, 1]} : vector<8x80xf32> to vector<1x80xf32>
    %148 = vector.extract_strided_slice %140 {offsets = [5, 0], sizes = [1, 80], strides = [1, 1]} : vector<8x80xf32> to vector<1x80xf32>
    %149 = arith.maximumf %147, %148 : vector<1x80xf32>
    %150 = vector.extract_strided_slice %140 {offsets = [6, 0], sizes = [1, 80], strides = [1, 1]} : vector<8x80xf32> to vector<1x80xf32>
    %151 = vector.extract_strided_slice %140 {offsets = [7, 0], sizes = [1, 80], strides = [1, 1]} : vector<8x80xf32> to vector<1x80xf32>
    %152 = arith.maximumf %150, %151 : vector<1x80xf32>
    %153 = tpu.concatenate %143, %146, %149, %152 in 0 : vector<1x80xf32>, vector<1x80xf32>, vector<1x80xf32>, vector<1x80xf32> -> vector<4x80xf32>
    %c56_38 = arith.constant 56 : index
    %c20_39 = arith.constant 20 : index
    %154 = vector.load %arg10[%c56_38, %c20_39] : memref<86x120xf32, #tpu.memory_space<vmem>>, vector<4x80xf32>
    tpu.vector_store %arg10[%c56_38, %c20_39], %153 {strides = array<i32>} : memref<86x120xf32, #tpu.memory_space<vmem>>, vector<4x80xf32>,
    %c96 = arith.constant 96 : index
    %c0_40 = arith.constant 0 : index
    %155 = vector.load %arg9[%c96, %c0_40] : memref<128x80xf32, #tpu.memory_space<vmem>>, vector<8x80xf32>
    %c104 = arith.constant 104 : index
    %c0_41 = arith.constant 0 : index
    %156 = vector.load %arg9[%c104, %c0_41] : memref<128x80xf32, #tpu.memory_space<vmem>>, vector<8x80xf32>
    %157 = arith.maximumf %155, %156 : vector<8x80xf32>
    %158 = vector.extract_strided_slice %157 {offsets = [0, 0], sizes = [1, 80], strides = [1, 1]} : vector<8x80xf32> to vector<1x80xf32>
    %159 = vector.extract_strided_slice %157 {offsets = [1, 0], sizes = [1, 80], strides = [1, 1]} : vector<8x80xf32> to vector<1x80xf32>
    %160 = arith.maximumf %158, %159 : vector<1x80xf32>
    %161 = vector.extract_strided_slice %157 {offsets = [2, 0], sizes = [1, 80], strides = [1, 1]} : vector<8x80xf32> to vector<1x80xf32>
    %162 = vector.extract_strided_slice %157 {offsets = [3, 0], sizes = [1, 80], strides = [1, 1]} : vector<8x80xf32> to vector<1x80xf32>
    %163 = arith.maximumf %161, %162 : vector<1x80xf32>
    %164 = vector.extract_strided_slice %157 {offsets = [4, 0], sizes = [1, 80], strides = [1, 1]} : vector<8x80xf32> to vector<1x80xf32>
    %165 = vector.extract_strided_slice %157 {offsets = [5, 0], sizes = [1, 80], strides = [1, 1]} : vector<8x80xf32> to vector<1x80xf32>
    %166 = arith.maximumf %164, %165 : vector<1x80xf32>
    %167 = vector.extract_strided_slice %157 {offsets = [6, 0], sizes = [1, 80], strides = [1, 1]} : vector<8x80xf32> to vector<1x80xf32>
    %168 = vector.extract_strided_slice %157 {offsets = [7, 0], sizes = [1, 80], strides = [1, 1]} : vector<8x80xf32> to vector<1x80xf32>
    %169 = arith.maximumf %167, %168 : vector<1x80xf32>
    %170 = tpu.concatenate %160, %163, %166, %169 in 0 : vector<1x80xf32>, vector<1x80xf32>, vector<1x80xf32>, vector<1x80xf32> -> vector<4x80xf32>
    %c62 = arith.constant 62 : index
    %c20_42 = arith.constant 20 : index
    %171 = vector.load %arg10[%c62, %c20_42] : memref<86x120xf32, #tpu.memory_space<vmem>>, vector<4x80xf32>
    tpu.vector_store %arg10[%c62, %c20_42], %170 {strides = array<i32>} : memref<86x120xf32, #tpu.memory_space<vmem>>, vector<4x80xf32>,
    %c112 = arith.constant 112 : index
    %c0_43 = arith.constant 0 : index
    %172 = vector.load %arg9[%c112, %c0_43] : memref<128x80xf32, #tpu.memory_space<vmem>>, vector<8x80xf32>
    %c120 = arith.constant 120 : index
    %c0_44 = arith.constant 0 : index
    %173 = vector.load %arg9[%c120, %c0_44] : memref<128x80xf32, #tpu.memory_space<vmem>>, vector<8x80xf32>
    %174 = arith.maximumf %172, %173 : vector<8x80xf32>
    %175 = vector.extract_strided_slice %174 {offsets = [0, 0], sizes = [1, 80], strides = [1, 1]} : vector<8x80xf32> to vector<1x80xf32>
    %176 = vector.extract_strided_slice %174 {offsets = [1, 0], sizes = [1, 80], strides = [1, 1]} : vector<8x80xf32> to vector<1x80xf32>
    %177 = arith.maximumf %175, %176 : vector<1x80xf32>
    %178 = vector.extract_strided_slice %174 {offsets = [2, 0], sizes = [1, 80], strides = [1, 1]} : vector<8x80xf32> to vector<1x80xf32>
    %179 = vector.extract_strided_slice %174 {offsets = [3, 0], sizes = [1, 80], strides = [1, 1]} : vector<8x80xf32> to vector<1x80xf32>
    %180 = arith.maximumf %178, %179 : vector<1x80xf32>
    %181 = vector.extract_strided_slice %174 {offsets = [4, 0], sizes = [1, 80], strides = [1, 1]} : vector<8x80xf32> to vector<1x80xf32>
    %182 = vector.extract_strided_slice %174 {offsets = [5, 0], sizes = [1, 80], strides = [1, 1]} : vector<8x80xf32> to vector<1x80xf32>
    %183 = arith.maximumf %181, %182 : vector<1x80xf32>
    %184 = vector.extract_strided_slice %174 {offsets = [6, 0], sizes = [1, 80], strides = [1, 1]} : vector<8x80xf32> to vector<1x80xf32>
    %185 = vector.extract_strided_slice %174 {offsets = [7, 0], sizes = [1, 80], strides = [1, 1]} : vector<8x80xf32> to vector<1x80xf32>
    %186 = arith.maximumf %184, %185 : vector<1x80xf32>
    %187 = tpu.concatenate %177, %180, %183, %186 in 0 : vector<1x80xf32>, vector<1x80xf32>, vector<1x80xf32>, vector<1x80xf32> -> vector<4x80xf32>
    %c68 = arith.constant 68 : index
    %c20_45 = arith.constant 20 : index
    %188 = vector.load %arg10[%c68, %c20_45] : memref<86x120xf32, #tpu.memory_space<vmem>>, vector<4x80xf32>
    tpu.vector_store %arg10[%c68, %c20_45], %187 {strides = array<i32>} : memref<86x120xf32, #tpu.memory_space<vmem>>, vector<4x80xf32>,
    %c0_i32_46 = arith.constant 0 : i32
    %189 = tpu.memref_slice %arg16[%c0_i32_46] : memref<4x!tpu.dma_semaphore, #tpu.memory_space<semaphore_mem>> -> memref<1x!tpu.dma_semaphore, #tpu.memory_space<semaphore_mem>>
    %190 = tpu.memref_squeeze %189 : memref<1x!tpu.dma_semaphore, #tpu.memory_space<semaphore_mem>> -> memref<!tpu.dma_semaphore, #tpu.memory_space<semaphore_mem>>
    tpu.wait_dma2 semaphore(%190 : memref<!tpu.dma_semaphore, #tpu.memory_space<semaphore_mem>>) src(%arg4 : memref<9x120x80xf32, #tpu.memory_space<any>>) dst(%arg12 : memref<9x120x80xf32, #tpu.memory_space<vmem>>)
    %cst_47 = arith.constant 0.000000e+00 : f32
    %191 = vector.broadcast %cst_47 : f32 to vector<72x80xf32>
    %c0_48 = arith.constant 0 : index
    %c0_49 = arith.constant 0 : index
    %192 = vector.load %arg10[%c0_48, %c0_49] : memref<86x120xf32, #tpu.memory_space<vmem>>, vector<72x120xf32>
    %c0_50 = arith.constant 0 : index
    %c0_51 = arith.constant 0 : index
    %c0_52 = arith.constant 0 : index
    %193 = vector.load %arg12[%c0_50, %c0_51, %c0_52] : memref<9x120x80xf32, #tpu.memory_space<vmem>>, vector<1x120x80xf32>
    %194 = vector.shape_cast %193 : vector<1x120x80xf32> to vector<120x80xf32>
    %cst_53 = arith.constant dense<0.000000e+00> : vector<72x80xf32>
    %195 = tpu.matmul %192, %194, %cst_53 {dimension_numbers = #tpu.dot_dimension_numbers<[1], [0], [0], [1], [0, 0, 1, 1], [], []>} : vector<72x120xf32>, vector<120x80xf32>, vector<72x80xf32> -> vector<72x80xf32>
    %196 = arith.addf %191, %195 : vector<72x80xf32>
    %c1 = arith.constant 1 : index
    %c0_54 = arith.constant 0 : index
    %197 = vector.load %arg10[%c1, %c0_54] : memref<86x120xf32, #tpu.memory_space<vmem>>, vector<72x120xf32>
    %c1_55 = arith.constant 1 : index
    %c0_56 = arith.constant 0 : index
    %c0_57 = arith.constant 0 : index
    %198 = vector.load %arg12[%c1_55, %c0_56, %c0_57] : memref<9x120x80xf32, #tpu.memory_space<vmem>>, vector<1x120x80xf32>
    %199 = vector.shape_cast %198 : vector<1x120x80xf32> to vector<120x80xf32>
    %cst_58 = arith.constant dense<0.000000e+00> : vector<72x80xf32>
    %200 = tpu.matmul %197, %199, %cst_58 {dimension_numbers = #tpu.dot_dimension_numbers<[1], [0], [0], [1], [0, 0, 1, 1], [], []>} : vector<72x120xf32>, vector<120x80xf32>, vector<72x80xf32> -> vector<72x80xf32>
    %201 = arith.addf %196, %200 : vector<72x80xf32>
    %c2 = arith.constant 2 : index
    %c0_59 = arith.constant 0 : index
    %202 = vector.load %arg10[%c2, %c0_59] : memref<86x120xf32, #tpu.memory_space<vmem>>, vector<72x120xf32>
    %c2_60 = arith.constant 2 : index
    %c0_61 = arith.constant 0 : index
    %c0_62 = arith.constant 0 : index
    %203 = vector.load %arg12[%c2_60, %c0_61, %c0_62] : memref<9x120x80xf32, #tpu.memory_space<vmem>>, vector<1x120x80xf32>
    %204 = vector.shape_cast %203 : vector<1x120x80xf32> to vector<120x80xf32>
    %cst_63 = arith.constant dense<0.000000e+00> : vector<72x80xf32>
    %205 = tpu.matmul %202, %204, %cst_63 {dimension_numbers = #tpu.dot_dimension_numbers<[1], [0], [0], [1], [0, 0, 1, 1], [], []>} : vector<72x120xf32>, vector<120x80xf32>, vector<72x80xf32> -> vector<72x80xf32>
    %206 = arith.addf %201, %205 : vector<72x80xf32>
    %c6 = arith.constant 6 : index
    %c0_64 = arith.constant 0 : index
    %207 = vector.load %arg10[%c6, %c0_64] : memref<86x120xf32, #tpu.memory_space<vmem>>, vector<72x120xf32>
    %c3 = arith.constant 3 : index
    %c0_65 = arith.constant 0 : index
    %c0_66 = arith.constant 0 : index
    %208 = vector.load %arg12[%c3, %c0_65, %c0_66] : memref<9x120x80xf32, #tpu.memory_space<vmem>>, vector<1x120x80xf32>
    %209 = vector.shape_cast %208 : vector<1x120x80xf32> to vector<120x80xf32>
    %cst_67 = arith.constant dense<0.000000e+00> : vector<72x80xf32>
    %210 = tpu.matmul %207, %209, %cst_67 {dimension_numbers = #tpu.dot_dimension_numbers<[1], [0], [0], [1], [0, 0, 1, 1], [], []>} : vector<72x120xf32>, vector<120x80xf32>, vector<72x80xf32> -> vector<72x80xf32>
    %211 = arith.addf %206, %210 : vector<72x80xf32>
    %c7 = arith.constant 7 : index
    %c0_68 = arith.constant 0 : index
    %212 = vector.load %arg10[%c7, %c0_68] : memref<86x120xf32, #tpu.memory_space<vmem>>, vector<72x120xf32>
    %c4 = arith.constant 4 : index
    %c0_69 = arith.constant 0 : index
    %c0_70 = arith.constant 0 : index
    %213 = vector.load %arg12[%c4, %c0_69, %c0_70] : memref<9x120x80xf32, #tpu.memory_space<vmem>>, vector<1x120x80xf32>
    %214 = vector.shape_cast %213 : vector<1x120x80xf32> to vector<120x80xf32>
    %cst_71 = arith.constant dense<0.000000e+00> : vector<72x80xf32>
    %215 = tpu.matmul %212, %214, %cst_71 {dimension_numbers = #tpu.dot_dimension_numbers<[1], [0], [0], [1], [0, 0, 1, 1], [], []>} : vector<72x120xf32>, vector<120x80xf32>, vector<72x80xf32> -> vector<72x80xf32>
    %216 = arith.addf %211, %215 : vector<72x80xf32>
    %c8_72 = arith.constant 8 : index
    %c0_73 = arith.constant 0 : index
    %217 = vector.load %arg10[%c8_72, %c0_73] : memref<86x120xf32, #tpu.memory_space<vmem>>, vector<72x120xf32>
    %c5 = arith.constant 5 : index
    %c0_74 = arith.constant 0 : index
    %c0_75 = arith.constant 0 : index
    %218 = vector.load %arg12[%c5, %c0_74, %c0_75] : memref<9x120x80xf32, #tpu.memory_space<vmem>>, vector<1x120x80xf32>
    %219 = vector.shape_cast %218 : vector<1x120x80xf32> to vector<120x80xf32>
    %cst_76 = arith.constant dense<0.000000e+00> : vector<72x80xf32>
    %220 = tpu.matmul %217, %219, %cst_76 {dimension_numbers = #tpu.dot_dimension_numbers<[1], [0], [0], [1], [0, 0, 1, 1], [], []>} : vector<72x120xf32>, vector<120x80xf32>, vector<72x80xf32> -> vector<72x80xf32>
    %221 = arith.addf %216, %220 : vector<72x80xf32>
    %c12 = arith.constant 12 : index
    %c0_77 = arith.constant 0 : index
    %222 = vector.load %arg10[%c12, %c0_77] : memref<86x120xf32, #tpu.memory_space<vmem>>, vector<72x120xf32>
    %c6_78 = arith.constant 6 : index
    %c0_79 = arith.constant 0 : index
    %c0_80 = arith.constant 0 : index
    %223 = vector.load %arg12[%c6_78, %c0_79, %c0_80] : memref<9x120x80xf32, #tpu.memory_space<vmem>>, vector<1x120x80xf32>
    %224 = vector.shape_cast %223 : vector<1x120x80xf32> to vector<120x80xf32>
    %cst_81 = arith.constant dense<0.000000e+00> : vector<72x80xf32>
    %225 = tpu.matmul %222, %224, %cst_81 {dimension_numbers = #tpu.dot_dimension_numbers<[1], [0], [0], [1], [0, 0, 1, 1], [], []>} : vector<72x120xf32>, vector<120x80xf32>, vector<72x80xf32> -> vector<72x80xf32>
    %226 = arith.addf %221, %225 : vector<72x80xf32>
    %c13 = arith.constant 13 : index
    %c0_82 = arith.constant 0 : index
    %227 = vector.load %arg10[%c13, %c0_82] : memref<86x120xf32, #tpu.memory_space<vmem>>, vector<72x120xf32>
    %c7_83 = arith.constant 7 : index
    %c0_84 = arith.constant 0 : index
    %c0_85 = arith.constant 0 : index
    %228 = vector.load %arg12[%c7_83, %c0_84, %c0_85] : memref<9x120x80xf32, #tpu.memory_space<vmem>>, vector<1x120x80xf32>
    %229 = vector.shape_cast %228 : vector<1x120x80xf32> to vector<120x80xf32>
    %cst_86 = arith.constant dense<0.000000e+00> : vector<72x80xf32>
    %230 = tpu.matmul %227, %229, %cst_86 {dimension_numbers = #tpu.dot_dimension_numbers<[1], [0], [0], [1], [0, 0, 1, 1], [], []>} : vector<72x120xf32>, vector<120x80xf32>, vector<72x80xf32> -> vector<72x80xf32>
    %231 = arith.addf %226, %230 : vector<72x80xf32>
    %c14_87 = arith.constant 14 : index
    %c0_88 = arith.constant 0 : index
    %232 = vector.load %arg10[%c14_87, %c0_88] : memref<86x120xf32, #tpu.memory_space<vmem>>, vector<72x120xf32>
    %c8_89 = arith.constant 8 : index
    %c0_90 = arith.constant 0 : index
    %c0_91 = arith.constant 0 : index
    %233 = vector.load %arg12[%c8_89, %c0_90, %c0_91] : memref<9x120x80xf32, #tpu.memory_space<vmem>>, vector<1x120x80xf32>
    %234 = vector.shape_cast %233 : vector<1x120x80xf32> to vector<120x80xf32>
    %cst_92 = arith.constant dense<0.000000e+00> : vector<72x80xf32>
    %235 = tpu.matmul %232, %234, %cst_92 {dimension_numbers = #tpu.dot_dimension_numbers<[1], [0], [0], [1], [0, 0, 1, 1], [], []>} : vector<72x120xf32>, vector<120x80xf32>, vector<72x80xf32> -> vector<72x80xf32>
    %236 = arith.addf %231, %235 : vector<72x80xf32>
    %c0_93 = arith.constant 0 : index
    %c256 = arith.constant 256 : index
    %237 = vector.load %arg2[%c0_93, %c256] : memref<1x1536xf32, #tpu.memory_space<vmem>>, vector<1x80xf32>
    %238 = vector.broadcast %237 : vector<1x80xf32> to vector<72x80xf32>
    %239 = arith.addf %236, %238 : vector<72x80xf32>
    %cst_94 = arith.constant 0.000000e+00 : f32
    %240 = vector.broadcast %cst_94 : f32 to vector<72x80xf32>
    %241 = arith.maximumf %239, %240 : vector<72x80xf32>
    %c0_95 = arith.constant 0 : index
    %c0_96 = arith.constant 0 : index
    %242 = vector.load %arg11[%c0_95, %c0_96] : memref<72x80xf32, #tpu.memory_space<vmem>>, vector<72x80xf32>
    tpu.vector_store %arg11[%c0_95, %c0_96], %241 {strides = array<i32>} : memref<72x80xf32, #tpu.memory_space<vmem>>, vector<72x80xf32>,
    %c7_97 = arith.constant 7 : index
    %c0_98 = arith.constant 0 : index
    %243 = vector.load %arg11[%c7_97, %c0_98] : memref<72x80xf32, #tpu.memory_space<vmem>>, vector<4x80xf32>
    %244 = vector.extract_strided_slice %243 {offsets = [0, 0], sizes = [4, 20], strides = [1, 1]} : vector<4x80xf32> to vector<4x20xf32>
    %245 = vector.extract_strided_slice %243 {offsets = [0, 20], sizes = [4, 20], strides = [1, 1]} : vector<4x80xf32> to vector<4x20xf32>
    %246 = arith.maximumf %244, %245 : vector<4x20xf32>
    %247 = vector.extract_strided_slice %243 {offsets = [0, 20], sizes = [4, 20], strides = [1, 1]} : vector<4x80xf32> to vector<4x20xf32>
    %248 = vector.extract_strided_slice %243 {offsets = [0, 40], sizes = [4, 20], strides = [1, 1]} : vector<4x80xf32> to vector<4x20xf32>
    %249 = arith.maximumf %247, %248 : vector<4x20xf32>
    %250 = vector.extract_strided_slice %243 {offsets = [0, 40], sizes = [4, 20], strides = [1, 1]} : vector<4x80xf32> to vector<4x20xf32>
    %251 = vector.extract_strided_slice %243 {offsets = [0, 60], sizes = [4, 20], strides = [1, 1]} : vector<4x80xf32> to vector<4x20xf32>
    %252 = arith.maximumf %250, %251 : vector<4x20xf32>
    %253 = tpu.concatenate %246, %249, %252 in 1 : vector<4x20xf32>, vector<4x20xf32>, vector<4x20xf32> -> vector<4x60xf32>
    %c13_99 = arith.constant 13 : index
    %c0_100 = arith.constant 0 : index
    %254 = vector.load %arg11[%c13_99, %c0_100] : memref<72x80xf32, #tpu.memory_space<vmem>>, vector<4x80xf32>
    %255 = vector.extract_strided_slice %254 {offsets = [0, 0], sizes = [4, 20], strides = [1, 1]} : vector<4x80xf32> to vector<4x20xf32>
    %256 = vector.extract_strided_slice %254 {offsets = [0, 20], sizes = [4, 20], strides = [1, 1]} : vector<4x80xf32> to vector<4x20xf32>
    %257 = arith.maximumf %255, %256 : vector<4x20xf32>
    %258 = vector.extract_strided_slice %254 {offsets = [0, 20], sizes = [4, 20], strides = [1, 1]} : vector<4x80xf32> to vector<4x20xf32>
    %259 = vector.extract_strided_slice %254 {offsets = [0, 40], sizes = [4, 20], strides = [1, 1]} : vector<4x80xf32> to vector<4x20xf32>
    %260 = arith.maximumf %258, %259 : vector<4x20xf32>
    %261 = vector.extract_strided_slice %254 {offsets = [0, 40], sizes = [4, 20], strides = [1, 1]} : vector<4x80xf32> to vector<4x20xf32>
    %262 = vector.extract_strided_slice %254 {offsets = [0, 60], sizes = [4, 20], strides = [1, 1]} : vector<4x80xf32> to vector<4x20xf32>
    %263 = arith.maximumf %261, %262 : vector<4x20xf32>
    %264 = tpu.concatenate %257, %260, %263 in 1 : vector<4x20xf32>, vector<4x20xf32>, vector<4x20xf32> -> vector<4x60xf32>
    %c19 = arith.constant 19 : index
    %c0_101 = arith.constant 0 : index
    %265 = vector.load %arg11[%c19, %c0_101] : memref<72x80xf32, #tpu.memory_space<vmem>>, vector<4x80xf32>
    %266 = vector.extract_strided_slice %265 {offsets = [0, 0], sizes = [4, 20], strides = [1, 1]} : vector<4x80xf32> to vector<4x20xf32>
    %267 = vector.extract_strided_slice %265 {offsets = [0, 20], sizes = [4, 20], strides = [1, 1]} : vector<4x80xf32> to vector<4x20xf32>
    %268 = arith.maximumf %266, %267 : vector<4x20xf32>
    %269 = vector.extract_strided_slice %265 {offsets = [0, 20], sizes = [4, 20], strides = [1, 1]} : vector<4x80xf32> to vector<4x20xf32>
    %270 = vector.extract_strided_slice %265 {offsets = [0, 40], sizes = [4, 20], strides = [1, 1]} : vector<4x80xf32> to vector<4x20xf32>
    %271 = arith.maximumf %269, %270 : vector<4x20xf32>
    %272 = vector.extract_strided_slice %265 {offsets = [0, 40], sizes = [4, 20], strides = [1, 1]} : vector<4x80xf32> to vector<4x20xf32>
    %273 = vector.extract_strided_slice %265 {offsets = [0, 60], sizes = [4, 20], strides = [1, 1]} : vector<4x80xf32> to vector<4x20xf32>
    %274 = arith.maximumf %272, %273 : vector<4x20xf32>
    %275 = tpu.concatenate %268, %271, %274 in 1 : vector<4x20xf32>, vector<4x20xf32>, vector<4x20xf32> -> vector<4x60xf32>
    %c25 = arith.constant 25 : index
    %c0_102 = arith.constant 0 : index
    %276 = vector.load %arg11[%c25, %c0_102] : memref<72x80xf32, #tpu.memory_space<vmem>>, vector<4x80xf32>
    %277 = vector.extract_strided_slice %276 {offsets = [0, 0], sizes = [4, 20], strides = [1, 1]} : vector<4x80xf32> to vector<4x20xf32>
    %278 = vector.extract_strided_slice %276 {offsets = [0, 20], sizes = [4, 20], strides = [1, 1]} : vector<4x80xf32> to vector<4x20xf32>
    %279 = arith.maximumf %277, %278 : vector<4x20xf32>
    %280 = vector.extract_strided_slice %276 {offsets = [0, 20], sizes = [4, 20], strides = [1, 1]} : vector<4x80xf32> to vector<4x20xf32>
    %281 = vector.extract_strided_slice %276 {offsets = [0, 40], sizes = [4, 20], strides = [1, 1]} : vector<4x80xf32> to vector<4x20xf32>
    %282 = arith.maximumf %280, %281 : vector<4x20xf32>
    %283 = vector.extract_strided_slice %276 {offsets = [0, 40], sizes = [4, 20], strides = [1, 1]} : vector<4x80xf32> to vector<4x20xf32>
    %284 = vector.extract_strided_slice %276 {offsets = [0, 60], sizes = [4, 20], strides = [1, 1]} : vector<4x80xf32> to vector<4x20xf32>
    %285 = arith.maximumf %283, %284 : vector<4x20xf32>
    %286 = tpu.concatenate %279, %282, %285 in 1 : vector<4x20xf32>, vector<4x20xf32>, vector<4x20xf32> -> vector<4x60xf32>
    %287 = arith.maximumf %253, %264 : vector<4x60xf32>
    %288 = arith.maximumf %264, %275 : vector<4x60xf32>
    %289 = arith.maximumf %275, %286 : vector<4x60xf32>
    %290 = vector.extract_strided_slice %287 {offsets = [0, 0], sizes = [3, 60], strides = [1, 1]} : vector<4x60xf32> to vector<3x60xf32>
    %291 = vector.extract_strided_slice %287 {offsets = [1, 0], sizes = [3, 60], strides = [1, 1]} : vector<4x60xf32> to vector<3x60xf32>
    %292 = arith.maximumf %290, %291 : vector<3x60xf32>
    %293 = vector.extract_strided_slice %288 {offsets = [0, 0], sizes = [3, 60], strides = [1, 1]} : vector<4x60xf32> to vector<3x60xf32>
    %294 = vector.extract_strided_slice %288 {offsets = [1, 0], sizes = [3, 60], strides = [1, 1]} : vector<4x60xf32> to vector<3x60xf32>
    %295 = arith.maximumf %293, %294 : vector<3x60xf32>
    %296 = vector.extract_strided_slice %289 {offsets = [0, 0], sizes = [3, 60], strides = [1, 1]} : vector<4x60xf32> to vector<3x60xf32>
    %297 = vector.extract_strided_slice %289 {offsets = [1, 0], sizes = [3, 60], strides = [1, 1]} : vector<4x60xf32> to vector<3x60xf32>
    %298 = arith.maximumf %296, %297 : vector<3x60xf32>
    %299 = arith.addf %292, %295 : vector<3x60xf32>
    %300 = vector.extract_strided_slice %299 {offsets = [0, 0], sizes = [2, 60], strides = [1, 1]} : vector<3x60xf32> to vector<2x60xf32>
    %301 = vector.extract_strided_slice %299 {offsets = [1, 0], sizes = [2, 60], strides = [1, 1]} : vector<3x60xf32> to vector<2x60xf32>
    %302 = arith.addf %300, %301 : vector<2x60xf32>
    %303 = vector.extract_strided_slice %302 {offsets = [0, 0], sizes = [2, 20], strides = [1, 1]} : vector<2x60xf32> to vector<2x20xf32>
    %304 = vector.extract_strided_slice %302 {offsets = [0, 20], sizes = [2, 20], strides = [1, 1]} : vector<2x60xf32> to vector<2x20xf32>
    %305 = arith.addf %303, %304 : vector<2x20xf32>
    %306 = vector.extract_strided_slice %302 {offsets = [0, 20], sizes = [2, 20], strides = [1, 1]} : vector<2x60xf32> to vector<2x20xf32>
    %307 = vector.extract_strided_slice %302 {offsets = [0, 40], sizes = [2, 20], strides = [1, 1]} : vector<2x60xf32> to vector<2x20xf32>
    %308 = arith.addf %306, %307 : vector<2x20xf32>
    %309 = tpu.concatenate %305, %308 in 1 : vector<2x20xf32>, vector<2x20xf32> -> vector<2x40xf32>
    %cst_103 = arith.constant 1.250000e-01 : f32
    %310 = vector.broadcast %cst_103 : f32 to vector<2x40xf32>
    %311 = arith.mulf %309, %310 : vector<2x40xf32>
    %312 = vector.extract_strided_slice %311 {offsets = [0, 0], sizes = [1, 40], strides = [1, 1]} : vector<2x40xf32> to vector<1x40xf32>
    %313 = vector.extract_strided_slice %311 {offsets = [1, 0], sizes = [1, 40], strides = [1, 1]} : vector<2x40xf32> to vector<1x40xf32>
    %314 = arith.addf %295, %298 : vector<3x60xf32>
    %315 = vector.extract_strided_slice %314 {offsets = [0, 0], sizes = [2, 60], strides = [1, 1]} : vector<3x60xf32> to vector<2x60xf32>
    %316 = vector.extract_strided_slice %314 {offsets = [1, 0], sizes = [2, 60], strides = [1, 1]} : vector<3x60xf32> to vector<2x60xf32>
    %317 = arith.addf %315, %316 : vector<2x60xf32>
    %318 = vector.extract_strided_slice %317 {offsets = [0, 0], sizes = [2, 20], strides = [1, 1]} : vector<2x60xf32> to vector<2x20xf32>
    %319 = vector.extract_strided_slice %317 {offsets = [0, 20], sizes = [2, 20], strides = [1, 1]} : vector<2x60xf32> to vector<2x20xf32>
    %320 = arith.addf %318, %319 : vector<2x20xf32>
    %321 = vector.extract_strided_slice %317 {offsets = [0, 20], sizes = [2, 20], strides = [1, 1]} : vector<2x60xf32> to vector<2x20xf32>
    %322 = vector.extract_strided_slice %317 {offsets = [0, 40], sizes = [2, 20], strides = [1, 1]} : vector<2x60xf32> to vector<2x20xf32>
    %323 = arith.addf %321, %322 : vector<2x20xf32>
    %324 = tpu.concatenate %320, %323 in 1 : vector<2x20xf32>, vector<2x20xf32> -> vector<2x40xf32>
    %cst_104 = arith.constant 1.250000e-01 : f32
    %325 = vector.broadcast %cst_104 : f32 to vector<2x40xf32>
    %326 = arith.mulf %324, %325 : vector<2x40xf32>
    %327 = vector.extract_strided_slice %326 {offsets = [0, 0], sizes = [1, 40], strides = [1, 1]} : vector<2x40xf32> to vector<1x40xf32>
    %328 = vector.extract_strided_slice %326 {offsets = [1, 0], sizes = [1, 40], strides = [1, 1]} : vector<2x40xf32> to vector<1x40xf32>
    %329 = tpu.concatenate %312, %313, %327, %328 in 1 : vector<1x40xf32>, vector<1x40xf32>, vector<1x40xf32>, vector<1x40xf32> -> vector<1x160xf32>
    %c43 = arith.constant 43 : index
    %c0_105 = arith.constant 0 : index
    %330 = vector.load %arg11[%c43, %c0_105] : memref<72x80xf32, #tpu.memory_space<vmem>>, vector<4x80xf32>
    %331 = vector.extract_strided_slice %330 {offsets = [0, 0], sizes = [4, 20], strides = [1, 1]} : vector<4x80xf32> to vector<4x20xf32>
    %332 = vector.extract_strided_slice %330 {offsets = [0, 20], sizes = [4, 20], strides = [1, 1]} : vector<4x80xf32> to vector<4x20xf32>
    %333 = arith.maximumf %331, %332 : vector<4x20xf32>
    %334 = vector.extract_strided_slice %330 {offsets = [0, 20], sizes = [4, 20], strides = [1, 1]} : vector<4x80xf32> to vector<4x20xf32>
    %335 = vector.extract_strided_slice %330 {offsets = [0, 40], sizes = [4, 20], strides = [1, 1]} : vector<4x80xf32> to vector<4x20xf32>
    %336 = arith.maximumf %334, %335 : vector<4x20xf32>
    %337 = vector.extract_strided_slice %330 {offsets = [0, 40], sizes = [4, 20], strides = [1, 1]} : vector<4x80xf32> to vector<4x20xf32>
    %338 = vector.extract_strided_slice %330 {offsets = [0, 60], sizes = [4, 20], strides = [1, 1]} : vector<4x80xf32> to vector<4x20xf32>
    %339 = arith.maximumf %337, %338 : vector<4x20xf32>
    %340 = tpu.concatenate %333, %336, %339 in 1 : vector<4x20xf32>, vector<4x20xf32>, vector<4x20xf32> -> vector<4x60xf32>
    %c49 = arith.constant 49 : index
    %c0_106 = arith.constant 0 : index
    %341 = vector.load %arg11[%c49, %c0_106] : memref<72x80xf32, #tpu.memory_space<vmem>>, vector<4x80xf32>
    %342 = vector.extract_strided_slice %341 {offsets = [0, 0], sizes = [4, 20], strides = [1, 1]} : vector<4x80xf32> to vector<4x20xf32>
    %343 = vector.extract_strided_slice %341 {offsets = [0, 20], sizes = [4, 20], strides = [1, 1]} : vector<4x80xf32> to vector<4x20xf32>
    %344 = arith.maximumf %342, %343 : vector<4x20xf32>
    %345 = vector.extract_strided_slice %341 {offsets = [0, 20], sizes = [4, 20], strides = [1, 1]} : vector<4x80xf32> to vector<4x20xf32>
    %346 = vector.extract_strided_slice %341 {offsets = [0, 40], sizes = [4, 20], strides = [1, 1]} : vector<4x80xf32> to vector<4x20xf32>
    %347 = arith.maximumf %345, %346 : vector<4x20xf32>
    %348 = vector.extract_strided_slice %341 {offsets = [0, 40], sizes = [4, 20], strides = [1, 1]} : vector<4x80xf32> to vector<4x20xf32>
    %349 = vector.extract_strided_slice %341 {offsets = [0, 60], sizes = [4, 20], strides = [1, 1]} : vector<4x80xf32> to vector<4x20xf32>
    %350 = arith.maximumf %348, %349 : vector<4x20xf32>
    %351 = tpu.concatenate %344, %347, %350 in 1 : vector<4x20xf32>, vector<4x20xf32>, vector<4x20xf32> -> vector<4x60xf32>
    %c55 = arith.constant 55 : index
    %c0_107 = arith.constant 0 : index
    %352 = vector.load %arg11[%c55, %c0_107] : memref<72x80xf32, #tpu.memory_space<vmem>>, vector<4x80xf32>
    %353 = vector.extract_strided_slice %352 {offsets = [0, 0], sizes = [4, 20], strides = [1, 1]} : vector<4x80xf32> to vector<4x20xf32>
    %354 = vector.extract_strided_slice %352 {offsets = [0, 20], sizes = [4, 20], strides = [1, 1]} : vector<4x80xf32> to vector<4x20xf32>
    %355 = arith.maximumf %353, %354 : vector<4x20xf32>
    %356 = vector.extract_strided_slice %352 {offsets = [0, 20], sizes = [4, 20], strides = [1, 1]} : vector<4x80xf32> to vector<4x20xf32>
    %357 = vector.extract_strided_slice %352 {offsets = [0, 40], sizes = [4, 20], strides = [1, 1]} : vector<4x80xf32> to vector<4x20xf32>
    %358 = arith.maximumf %356, %357 : vector<4x20xf32>
    %359 = vector.extract_strided_slice %352 {offsets = [0, 40], sizes = [4, 20], strides = [1, 1]} : vector<4x80xf32> to vector<4x20xf32>
    %360 = vector.extract_strided_slice %352 {offsets = [0, 60], sizes = [4, 20], strides = [1, 1]} : vector<4x80xf32> to vector<4x20xf32>
    %361 = arith.maximumf %359, %360 : vector<4x20xf32>
    %362 = tpu.concatenate %355, %358, %361 in 1 : vector<4x20xf32>, vector<4x20xf32>, vector<4x20xf32> -> vector<4x60xf32>
    %c61 = arith.constant 61 : index
    %c0_108 = arith.constant 0 : index
    %363 = vector.load %arg11[%c61, %c0_108] : memref<72x80xf32, #tpu.memory_space<vmem>>, vector<4x80xf32>
    %364 = vector.extract_strided_slice %363 {offsets = [0, 0], sizes = [4, 20], strides = [1, 1]} : vector<4x80xf32> to vector<4x20xf32>
    %365 = vector.extract_strided_slice %363 {offsets = [0, 20], sizes = [4, 20], strides = [1, 1]} : vector<4x80xf32> to vector<4x20xf32>
    %366 = arith.maximumf %364, %365 : vector<4x20xf32>
    %367 = vector.extract_strided_slice %363 {offsets = [0, 20], sizes = [4, 20], strides = [1, 1]} : vector<4x80xf32> to vector<4x20xf32>
    %368 = vector.extract_strided_slice %363 {offsets = [0, 40], sizes = [4, 20], strides = [1, 1]} : vector<4x80xf32> to vector<4x20xf32>
    %369 = arith.maximumf %367, %368 : vector<4x20xf32>
    %370 = vector.extract_strided_slice %363 {offsets = [0, 40], sizes = [4, 20], strides = [1, 1]} : vector<4x80xf32> to vector<4x20xf32>
    %371 = vector.extract_strided_slice %363 {offsets = [0, 60], sizes = [4, 20], strides = [1, 1]} : vector<4x80xf32> to vector<4x20xf32>
    %372 = arith.maximumf %370, %371 : vector<4x20xf32>
    %373 = tpu.concatenate %366, %369, %372 in 1 : vector<4x20xf32>, vector<4x20xf32>, vector<4x20xf32> -> vector<4x60xf32>
    %374 = arith.maximumf %340, %351 : vector<4x60xf32>
    %375 = arith.maximumf %351, %362 : vector<4x60xf32>
    %376 = arith.maximumf %362, %373 : vector<4x60xf32>
    %377 = vector.extract_strided_slice %374 {offsets = [0, 0], sizes = [3, 60], strides = [1, 1]} : vector<4x60xf32> to vector<3x60xf32>
    %378 = vector.extract_strided_slice %374 {offsets = [1, 0], sizes = [3, 60], strides = [1, 1]} : vector<4x60xf32> to vector<3x60xf32>
    %379 = arith.maximumf %377, %378 : vector<3x60xf32>
    %380 = vector.extract_strided_slice %375 {offsets = [0, 0], sizes = [3, 60], strides = [1, 1]} : vector<4x60xf32> to vector<3x60xf32>
    %381 = vector.extract_strided_slice %375 {offsets = [1, 0], sizes = [3, 60], strides = [1, 1]} : vector<4x60xf32> to vector<3x60xf32>
    %382 = arith.maximumf %380, %381 : vector<3x60xf32>
    %383 = vector.extract_strided_slice %376 {offsets = [0, 0], sizes = [3, 60], strides = [1, 1]} : vector<4x60xf32> to vector<3x60xf32>
    %384 = vector.extract_strided_slice %376 {offsets = [1, 0], sizes = [3, 60], strides = [1, 1]} : vector<4x60xf32> to vector<3x60xf32>
    %385 = arith.maximumf %383, %384 : vector<3x60xf32>
    %386 = arith.addf %379, %382 : vector<3x60xf32>
    %387 = vector.extract_strided_slice %386 {offsets = [0, 0], sizes = [2, 60], strides = [1, 1]} : vector<3x60xf32> to vector<2x60xf32>
    %388 = vector.extract_strided_slice %386 {offsets = [1, 0], sizes = [2, 60], strides = [1, 1]} : vector<3x60xf32> to vector<2x60xf32>
    %389 = arith.addf %387, %388 : vector<2x60xf32>
    %390 = vector.extract_strided_slice %389 {offsets = [0, 0], sizes = [2, 20], strides = [1, 1]} : vector<2x60xf32> to vector<2x20xf32>
    %391 = vector.extract_strided_slice %389 {offsets = [0, 20], sizes = [2, 20], strides = [1, 1]} : vector<2x60xf32> to vector<2x20xf32>
    %392 = arith.addf %390, %391 : vector<2x20xf32>
    %393 = vector.extract_strided_slice %389 {offsets = [0, 20], sizes = [2, 20], strides = [1, 1]} : vector<2x60xf32> to vector<2x20xf32>
    %394 = vector.extract_strided_slice %389 {offsets = [0, 40], sizes = [2, 20], strides = [1, 1]} : vector<2x60xf32> to vector<2x20xf32>
    %395 = arith.addf %393, %394 : vector<2x20xf32>
    %396 = tpu.concatenate %392, %395 in 1 : vector<2x20xf32>, vector<2x20xf32> -> vector<2x40xf32>
    %cst_109 = arith.constant 1.250000e-01 : f32
    %397 = vector.broadcast %cst_109 : f32 to vector<2x40xf32>
    %398 = arith.mulf %396, %397 : vector<2x40xf32>
    %399 = vector.extract_strided_slice %398 {offsets = [0, 0], sizes = [1, 40], strides = [1, 1]} : vector<2x40xf32> to vector<1x40xf32>
    %400 = vector.extract_strided_slice %398 {offsets = [1, 0], sizes = [1, 40], strides = [1, 1]} : vector<2x40xf32> to vector<1x40xf32>
    %401 = arith.addf %382, %385 : vector<3x60xf32>
    %402 = vector.extract_strided_slice %401 {offsets = [0, 0], sizes = [2, 60], strides = [1, 1]} : vector<3x60xf32> to vector<2x60xf32>
    %403 = vector.extract_strided_slice %401 {offsets = [1, 0], sizes = [2, 60], strides = [1, 1]} : vector<3x60xf32> to vector<2x60xf32>
    %404 = arith.addf %402, %403 : vector<2x60xf32>
    %405 = vector.extract_strided_slice %404 {offsets = [0, 0], sizes = [2, 20], strides = [1, 1]} : vector<2x60xf32> to vector<2x20xf32>
    %406 = vector.extract_strided_slice %404 {offsets = [0, 20], sizes = [2, 20], strides = [1, 1]} : vector<2x60xf32> to vector<2x20xf32>
    %407 = arith.addf %405, %406 : vector<2x20xf32>
    %408 = vector.extract_strided_slice %404 {offsets = [0, 20], sizes = [2, 20], strides = [1, 1]} : vector<2x60xf32> to vector<2x20xf32>
    %409 = vector.extract_strided_slice %404 {offsets = [0, 40], sizes = [2, 20], strides = [1, 1]} : vector<2x60xf32> to vector<2x20xf32>
    %410 = arith.addf %408, %409 : vector<2x20xf32>
    %411 = tpu.concatenate %407, %410 in 1 : vector<2x20xf32>, vector<2x20xf32> -> vector<2x40xf32>
    %cst_110 = arith.constant 1.250000e-01 : f32
    %412 = vector.broadcast %cst_110 : f32 to vector<2x40xf32>
    %413 = arith.mulf %411, %412 : vector<2x40xf32>
    %414 = vector.extract_strided_slice %413 {offsets = [0, 0], sizes = [1, 40], strides = [1, 1]} : vector<2x40xf32> to vector<1x40xf32>
    %415 = vector.extract_strided_slice %413 {offsets = [1, 0], sizes = [1, 40], strides = [1, 1]} : vector<2x40xf32> to vector<1x40xf32>
    %416 = tpu.concatenate %399, %400, %414, %415 in 1 : vector<1x40xf32>, vector<1x40xf32>, vector<1x40xf32>, vector<1x40xf32> -> vector<1x160xf32>
    %417 = tpu.concatenate %329, %416 in 0 : vector<1x160xf32>, vector<1x160xf32> -> vector<2x160xf32>
    %c1_i32_111 = arith.constant 1 : i32
    %418 = tpu.memref_slice %arg16[%c1_i32_111] : memref<4x!tpu.dma_semaphore, #tpu.memory_space<semaphore_mem>> -> memref<1x!tpu.dma_semaphore, #tpu.memory_space<semaphore_mem>>
    %419 = tpu.memref_squeeze %418 : memref<1x!tpu.dma_semaphore, #tpu.memory_space<semaphore_mem>> -> memref<!tpu.dma_semaphore, #tpu.memory_space<semaphore_mem>>
    tpu.wait_dma2 semaphore(%419 : memref<!tpu.dma_semaphore, #tpu.memory_space<semaphore_mem>>) src(%arg5 : memref<160x400xf32, #tpu.memory_space<any>>) dst(%arg13 : memref<160x400xf32, #tpu.memory_space<vmem>>)
    %c2_i32_112 = arith.constant 2 : i32
    %420 = tpu.memref_slice %arg16[%c2_i32_112] : memref<4x!tpu.dma_semaphore, #tpu.memory_space<semaphore_mem>> -> memref<1x!tpu.dma_semaphore, #tpu.memory_space<semaphore_mem>>
    %421 = tpu.memref_squeeze %420 : memref<1x!tpu.dma_semaphore, #tpu.memory_space<semaphore_mem>> -> memref<!tpu.dma_semaphore, #tpu.memory_space<semaphore_mem>>
    tpu.wait_dma2 semaphore(%421 : memref<!tpu.dma_semaphore, #tpu.memory_space<semaphore_mem>>) src(%arg6 : memref<400x200xf32, #tpu.memory_space<any>>) dst(%arg14 : memref<400x200xf32, #tpu.memory_space<vmem>>)
    %c3_i32_113 = arith.constant 3 : i32
    %422 = tpu.memref_slice %arg16[%c3_i32_113] : memref<4x!tpu.dma_semaphore, #tpu.memory_space<semaphore_mem>> -> memref<1x!tpu.dma_semaphore, #tpu.memory_space<semaphore_mem>>
    %423 = tpu.memref_squeeze %422 : memref<1x!tpu.dma_semaphore, #tpu.memory_space<semaphore_mem>> -> memref<!tpu.dma_semaphore, #tpu.memory_space<semaphore_mem>>
    tpu.wait_dma2 semaphore(%423 : memref<!tpu.dma_semaphore, #tpu.memory_space<semaphore_mem>>) src(%arg7 : memref<200x200xf32, #tpu.memory_space<any>>) dst(%arg15 : memref<200x200xf32, #tpu.memory_space<vmem>>)
    %c0_114 = arith.constant 0 : index
    %c0_115 = arith.constant 0 : index
    %424 = vector.load %arg13[%c0_114, %c0_115] : memref<160x400xf32, #tpu.memory_space<vmem>>, vector<160x400xf32>
    %cst_116 = arith.constant dense<0.000000e+00> : vector<2x400xf32>
    %425 = tpu.matmul %417, %424, %cst_116 {dimension_numbers = #tpu.dot_dimension_numbers<[1], [0], [0], [1], [0, 0, 1, 1], [], []>} : vector<2x160xf32>, vector<160x400xf32>, vector<2x400xf32> -> vector<2x400xf32>
    %c0_117 = arith.constant 0 : index
    %c384 = arith.constant 384 : index
    %426 = vector.load %arg2[%c0_117, %c384] : memref<1x1536xf32, #tpu.memory_space<vmem>>, vector<1x400xf32>
    %427 = vector.broadcast %426 : vector<1x400xf32> to vector<2x400xf32>
    %428 = arith.addf %425, %427 : vector<2x400xf32>
    %cst_118 = arith.constant 0.000000e+00 : f32
    %429 = vector.broadcast %cst_118 : f32 to vector<2x400xf32>
    %430 = arith.maximumf %428, %429 : vector<2x400xf32>
    %c0_119 = arith.constant 0 : index
    %c0_120 = arith.constant 0 : index
    %431 = vector.load %arg14[%c0_119, %c0_120] : memref<400x200xf32, #tpu.memory_space<vmem>>, vector<400x200xf32>
    %cst_121 = arith.constant dense<0.000000e+00> : vector<2x200xf32>
    %432 = tpu.matmul %430, %431, %cst_121 {dimension_numbers = #tpu.dot_dimension_numbers<[1], [0], [0], [1], [0, 0, 1, 1], [], []>} : vector<2x400xf32>, vector<400x200xf32>, vector<2x200xf32> -> vector<2x200xf32>
    %c0_122 = arith.constant 0 : index
    %c896 = arith.constant 896 : index
    %433 = vector.load %arg2[%c0_122, %c896] : memref<1x1536xf32, #tpu.memory_space<vmem>>, vector<1x200xf32>
    %434 = vector.broadcast %433 : vector<1x200xf32> to vector<2x200xf32>
    %435 = arith.addf %432, %434 : vector<2x200xf32>
    %cst_123 = arith.constant 0.000000e+00 : f32
    %436 = vector.broadcast %cst_123 : f32 to vector<2x200xf32>
    %437 = arith.maximumf %435, %436 : vector<2x200xf32>
    %c0_124 = arith.constant 0 : index
    %c0_125 = arith.constant 0 : index
    %438 = vector.load %arg15[%c0_124, %c0_125] : memref<200x200xf32, #tpu.memory_space<vmem>>, vector<200x200xf32>
    %cst_126 = arith.constant dense<0.000000e+00> : vector<2x200xf32>
    %439 = tpu.matmul %437, %438, %cst_126 {dimension_numbers = #tpu.dot_dimension_numbers<[1], [0], [0], [1], [0, 0, 1, 1], [], []>} : vector<2x200xf32>, vector<200x200xf32>, vector<2x200xf32> -> vector<2x200xf32>
    %c0_127 = arith.constant 0 : index
    %c1152 = arith.constant 1152 : index
    %440 = vector.load %arg2[%c0_127, %c1152] : memref<1x1536xf32, #tpu.memory_space<vmem>>, vector<1x200xf32>
    %441 = vector.broadcast %440 : vector<1x200xf32> to vector<2x200xf32>
    %442 = arith.addf %439, %441 : vector<2x200xf32>
    %cst_128 = arith.constant 0.000000e+00 : f32
    %443 = vector.broadcast %cst_128 : f32 to vector<2x200xf32>
    %444 = arith.maximumf %442, %443 : vector<2x200xf32>
    %c0_129 = arith.constant 0 : index
    %c0_130 = arith.constant 0 : index
    %445 = vector.load %arg3[%c0_129, %c0_130] : memref<200x1xf32, #tpu.memory_space<vmem>>, vector<200x1xf32>
    %cst_131 = arith.constant dense<0.000000e+00> : vector<2x1xf32>
    %446 = tpu.matmul %444, %445, %cst_131 {dimension_numbers = #tpu.dot_dimension_numbers<[1], [0], [0], [1], [0, 0, 1, 1], [], []>} : vector<2x200xf32>, vector<200x1xf32>, vector<2x1xf32> -> vector<2x1xf32>
    %c0_132 = arith.constant 0 : index
    %c1408 = arith.constant 1408 : index
    %447 = vector.load %arg2[%c0_132, %c1408] : memref<1x1536xf32, #tpu.memory_space<vmem>>, vector<1x1xf32>
    %448 = vector.broadcast %447 : vector<1x1xf32> to vector<2x1xf32>
    %449 = arith.addf %446, %448 : vector<2x1xf32>
    %c0_133 = arith.constant 0 : index
    %c0_134 = arith.constant 0 : index
    %450 = vector.load %arg8[%c0_133, %c0_134] : memref<2x1xf32, #tpu.memory_space<vmem>>, vector<2x1xf32>
    tpu.vector_store %arg8[%c0_133, %c0_134], %449 {strides = array<i32>} : memref<2x1xf32, #tpu.memory_space<vmem>>, vector<2x1xf32>,
    return
  }
}

</mosaic_0001>

<llo_original>
// kernel: tpu_custom_call.1
$region0: #{tpu_custom_call.1}
  #allocation0 [shape = 'u32[]', space=smem, size = 0x4, offset = 0x4, fixed_abs, tag = 'smem constant byte address 0x4 - core index']
  #allocation1 [shape = 'u32[144,128]{1,0:T(1,128)}', space=vmem, size = 0x12000, scoped, tag = 'internal scratch']
  #allocation2 [shape = 'f32[128,80]{1,0:T(8,128)}', space=vmem, size = 0x10000, scoped, tag = 'scratch operand']
  #allocation3 [shape = 'f32[86,120]{1,0:T(8,128)}', space=vmem, size = 0xb000, scoped, tag = 'scratch operand']
  #allocation4 [shape = 'f32[72,80]{1,0:T(8,128)}', space=vmem, size = 0x9000, scoped, tag = 'scratch operand']
  #allocation5 [shape = 'f32[9,120,80]{2,1,0:T(8,128)}', space=vmem, size = 0x87000, scoped, tag = 'scratch operand']
  #allocation6 [shape = 'f32[160,400]{1,0:T(8,128)}', space=vmem, size = 0x50000, scoped, tag = 'scratch operand']
  #allocation7 [shape = 'f32[400,200]{1,0:T(8,128)}', space=vmem, size = 0x64000, scoped, tag = 'scratch operand']
  #allocation8 [shape = 'f32[200,200]{1,0:T(8,128)}', space=vmem, size = 0x32000, scoped, tag = 'scratch operand']
  #allocation9 [shape = 's32[4]{0}', space=sflag, size = 0x10, scoped, tag = 'scratch operand']
  #allocation10 [shape = 's32[]', space=sflag, size = 0x4, offset = 0, fixed_abs, tag = 'sflag constant byte address 0x0 - dummy sync flag']
  #allocation11 [shape = 's32[]', space=sflag, size = 0x4, offset = 0, fixed_abs, tag = 'sflag constant byte address 0x0 - dummy sync flag']
  #allocation12 [shape = 's32[]', space=sflag, size = 0x4, offset = 0, fixed_abs, tag = 'sflag constant byte address 0x0 - dummy sync flag']
  #allocation13 [shape = 's32[]', space=sflag, size = 0x4, offset = 0, fixed_abs, tag = 'sflag constant byte address 0x0 - dummy sync flag']
  %s0 = inlined_call_operand.vmem [shape: f32[128,90], index: 0, kind: input, shape index: {}]
  %s1 = inlined_call_operand.vmem [shape: f32[90,160], index: 1, kind: input, shape index: {}]
  %s2 = inlined_call_operand.vmem [shape: f32[1,1536], index: 2, kind: input, shape index: {}]
  %s3 = inlined_call_operand.vmem [shape: f32[200,1], index: 3, kind: input, shape index: {}]
  %s4 = inlined_call_operand.vmem [shape: f32[9,120,80], index: 4, kind: input, shape index: {}]
  %s5 = inlined_call_operand.vmem [shape: f32[160,400], index: 5, kind: input, shape index: {}]
  %s6 = inlined_call_operand.vmem [shape: f32[400,200], index: 6, kind: input, shape index: {}]
  %s7 = inlined_call_operand.vmem [shape: f32[200,200], index: 7, kind: input, shape index: {}]
  %s8 = inlined_call_operand.vmem [shape: f32[2,1], index: 8, kind: output, shape index: {}]
  %s9 = sld [smem:[#allocation0]]
  $region162: #{tpu_custom_call.1} parent=0
    _
  %s11 = ssub.s32 1, %s9
  %s12 = scalar_select 0, %s11, %s9
  // Predicated region
  $region2: #{tpu_custom_call.1} parent=0 // pred_check
    _
  $region3: #{tpu_custom_call.1} parent=0 // pred_check_branch
    %14 = sbr.rel (0) target = $region5
  $region4: #{tpu_custom_call.1} parent=0 // pred_region
    _
  $region5: #{tpu_custom_call.1} parent=0 // pred_fallthru
    _
  // Predicated region
  $region6: #{tpu_custom_call.1} parent=0 // pred_check
    _
  $region7: #{tpu_custom_call.1} parent=0 // pred_check_branch
    %16 = sbr.rel (0) target = $region9
  $region8: #{tpu_custom_call.1} parent=0 // pred_region
    _
  $region9: #{tpu_custom_call.1} parent=0 // pred_fallthru
    _
  // Predicated region
  $region10: #{tpu_custom_call.1} parent=0 // pred_check
    _
  $region11: #{tpu_custom_call.1} parent=0 // pred_check_branch
    %18 = sbr.rel (0) target = $region13
  $region12: #{tpu_custom_call.1} parent=0 // pred_region
    _
  $region13: #{tpu_custom_call.1} parent=0 // pred_fallthru
    _
  // Predicated region
  $region14: #{tpu_custom_call.1} parent=0 // pred_check
    _
  $region15: #{tpu_custom_call.1} parent=0 // pred_check_branch
    %20 = sbr.rel (0) target = $region17
  $region16: #{tpu_custom_call.1} parent=0 // pred_region
    _
  $region17: #{tpu_custom_call.1} parent=0 // pred_fallthru
    _
  %p22 = scmp.lt.u32.totalorder 1080, 8
  %p23 = pneg %p22
  // Predicated region
  $region18: #{tpu_custom_call.1} parent=0 // pred_check
    _
  $region19: #{tpu_custom_call.1} parent=0 // pred_check_branch
    %25 = sbr.rel (%p22) target = $region21
  $region20: #{tpu_custom_call.1} parent=0 // pred_region
    %s40 = sand.u32 1080, 7
    %p41 = scmp.eq.s32.totalorder %s40, 0
    // Predicated region
    $region33: #{tpu_custom_call.1} parent=20 // pred_check
      %p42 = pneg %p41
    $region34: #{tpu_custom_call.1} parent=20 // pred_check_branch
      %44 = sbr.rel (%p42) target = $region36
    $region35: #{tpu_custom_call.1} parent=20 // pred_region
      loop: start=0, step=1, limit=1
      $region37: #{tpu_custom_call.1} parent=35 // loop_pre_header
        _
      $region38: #{tpu_custom_call.1} parent=35 // loop_header
        %s46 = sphi 0, %s50
        %p47 = scmp.ge.s32.totalorder %s46, 1
        %s51 = sphi %s4, %s4
        %s52 = sphi [#allocation5], [#allocation5]
      $region39: #{tpu_custom_call.1} parent=35 // loop_header_branch
        %49 = sbr.rel (%p47) target = $region43
      $region40: #{tpu_custom_call.1} parent=35 // loop_body
        %v53 = vld [vmem:[%s51] sm:$0xff]
        %54 = vst [vmem:[%s52] sm:$0xff] %v53
        %v55 = vld [vmem:[%s51 + $0x8] sm:$0xff]
        %56 = vst [vmem:[%s52 + $0x8] sm:$0xff] %v55
        %v57 = vld [vmem:[%s51 + $0x10] sm:$0xff]
        %58 = vst [vmem:[%s52 + $0x10] sm:$0xff] %v57
        %v59 = vld [vmem:[%s51 + $0x18] sm:$0xff]
        %60 = vst [vmem:[%s52 + $0x18] sm:$0xff] %v59
        %v61 = vld [vmem:[%s51 + $0x20] sm:$0xff]
        %62 = vst [vmem:[%s52 + $0x20] sm:$0xff] %v61
        %v63 = vld [vmem:[%s51 + $0x28] sm:$0xff]
        %64 = vst [vmem:[%s52 + $0x28] sm:$0xff] %v63
        %v65 = vld [vmem:[%s51 + $0x30] sm:$0xff]
        %66 = vst [vmem:[%s52 + $0x30] sm:$0xff] %v65
        %v67 = vld [vmem:[%s51 + $0x38] sm:$0xff]
        %68 = vst [vmem:[%s52 + $0x38] sm:$0xff] %v67
        %v69 = vld [vmem:[%s51 + $0x40] sm:$0xff]
        %70 = vst [vmem:[%s52 + $0x40] sm:$0xff] %v69
        %v71 = vld [vmem:[%s51 + $0x48] sm:$0xff]
        %72 = vst [vmem:[%s52 + $0x48] sm:$0xff] %v71
        %v73 = vld [vmem:[%s51 + $0x50] sm:$0xff]
        %74 = vst [vmem:[%s52 + $0x50] sm:$0xff] %v73
        %v75 = vld [vmem:[%s51 + $0x58] sm:$0xff]
        %76 = vst [vmem:[%s52 + $0x58] sm:$0xff] %v75
        %v77 = vld [vmem:[%s51 + $0x60] sm:$0xff]
        %78 = vst [vmem:[%s52 + $0x60] sm:$0xff] %v77
        %v79 = vld [vmem:[%s51 + $0x68] sm:$0xff]
        %80 = vst [vmem:[%s52 + $0x68] sm:$0xff] %v79
        %v81 = vld [vmem:[%s51 + $0x70] sm:$0xff]
        %82 = vst [vmem:[%s52 + $0x70] sm:$0xff] %v81
        %v83 = vld [vmem:[%s51 + $0x78] sm:$0xff]
        %84 = vst [vmem:[%s52 + $0x78] sm:$0xff] %v83
        %v85 = vld [vmem:[%s51 + $0x80] sm:$0xff]
        %86 = vst [vmem:[%s52 + $0x80] sm:$0xff] %v85
        %v87 = vld [vmem:[%s51 + $0x88] sm:$0xff]
        %88 = vst [vmem:[%s52 + $0x88] sm:$0xff] %v87
        %v89 = vld [vmem:[%s51 + $0x90] sm:$0xff]
        %90 = vst [vmem:[%s52 + $0x90] sm:$0xff] %v89
        %v91 = vld [vmem:[%s51 + $0x98] sm:$0xff]
        %92 = vst [vmem:[%s52 + $0x98] sm:$0xff] %v91
        %v93 = vld [vmem:[%s51 + $0xa0] sm:$0xff]
        %94 = vst [vmem:[%s52 + $0xa0] sm:$0xff] %v93
        %v95 = vld [vmem:[%s51 + $0xa8] sm:$0xff]
        %96 = vst [vmem:[%s52 + $0xa8] sm:$0xff] %v95
        %v97 = vld [vmem:[%s51 + $0xb0] sm:$0xff]
        %98 = vst [vmem:[%s52 + $0xb0] sm:$0xff] %v97
        %v99 = vld [vmem:[%s51 + $0xb8] sm:$0xff]
        %100 = vst [vmem:[%s52 + $0xb8] sm:$0xff] %v99
        %v101 = vld [vmem:[%s51 + $0xc0] sm:$0xff]
        %102 = vst [vmem:[%s52 + $0xc0] sm:$0xff] %v101
        %v103 = vld [vmem:[%s51 + $0xc8] sm:$0xff]
        %104 = vst [vmem:[%s52 + $0xc8] sm:$0xff] %v103
        %v105 = vld [vmem:[%s51 + $0xd0] sm:$0xff]
        %106 = vst [vmem:[%s52 + $0xd0] sm:$0xff] %v105
        %v107 = vld [vmem:[%s51 + $0xd8] sm:$0xff]
        %108 = vst [vmem:[%s52 + $0xd8] sm:$0xff] %v107
        %v109 = vld [vmem:[%s51 + $0xe0] sm:$0xff]
        %110 = vst [vmem:[%s52 + $0xe0] sm:$0xff] %v109
        %v111 = vld [vmem:[%s51 + $0xe8] sm:$0xff]
        %112 = vst [vmem:[%s52 + $0xe8] sm:$0xff] %v111
        %v113 = vld [vmem:[%s51 + $0xf0] sm:$0xff]
        %114 = vst [vmem:[%s52 + $0xf0] sm:$0xff] %v113
        %v115 = vld [vmem:[%s51 + $0xf8] sm:$0xff]
        %116 = vst [vmem:[%s52 + $0xf8] sm:$0xff] %v115
        %v117 = vld [vmem:[%s51 + $0x100] sm:$0xff]
        %118 = vst [vmem:[%s52 + $0x100] sm:$0xff] %v117
        %v119 = vld [vmem:[%s51 + $0x108] sm:$0xff]
        %120 = vst [vmem:[%s52 + $0x108] sm:$0xff] %v119
        %v121 = vld [vmem:[%s51 + $0x110] sm:$0xff]
        %122 = vst [vmem:[%s52 + $0x110] sm:$0xff] %v121
        %v123 = vld [vmem:[%s51 + $0x118] sm:$0xff]
        %124 = vst [vmem:[%s52 + $0x118] sm:$0xff] %v123
        %v125 = vld [vmem:[%s51 + $0x120] sm:$0xff]
        %126 = vst [vmem:[%s52 + $0x120] sm:$0xff] %v125
        %v127 = vld [vmem:[%s51 + $0x128] sm:$0xff]
        %128 = vst [vmem:[%s52 + $0x128] sm:$0xff] %v127
        %v129 = vld [vmem:[%s51 + $0x130] sm:$0xff]
        %130 = vst [vmem:[%s52 + $0x130] sm:$0xff] %v129
        %v131 = vld [vmem:[%s51 + $0x138] sm:$0xff]
        %132 = vst [vmem:[%s52 + $0x138] sm:$0xff] %v131
        %v133 = vld [vmem:[%s51 + $0x140] sm:$0xff]
        %134 = vst [vmem:[%s52 + $0x140] sm:$0xff] %v133
        %v135 = vld [vmem:[%s51 + $0x148] sm:$0xff]
        %136 = vst [vmem:[%s52 + $0x148] sm:$0xff] %v135
        %v137 = vld [vmem:[%s51 + $0x150] sm:$0xff]
        %138 = vst [vmem:[%s52 + $0x150] sm:$0xff] %v137
        %v139 = vld [vmem:[%s51 + $0x158] sm:$0xff]
        %140 = vst [vmem:[%s52 + $0x158] sm:$0xff] %v139
        %v141 = vld [vmem:[%s51 + $0x160] sm:$0xff]
        %142 = vst [vmem:[%s52 + $0x160] sm:$0xff] %v141
        %v143 = vld [vmem:[%s51 + $0x168] sm:$0xff]
        %144 = vst [vmem:[%s52 + $0x168] sm:$0xff] %v143
        %v145 = vld [vmem:[%s51 + $0x170] sm:$0xff]
        %146 = vst [vmem:[%s52 + $0x170] sm:$0xff] %v145
        %v147 = vld [vmem:[%s51 + $0x178] sm:$0xff]
        %148 = vst [vmem:[%s52 + $0x178] sm:$0xff] %v147
        %v149 = vld [vmem:[%s51 + $0x180] sm:$0xff]
        %150 = vst [vmem:[%s52 + $0x180] sm:$0xff] %v149
        %v151 = vld [vmem:[%s51 + $0x188] sm:$0xff]
        %152 = vst [vmem:[%s52 + $0x188] sm:$0xff] %v151
        %v153 = vld [vmem:[%s51 + $0x190] sm:$0xff]
        %154 = vst [vmem:[%s52 + $0x190] sm:$0xff] %v153
        %v155 = vld [vmem:[%s51 + $0x198] sm:$0xff]
        %156 = vst [vmem:[%s52 + $0x198] sm:$0xff] %v155
        %v157 = vld [vmem:[%s51 + $0x1a0] sm:$0xff]
        %158 = vst [vmem:[%s52 + $0x1a0] sm:$0xff] %v157
        %v159 = vld [vmem:[%s51 + $0x1a8] sm:$0xff]
        %160 = vst [vmem:[%s52 + $0x1a8] sm:$0xff] %v159
        %v161 = vld [vmem:[%s51 + $0x1b0] sm:$0xff]
        %162 = vst [vmem:[%s52 + $0x1b0] sm:$0xff] %v161
        %v163 = vld [vmem:[%s51 + $0x1b8] sm:$0xff]
        %164 = vst [vmem:[%s52 + $0x1b8] sm:$0xff] %v163
        %v165 = vld [vmem:[%s51 + $0x1c0] sm:$0xff]
        %166 = vst [vmem:[%s52 + $0x1c0] sm:$0xff] %v165
        %v167 = vld [vmem:[%s51 + $0x1c8] sm:$0xff]
        %168 = vst [vmem:[%s52 + $0x1c8] sm:$0xff] %v167
        %v169 = vld [vmem:[%s51 + $0x1d0] sm:$0xff]
        %170 = vst [vmem:[%s52 + $0x1d0] sm:$0xff] %v169
        %v171 = vld [vmem:[%s51 + $0x1d8] sm:$0xff]
        %172 = vst [vmem:[%s52 + $0x1d8] sm:$0xff] %v171
        %v173 = vld [vmem:[%s51 + $0x1e0] sm:$0xff]
        %174 = vst [vmem:[%s52 + $0x1e0] sm:$0xff] %v173
        %v175 = vld [vmem:[%s51 + $0x1e8] sm:$0xff]
        %176 = vst [vmem:[%s52 + $0x1e8] sm:$0xff] %v175
        %v177 = vld [vmem:[%s51 + $0x1f0] sm:$0xff]
        %178 = vst [vmem:[%s52 + $0x1f0] sm:$0xff] %v177
        %v179 = vld [vmem:[%s51 + $0x1f8] sm:$0xff]
        %180 = vst [vmem:[%s52 + $0x1f8] sm:$0xff] %v179
        %v181 = vld [vmem:[%s51 + $0x200] sm:$0xff]
        %182 = vst [vmem:[%s52 + $0x200] sm:$0xff] %v181
        %v183 = vld [vmem:[%s51 + $0x208] sm:$0xff]
        %184 = vst [vmem:[%s52 + $0x208] sm:$0xff] %v183
        %v185 = vld [vmem:[%s51 + $0x210] sm:$0xff]
        %186 = vst [vmem:[%s52 + $0x210] sm:$0xff] %v185
        %v187 = vld [vmem:[%s51 + $0x218] sm:$0xff]
        %188 = vst [vmem:[%s52 + $0x218] sm:$0xff] %v187
        %v189 = vld [vmem:[%s51 + $0x220] sm:$0xff]
        %190 = vst [vmem:[%s52 + $0x220] sm:$0xff] %v189
        %v191 = vld [vmem:[%s51 + $0x228] sm:$0xff]
        %192 = vst [vmem:[%s52 + $0x228] sm:$0xff] %v191
        %v193 = vld [vmem:[%s51 + $0x230] sm:$0xff]
        %194 = vst [vmem:[%s52 + $0x230] sm:$0xff] %v193
        %v195 = vld [vmem:[%s51 + $0x238] sm:$0xff]
        %196 = vst [vmem:[%s52 + $0x238] sm:$0xff] %v195
        %v197 = vld [vmem:[%s51 + $0x240] sm:$0xff]
        %198 = vst [vmem:[%s52 + $0x240] sm:$0xff] %v197
        %v199 = vld [vmem:[%s51 + $0x248] sm:$0xff]
        %200 = vst [vmem:[%s52 + $0x248] sm:$0xff] %v199
        %v201 = vld [vmem:[%s51 + $0x250] sm:$0xff]
        %202 = vst [vmem:[%s52 + $0x250] sm:$0xff] %v201
        %v203 = vld [vmem:[%s51 + $0x258] sm:$0xff]
        %204 = vst [vmem:[%s52 + $0x258] sm:$0xff] %v203
        %v205 = vld [vmem:[%s51 + $0x260] sm:$0xff]
        %206 = vst [vmem:[%s52 + $0x260] sm:$0xff] %v205
        %v207 = vld [vmem:[%s51 + $0x268] sm:$0xff]
        %208 = vst [vmem:[%s52 + $0x268] sm:$0xff] %v207
        %v209 = vld [vmem:[%s51 + $0x270] sm:$0xff]
        %210 = vst [vmem:[%s52 + $0x270] sm:$0xff] %v209
        %v211 = vld [vmem:[%s51 + $0x278] sm:$0xff]
        %212 = vst [vmem:[%s52 + $0x278] sm:$0xff] %v211
        %v213 = vld [vmem:[%s51 + $0x280] sm:$0xff]
        %214 = vst [vmem:[%s52 + $0x280] sm:$0xff] %v213
        %v215 = vld [vmem:[%s51 + $0x288] sm:$0xff]
        %216 = vst [vmem:[%s52 + $0x288] sm:$0xff] %v215
        %v217 = vld [vmem:[%s51 + $0x290] sm:$0xff]
        %218 = vst [vmem:[%s52 + $0x290] sm:$0xff] %v217
        %v219 = vld [vmem:[%s51 + $0x298] sm:$0xff]
        %220 = vst [vmem:[%s52 + $0x298] sm:$0xff] %v219
        %v221 = vld [vmem:[%s51 + $0x2a0] sm:$0xff]
        %222 = vst [vmem:[%s52 + $0x2a0] sm:$0xff] %v221
        %v223 = vld [vmem:[%s51 + $0x2a8] sm:$0xff]
        %224 = vst [vmem:[%s52 + $0x2a8] sm:$0xff] %v223
        %v225 = vld [vmem:[%s51 + $0x2b0] sm:$0xff]
        %226 = vst [vmem:[%s52 + $0x2b0] sm:$0xff] %v225
        %v227 = vld [vmem:[%s51 + $0x2b8] sm:$0xff]
        %228 = vst [vmem:[%s52 + $0x2b8] sm:$0xff] %v227
        %v229 = vld [vmem:[%s51 + $0x2c0] sm:$0xff]
        %230 = vst [vmem:[%s52 + $0x2c0] sm:$0xff] %v229
        %v231 = vld [vmem:[%s51 + $0x2c8] sm:$0xff]
        %232 = vst [vmem:[%s52 + $0x2c8] sm:$0xff] %v231
        %v233 = vld [vmem:[%s51 + $0x2d0] sm:$0xff]
        %234 = vst [vmem:[%s52 + $0x2d0] sm:$0xff] %v233
        %v235 = vld [vmem:[%s51 + $0x2d8] sm:$0xff]
        %236 = vst [vmem:[%s52 + $0x2d8] sm:$0xff] %v235
        %v237 = vld [vmem:[%s51 + $0x2e0] sm:$0xff]
        %238 = vst [vmem:[%s52 + $0x2e0] sm:$0xff] %v237
        %v239 = vld [vmem:[%s51 + $0x2e8] sm:$0xff]
        %240 = vst [vmem:[%s52 + $0x2e8] sm:$0xff] %v239
        %v241 = vld [vmem:[%s51 + $0x2f0] sm:$0xff]
        %242 = vst [vmem:[%s52 + $0x2f0] sm:$0xff] %v241
        %v243 = vld [vmem:[%s51 + $0x2f8] sm:$0xff]
        %244 = vst [vmem:[%s52 + $0x2f8] sm:$0xff] %v243
        %v245 = vld [vmem:[%s51 + $0x300] sm:$0xff]
        %246 = vst [vmem:[%s52 + $0x300] sm:$0xff] %v245
        %v247 = vld [vmem:[%s51 + $0x308] sm:$0xff]
        %248 = vst [vmem:[%s52 + $0x308] sm:$0xff] %v247
        %v249 = vld [vmem:[%s51 + $0x310] sm:$0xff]
        %250 = vst [vmem:[%s52 + $0x310] sm:$0xff] %v249
        %v251 = vld [vmem:[%s51 + $0x318] sm:$0xff]
        %252 = vst [vmem:[%s52 + $0x318] sm:$0xff] %v251
        %v253 = vld [vmem:[%s51 + $0x320] sm:$0xff]
        %254 = vst [vmem:[%s52 + $0x320] sm:$0xff] %v253
        %v255 = vld [vmem:[%s51 + $0x328] sm:$0xff]
        %256 = vst [vmem:[%s52 + $0x328] sm:$0xff] %v255
        %v257 = vld [vmem:[%s51 + $0x330] sm:$0xff]
        %258 = vst [vmem:[%s52 + $0x330] sm:$0xff] %v257
        %v259 = vld [vmem:[%s51 + $0x338] sm:$0xff]
        %260 = vst [vmem:[%s52 + $0x338] sm:$0xff] %v259
        %v261 = vld [vmem:[%s51 + $0x340] sm:$0xff]
        %262 = vst [vmem:[%s52 + $0x340] sm:$0xff] %v261
        %v263 = vld [vmem:[%s51 + $0x348] sm:$0xff]
        %264 = vst [vmem:[%s52 + $0x348] sm:$0xff] %v263
        %v265 = vld [vmem:[%s51 + $0x350] sm:$0xff]
        %266 = vst [vmem:[%s52 + $0x350] sm:$0xff] %v265
        %v267 = vld [vmem:[%s51 + $0x358] sm:$0xff]
        %268 = vst [vmem:[%s52 + $0x358] sm:$0xff] %v267
        %v269 = vld [vmem:[%s51 + $0x360] sm:$0xff]
        %270 = vst [vmem:[%s52 + $0x360] sm:$0xff] %v269
        %v271 = vld [vmem:[%s51 + $0x368] sm:$0xff]
        %272 = vst [vmem:[%s52 + $0x368] sm:$0xff] %v271
        %v273 = vld [vmem:[%s51 + $0x370] sm:$0xff]
        %274 = vst [vmem:[%s52 + $0x370] sm:$0xff] %v273
        %v275 = vld [vmem:[%s51 + $0x378] sm:$0xff]
        %276 = vst [vmem:[%s52 + $0x378] sm:$0xff] %v275
        %v277 = vld [vmem:[%s51 + $0x380] sm:$0xff]
        %278 = vst [vmem:[%s52 + $0x380] sm:$0xff] %v277
        %v279 = vld [vmem:[%s51 + $0x388] sm:$0xff]
        %280 = vst [vmem:[%s52 + $0x388] sm:$0xff] %v279
        %v281 = vld [vmem:[%s51 + $0x390] sm:$0xff]
        %282 = vst [vmem:[%s52 + $0x390] sm:$0xff] %v281
        %v283 = vld [vmem:[%s51 + $0x398] sm:$0xff]
        %284 = vst [vmem:[%s52 + $0x398] sm:$0xff] %v283
        %v285 = vld [vmem:[%s51 + $0x3a0] sm:$0xff]
        %286 = vst [vmem:[%s52 + $0x3a0] sm:$0xff] %v285
        %v287 = vld [vmem:[%s51 + $0x3a8] sm:$0xff]
        %288 = vst [vmem:[%s52 + $0x3a8] sm:$0xff] %v287
        %v289 = vld [vmem:[%s51 + $0x3b0] sm:$0xff]
        %290 = vst [vmem:[%s52 + $0x3b0] sm:$0xff] %v289
        %v291 = vld [vmem:[%s51 + $0x3b8] sm:$0xff]
        %292 = vst [vmem:[%s52 + $0x3b8] sm:$0xff] %v291
        %v293 = vld [vmem:[%s51 + $0x3c0] sm:$0xff]
        %294 = vst [vmem:[%s52 + $0x3c0] sm:$0xff] %v293
        %v295 = vld [vmem:[%s51 + $0x3c8] sm:$0xff]
        %296 = vst [vmem:[%s52 + $0x3c8] sm:$0xff] %v295
        %v297 = vld [vmem:[%s51 + $0x3d0] sm:$0xff]
        %298 = vst [vmem:[%s52 + $0x3d0] sm:$0xff] %v297
        %v299 = vld [vmem:[%s51 + $0x3d8] sm:$0xff]
        %300 = vst [vmem:[%s52 + $0x3d8] sm:$0xff] %v299
        %v301 = vld [vmem:[%s51 + $0x3e0] sm:$0xff]
        %302 = vst [vmem:[%s52 + $0x3e0] sm:$0xff] %v301
        %v303 = vld [vmem:[%s51 + $0x3e8] sm:$0xff]
        %304 = vst [vmem:[%s52 + $0x3e8] sm:$0xff] %v303
        %v305 = vld [vmem:[%s51 + $0x3f0] sm:$0xff]
        %306 = vst [vmem:[%s52 + $0x3f0] sm:$0xff] %v305
        %v307 = vld [vmem:[%s51 + $0x3f8] sm:$0xff]
        %308 = vst [vmem:[%s52 + $0x3f8] sm:$0xff] %v307
        %v309 = vld [vmem:[%s51 + $0x400] sm:$0xff]
        %310 = vst [vmem:[%s52 + $0x400] sm:$0xff] %v309
        %v311 = vld [vmem:[%s51 + $0x408] sm:$0xff]
        %312 = vst [vmem:[%s52 + $0x408] sm:$0xff] %v311
        %v313 = vld [vmem:[%s51 + $0x410] sm:$0xff]
        %314 = vst [vmem:[%s52 + $0x410] sm:$0xff] %v313
        %v315 = vld [vmem:[%s51 + $0x418] sm:$0xff]
        %316 = vst [vmem:[%s52 + $0x418] sm:$0xff] %v315
        %v317 = vld [vmem:[%s51 + $0x420] sm:$0xff]
        %318 = vst [vmem:[%s52 + $0x420] sm:$0xff] %v317
        %v319 = vld [vmem:[%s51 + $0x428] sm:$0xff]
        %320 = vst [vmem:[%s52 + $0x428] sm:$0xff] %v319
        %v321 = vld [vmem:[%s51 + $0x430] sm:$0xff]
        %322 = vst [vmem:[%s52 + $0x430] sm:$0xff] %v321
      $region41: #{tpu_custom_call.1} parent=35 // loop_footer
        %s50 = sadd.s32 1, %s46
      $region42: #{tpu_custom_call.1} parent=35 // loop_footer_branch
        %45 = sbr.rel target = $region38
      $region43: #{tpu_custom_call.1} parent=35 // loop_exit
        _
    $region36: #{tpu_custom_call.1} parent=20 // pred_fallthru
      _
    %p323 = pneg %p41
    // Predicated region
    $region44: #{tpu_custom_call.1} parent=20 // pred_check
      _
    $region45: #{tpu_custom_call.1} parent=20 // pred_check_branch
      %325 = sbr.rel (%p41) target = $region47
    $region46: #{tpu_custom_call.1} parent=20 // pred_region
      %s326 = sand.u32 1080, 7
    $region47: #{tpu_custom_call.1} parent=20 // pred_fallthru
      _
  $region21: #{tpu_custom_call.1} parent=0 // pred_fallthru
    _
  // Predicated region
  $region22: #{tpu_custom_call.1} parent=0 // pred_check
    %p26 = pneg %p22
  $region23: #{tpu_custom_call.1} parent=0 // pred_check_branch
    %28 = sbr.rel (%p26) target = $region25
  $region24: #{tpu_custom_call.1} parent=0 // pred_region
    %s29 = sshllo.u32 0, 1080
    loop: start=0, step=1, limit=1
    $region26: #{tpu_custom_call.1} parent=24 // loop_pre_header
      _
    $region27: #{tpu_custom_call.1} parent=24 // loop_header
      %s31 = sphi 0, %s35
      %p32 = scmp.ge.s32.totalorder %s31, 1
      %s36 = sphi %s4, %s4
      %s37 = sphi [#allocation5], [#allocation5]
    $region28: #{tpu_custom_call.1} parent=24 // loop_header_branch
      %34 = sbr.rel (%p32) target = $region32
    $region29: #{tpu_custom_call.1} parent=24 // loop_body
      %v38 = vld [vmem:[%s36] sm:%s29]
      %39 = vst [vmem:[%s37] sm:%s29] %v38
    $region30: #{tpu_custom_call.1} parent=24 // loop_footer
      %s35 = sadd.s32 1, %s31
    $region31: #{tpu_custom_call.1} parent=24 // loop_footer_branch
      %30 = sbr.rel target = $region27
    $region32: #{tpu_custom_call.1} parent=24 // loop_exit
      _
  $region25: #{tpu_custom_call.1} parent=0 // pred_fallthru
    _
  // Predicated region
  $region48: #{tpu_custom_call.1} parent=0 // pred_check
    _
  $region49: #{tpu_custom_call.1} parent=0 // pred_check_branch
    %329 = sbr.rel (0) target = $region51
  $region50: #{tpu_custom_call.1} parent=0 // pred_region
    %330 = vsyncadd [#allocation9], 17280
  $region51: #{tpu_custom_call.1} parent=0 // pred_fallthru
    _
  %s331 = scalar_lea.sflag [#allocation9], 1
  %p333 = scmp.lt.u32.totalorder 640, 8
  %p334 = pneg %p333
  // Predicated region
  $region52: #{tpu_custom_call.1} parent=0 // pred_check
    _
  $region53: #{tpu_custom_call.1} parent=0 // pred_check_branch
    %336 = sbr.rel (%p333) target = $region55
  $region54: #{tpu_custom_call.1} parent=0 // pred_region
    %s351 = sand.u32 640, 7
    %p352 = scmp.eq.s32.totalorder %s351, 0
    // Predicated region
    $region67: #{tpu_custom_call.1} parent=54 // pred_check
      %p353 = pneg %p352
    $region68: #{tpu_custom_call.1} parent=54 // pred_check_branch
      %355 = sbr.rel (%p353) target = $region70
    $region69: #{tpu_custom_call.1} parent=54 // pred_region
      loop: start=0, step=1, limit=1
      $region71: #{tpu_custom_call.1} parent=69 // loop_pre_header
        _
      $region72: #{tpu_custom_call.1} parent=69 // loop_header
        %s357 = sphi 0, %s361
        %p358 = scmp.ge.s32.totalorder %s357, 1
        %s362 = sphi %s5, %s5
        %s363 = sphi [#allocation6], [#allocation6]
      $region73: #{tpu_custom_call.1} parent=69 // loop_header_branch
        %360 = sbr.rel (%p358) target = $region77
      $region74: #{tpu_custom_call.1} parent=69 // loop_body
        %v364 = vld [vmem:[%s362] sm:$0xff]
        %365 = vst [vmem:[%s363] sm:$0xff] %v364
        %v366 = vld [vmem:[%s362 + $0x8] sm:$0xff]
        %367 = vst [vmem:[%s363 + $0x8] sm:$0xff] %v366
        %v368 = vld [vmem:[%s362 + $0x10] sm:$0xff]
        %369 = vst [vmem:[%s363 + $0x10] sm:$0xff] %v368
        %v370 = vld [vmem:[%s362 + $0x18] sm:$0xff]
        %371 = vst [vmem:[%s363 + $0x18] sm:$0xff] %v370
        %v372 = vld [vmem:[%s362 + $0x20] sm:$0xff]
        %373 = vst [vmem:[%s363 + $0x20] sm:$0xff] %v372
        %v374 = vld [vmem:[%s362 + $0x28] sm:$0xff]
        %375 = vst [vmem:[%s363 + $0x28] sm:$0xff] %v374
        %v376 = vld [vmem:[%s362 + $0x30] sm:$0xff]
        %377 = vst [vmem:[%s363 + $0x30] sm:$0xff] %v376
        %v378 = vld [vmem:[%s362 + $0x38] sm:$0xff]
        %379 = vst [vmem:[%s363 + $0x38] sm:$0xff] %v378
        %v380 = vld [vmem:[%s362 + $0x40] sm:$0xff]
        %381 = vst [vmem:[%s363 + $0x40] sm:$0xff] %v380
        %v382 = vld [vmem:[%s362 + $0x48] sm:$0xff]
        %383 = vst [vmem:[%s363 + $0x48] sm:$0xff] %v382
        %v384 = vld [vmem:[%s362 + $0x50] sm:$0xff]
        %385 = vst [vmem:[%s363 + $0x50] sm:$0xff] %v384
        %v386 = vld [vmem:[%s362 + $0x58] sm:$0xff]
        %387 = vst [vmem:[%s363 + $0x58] sm:$0xff] %v386
        %v388 = vld [vmem:[%s362 + $0x60] sm:$0xff]
        %389 = vst [vmem:[%s363 + $0x60] sm:$0xff] %v388
        %v390 = vld [vmem:[%s362 + $0x68] sm:$0xff]
        %391 = vst [vmem:[%s363 + $0x68] sm:$0xff] %v390
        %v392 = vld [vmem:[%s362 + $0x70] sm:$0xff]
        %393 = vst [vmem:[%s363 + $0x70] sm:$0xff] %v392
        %v394 = vld [vmem:[%s362 + $0x78] sm:$0xff]
        %395 = vst [vmem:[%s363 + $0x78] sm:$0xff] %v394
        %v396 = vld [vmem:[%s362 + $0x80] sm:$0xff]
        %397 = vst [vmem:[%s363 + $0x80] sm:$0xff] %v396
        %v398 = vld [vmem:[%s362 + $0x88] sm:$0xff]
        %399 = vst [vmem:[%s363 + $0x88] sm:$0xff] %v398
        %v400 = vld [vmem:[%s362 + $0x90] sm:$0xff]
        %401 = vst [vmem:[%s363 + $0x90] sm:$0xff] %v400
        %v402 = vld [vmem:[%s362 + $0x98] sm:$0xff]
        %403 = vst [vmem:[%s363 + $0x98] sm:$0xff] %v402
        %v404 = vld [vmem:[%s362 + $0xa0] sm:$0xff]
        %405 = vst [vmem:[%s363 + $0xa0] sm:$0xff] %v404
        %v406 = vld [vmem:[%s362 + $0xa8] sm:$0xff]
        %407 = vst [vmem:[%s363 + $0xa8] sm:$0xff] %v406
        %v408 = vld [vmem:[%s362 + $0xb0] sm:$0xff]
        %409 = vst [vmem:[%s363 + $0xb0] sm:$0xff] %v408
        %v410 = vld [vmem:[%s362 + $0xb8] sm:$0xff]
        %411 = vst [vmem:[%s363 + $0xb8] sm:$0xff] %v410
        %v412 = vld [vmem:[%s362 + $0xc0] sm:$0xff]
        %413 = vst [vmem:[%s363 + $0xc0] sm:$0xff] %v412
        %v414 = vld [vmem:[%s362 + $0xc8] sm:$0xff]
        %415 = vst [vmem:[%s363 + $0xc8] sm:$0xff] %v414
        %v416 = vld [vmem:[%s362 + $0xd0] sm:$0xff]
        %417 = vst [vmem:[%s363 + $0xd0] sm:$0xff] %v416
        %v418 = vld [vmem:[%s362 + $0xd8] sm:$0xff]
        %419 = vst [vmem:[%s363 + $0xd8] sm:$0xff] %v418
        %v420 = vld [vmem:[%s362 + $0xe0] sm:$0xff]
        %421 = vst [vmem:[%s363 + $0xe0] sm:$0xff] %v420
        %v422 = vld [vmem:[%s362 + $0xe8] sm:$0xff]
        %423 = vst [vmem:[%s363 + $0xe8] sm:$0xff] %v422
        %v424 = vld [vmem:[%s362 + $0xf0] sm:$0xff]
        %425 = vst [vmem:[%s363 + $0xf0] sm:$0xff] %v424
        %v426 = vld [vmem:[%s362 + $0xf8] sm:$0xff]
        %427 = vst [vmem:[%s363 + $0xf8] sm:$0xff] %v426
        %v428 = vld [vmem:[%s362 + $0x100] sm:$0xff]
        %429 = vst [vmem:[%s363 + $0x100] sm:$0xff] %v428
        %v430 = vld [vmem:[%s362 + $0x108] sm:$0xff]
        %431 = vst [vmem:[%s363 + $0x108] sm:$0xff] %v430
        %v432 = vld [vmem:[%s362 + $0x110] sm:$0xff]
        %433 = vst [vmem:[%s363 + $0x110] sm:$0xff] %v432
        %v434 = vld [vmem:[%s362 + $0x118] sm:$0xff]
        %435 = vst [vmem:[%s363 + $0x118] sm:$0xff] %v434
        %v436 = vld [vmem:[%s362 + $0x120] sm:$0xff]
        %437 = vst [vmem:[%s363 + $0x120] sm:$0xff] %v436
        %v438 = vld [vmem:[%s362 + $0x128] sm:$0xff]
        %439 = vst [vmem:[%s363 + $0x128] sm:$0xff] %v438
        %v440 = vld [vmem:[%s362 + $0x130] sm:$0xff]
        %441 = vst [vmem:[%s363 + $0x130] sm:$0xff] %v440
        %v442 = vld [vmem:[%s362 + $0x138] sm:$0xff]
        %443 = vst [vmem:[%s363 + $0x138] sm:$0xff] %v442
        %v444 = vld [vmem:[%s362 + $0x140] sm:$0xff]
        %445 = vst [vmem:[%s363 + $0x140] sm:$0xff] %v444
        %v446 = vld [vmem:[%s362 + $0x148] sm:$0xff]
        %447 = vst [vmem:[%s363 + $0x148] sm:$0xff] %v446
        %v448 = vld [vmem:[%s362 + $0x150] sm:$0xff]
        %449 = vst [vmem:[%s363 + $0x150] sm:$0xff] %v448
        %v450 = vld [vmem:[%s362 + $0x158] sm:$0xff]
        %451 = vst [vmem:[%s363 + $0x158] sm:$0xff] %v450
        %v452 = vld [vmem:[%s362 + $0x160] sm:$0xff]
        %453 = vst [vmem:[%s363 + $0x160] sm:$0xff] %v452
        %v454 = vld [vmem:[%s362 + $0x168] sm:$0xff]
        %455 = vst [vmem:[%s363 + $0x168] sm:$0xff] %v454
        %v456 = vld [vmem:[%s362 + $0x170] sm:$0xff]
        %457 = vst [vmem:[%s363 + $0x170] sm:$0xff] %v456
        %v458 = vld [vmem:[%s362 + $0x178] sm:$0xff]
        %459 = vst [vmem:[%s363 + $0x178] sm:$0xff] %v458
        %v460 = vld [vmem:[%s362 + $0x180] sm:$0xff]
        %461 = vst [vmem:[%s363 + $0x180] sm:$0xff] %v460
        %v462 = vld [vmem:[%s362 + $0x188] sm:$0xff]
        %463 = vst [vmem:[%s363 + $0x188] sm:$0xff] %v462
        %v464 = vld [vmem:[%s362 + $0x190] sm:$0xff]
        %465 = vst [vmem:[%s363 + $0x190] sm:$0xff] %v464
        %v466 = vld [vmem:[%s362 + $0x198] sm:$0xff]
        %467 = vst [vmem:[%s363 + $0x198] sm:$0xff] %v466
        %v468 = vld [vmem:[%s362 + $0x1a0] sm:$0xff]
        %469 = vst [vmem:[%s363 + $0x1a0] sm:$0xff] %v468
        %v470 = vld [vmem:[%s362 + $0x1a8] sm:$0xff]
        %471 = vst [vmem:[%s363 + $0x1a8] sm:$0xff] %v470
        %v472 = vld [vmem:[%s362 + $0x1b0] sm:$0xff]
        %473 = vst [vmem:[%s363 + $0x1b0] sm:$0xff] %v472
        %v474 = vld [vmem:[%s362 + $0x1b8] sm:$0xff]
        %475 = vst [vmem:[%s363 + $0x1b8] sm:$0xff] %v474
        %v476 = vld [vmem:[%s362 + $0x1c0] sm:$0xff]
        %477 = vst [vmem:[%s363 + $0x1c0] sm:$0xff] %v476
        %v478 = vld [vmem:[%s362 + $0x1c8] sm:$0xff]
        %479 = vst [vmem:[%s363 + $0x1c8] sm:$0xff] %v478
        %v480 = vld [vmem:[%s362 + $0x1d0] sm:$0xff]
        %481 = vst [vmem:[%s363 + $0x1d0] sm:$0xff] %v480
        %v482 = vld [vmem:[%s362 + $0x1d8] sm:$0xff]
        %483 = vst [vmem:[%s363 + $0x1d8] sm:$0xff] %v482
        %v484 = vld [vmem:[%s362 + $0x1e0] sm:$0xff]
        %485 = vst [vmem:[%s363 + $0x1e0] sm:$0xff] %v484
        %v486 = vld [vmem:[%s362 + $0x1e8] sm:$0xff]
        %487 = vst [vmem:[%s363 + $0x1e8] sm:$0xff] %v486
        %v488 = vld [vmem:[%s362 + $0x1f0] sm:$0xff]
        %489 = vst [vmem:[%s363 + $0x1f0] sm:$0xff] %v488
        %v490 = vld [vmem:[%s362 + $0x1f8] sm:$0xff]
        %491 = vst [vmem:[%s363 + $0x1f8] sm:$0xff] %v490
        %v492 = vld [vmem:[%s362 + $0x200] sm:$0xff]
        %493 = vst [vmem:[%s363 + $0x200] sm:$0xff] %v492
        %v494 = vld [vmem:[%s362 + $0x208] sm:$0xff]
        %495 = vst [vmem:[%s363 + $0x208] sm:$0xff] %v494
        %v496 = vld [vmem:[%s362 + $0x210] sm:$0xff]
        %497 = vst [vmem:[%s363 + $0x210] sm:$0xff] %v496
        %v498 = vld [vmem:[%s362 + $0x218] sm:$0xff]
        %499 = vst [vmem:[%s363 + $0x218] sm:$0xff] %v498
        %v500 = vld [vmem:[%s362 + $0x220] sm:$0xff]
        %501 = vst [vmem:[%s363 + $0x220] sm:$0xff] %v500
        %v502 = vld [vmem:[%s362 + $0x228] sm:$0xff]
        %503 = vst [vmem:[%s363 + $0x228] sm:$0xff] %v502
        %v504 = vld [vmem:[%s362 + $0x230] sm:$0xff]
        %505 = vst [vmem:[%s363 + $0x230] sm:$0xff] %v504
        %v506 = vld [vmem:[%s362 + $0x238] sm:$0xff]
        %507 = vst [vmem:[%s363 + $0x238] sm:$0xff] %v506
        %v508 = vld [vmem:[%s362 + $0x240] sm:$0xff]
        %509 = vst [vmem:[%s363 + $0x240] sm:$0xff] %v508
        %v510 = vld [vmem:[%s362 + $0x248] sm:$0xff]
        %511 = vst [vmem:[%s363 + $0x248] sm:$0xff] %v510
        %v512 = vld [vmem:[%s362 + $0x250] sm:$0xff]
        %513 = vst [vmem:[%s363 + $0x250] sm:$0xff] %v512
        %v514 = vld [vmem:[%s362 + $0x258] sm:$0xff]
        %515 = vst [vmem:[%s363 + $0x258] sm:$0xff] %v514
        %v516 = vld [vmem:[%s362 + $0x260] sm:$0xff]
        %517 = vst [vmem:[%s363 + $0x260] sm:$0xff] %v516
        %v518 = vld [vmem:[%s362 + $0x268] sm:$0xff]
        %519 = vst [vmem:[%s363 + $0x268] sm:$0xff] %v518
        %v520 = vld [vmem:[%s362 + $0x270] sm:$0xff]
        %521 = vst [vmem:[%s363 + $0x270] sm:$0xff] %v520
        %v522 = vld [vmem:[%s362 + $0x278] sm:$0xff]
        %523 = vst [vmem:[%s363 + $0x278] sm:$0xff] %v522
      $region75: #{tpu_custom_call.1} parent=69 // loop_footer
        %s361 = sadd.s32 1, %s357
      $region76: #{tpu_custom_call.1} parent=69 // loop_footer_branch
        %356 = sbr.rel target = $region72
      $region77: #{tpu_custom_call.1} parent=69 // loop_exit
        _
    $region70: #{tpu_custom_call.1} parent=54 // pred_fallthru
      _
    %p524 = pneg %p352
    // Predicated region
    $region78: #{tpu_custom_call.1} parent=54 // pred_check
      _
    $region79: #{tpu_custom_call.1} parent=54 // pred_check_branch
      %526 = sbr.rel (%p352) target = $region81
    $region80: #{tpu_custom_call.1} parent=54 // pred_region
      %s527 = sand.u32 640, 7
    $region81: #{tpu_custom_call.1} parent=54 // pred_fallthru
      _
  $region55: #{tpu_custom_call.1} parent=0 // pred_fallthru
    _
  // Predicated region
  $region56: #{tpu_custom_call.1} parent=0 // pred_check
    %p337 = pneg %p333
  $region57: #{tpu_custom_call.1} parent=0 // pred_check_branch
    %339 = sbr.rel (%p337) target = $region59
  $region58: #{tpu_custom_call.1} parent=0 // pred_region
    %s340 = sshllo.u32 0, 640
    loop: start=0, step=1, limit=1
    $region60: #{tpu_custom_call.1} parent=58 // loop_pre_header
      _
    $region61: #{tpu_custom_call.1} parent=58 // loop_header
      %s342 = sphi 0, %s346
      %p343 = scmp.ge.s32.totalorder %s342, 1
      %s347 = sphi %s5, %s5
      %s348 = sphi [#allocation6], [#allocation6]
    $region62: #{tpu_custom_call.1} parent=58 // loop_header_branch
      %345 = sbr.rel (%p343) target = $region66
    $region63: #{tpu_custom_call.1} parent=58 // loop_body
      %v349 = vld [vmem:[%s347] sm:%s340]
      %350 = vst [vmem:[%s348] sm:%s340] %v349
    $region64: #{tpu_custom_call.1} parent=58 // loop_footer
      %s346 = sadd.s32 1, %s342
    $region65: #{tpu_custom_call.1} parent=58 // loop_footer_branch
      %341 = sbr.rel target = $region61
    $region66: #{tpu_custom_call.1} parent=58 // loop_exit
      _
  $region59: #{tpu_custom_call.1} parent=0 // pred_fallthru
    _
  // Predicated region
  $region82: #{tpu_custom_call.1} parent=0 // pred_check
    _
  $region83: #{tpu_custom_call.1} parent=0 // pred_check_branch
    %530 = sbr.rel (0) target = $region85
  $region84: #{tpu_custom_call.1} parent=0 // pred_region
    %531 = vsyncadd %s331, 10240
  $region85: #{tpu_custom_call.1} parent=0 // pred_fallthru
    _
  %s532 = scalar_lea.sflag [#allocation9], 2
  %p534 = scmp.lt.u32.totalorder 800, 8
  %p535 = pneg %p534
  // Predicated region
  $region86: #{tpu_custom_call.1} parent=0 // pred_check
    _
  $region87: #{tpu_custom_call.1} parent=0 // pred_check_branch
    %537 = sbr.rel (%p534) target = $region89
  $region88: #{tpu_custom_call.1} parent=0 // pred_region
    %s552 = sand.u32 800, 7
    %p553 = scmp.eq.s32.totalorder %s552, 0
    // Predicated region
    $region101: #{tpu_custom_call.1} parent=88 // pred_check
      %p554 = pneg %p553
    $region102: #{tpu_custom_call.1} parent=88 // pred_check_branch
      %556 = sbr.rel (%p554) target = $region104
    $region103: #{tpu_custom_call.1} parent=88 // pred_region
      loop: start=0, step=1, limit=1
      $region105: #{tpu_custom_call.1} parent=103 // loop_pre_header
        _
      $region106: #{tpu_custom_call.1} parent=103 // loop_header
        %s558 = sphi 0, %s562
        %p559 = scmp.ge.s32.totalorder %s558, 1
        %s563 = sphi %s6, %s6
        %s564 = sphi [#allocation7], [#allocation7]
      $region107: #{tpu_custom_call.1} parent=103 // loop_header_branch
        %561 = sbr.rel (%p559) target = $region111
      $region108: #{tpu_custom_call.1} parent=103 // loop_body
        %v565 = vld [vmem:[%s563] sm:$0xff]
        %566 = vst [vmem:[%s564] sm:$0xff] %v565
        %v567 = vld [vmem:[%s563 + $0x8] sm:$0xff]
        %568 = vst [vmem:[%s564 + $0x8] sm:$0xff] %v567
        %v569 = vld [vmem:[%s563 + $0x10] sm:$0xff]
        %570 = vst [vmem:[%s564 + $0x10] sm:$0xff] %v569
        %v571 = vld [vmem:[%s563 + $0x18] sm:$0xff]
        %572 = vst [vmem:[%s564 + $0x18] sm:$0xff] %v571
        %v573 = vld [vmem:[%s563 + $0x20] sm:$0xff]
        %574 = vst [vmem:[%s564 + $0x20] sm:$0xff] %v573
        %v575 = vld [vmem:[%s563 + $0x28] sm:$0xff]
        %576 = vst [vmem:[%s564 + $0x28] sm:$0xff] %v575
        %v577 = vld [vmem:[%s563 + $0x30] sm:$0xff]
        %578 = vst [vmem:[%s564 + $0x30] sm:$0xff] %v577
        %v579 = vld [vmem:[%s563 + $0x38] sm:$0xff]
        %580 = vst [vmem:[%s564 + $0x38] sm:$0xff] %v579
        %v581 = vld [vmem:[%s563 + $0x40] sm:$0xff]
        %582 = vst [vmem:[%s564 + $0x40] sm:$0xff] %v581
        %v583 = vld [vmem:[%s563 + $0x48] sm:$0xff]
        %584 = vst [vmem:[%s564 + $0x48] sm:$0xff] %v583
        %v585 = vld [vmem:[%s563 + $0x50] sm:$0xff]
        %586 = vst [vmem:[%s564 + $0x50] sm:$0xff] %v585
        %v587 = vld [vmem:[%s563 + $0x58] sm:$0xff]
        %588 = vst [vmem:[%s564 + $0x58] sm:$0xff] %v587
        %v589 = vld [vmem:[%s563 + $0x60] sm:$0xff]
        %590 = vst [vmem:[%s564 + $0x60] sm:$0xff] %v589
        %v591 = vld [vmem:[%s563 + $0x68] sm:$0xff]
        %592 = vst [vmem:[%s564 + $0x68] sm:$0xff] %v591
        %v593 = vld [vmem:[%s563 + $0x70] sm:$0xff]
        %594 = vst [vmem:[%s564 + $0x70] sm:$0xff] %v593
        %v595 = vld [vmem:[%s563 + $0x78] sm:$0xff]
        %596 = vst [vmem:[%s564 + $0x78] sm:$0xff] %v595
        %v597 = vld [vmem:[%s563 + $0x80] sm:$0xff]
        %598 = vst [vmem:[%s564 + $0x80] sm:$0xff] %v597
        %v599 = vld [vmem:[%s563 + $0x88] sm:$0xff]
        %600 = vst [vmem:[%s564 + $0x88] sm:$0xff] %v599
        %v601 = vld [vmem:[%s563 + $0x90] sm:$0xff]
        %602 = vst [vmem:[%s564 + $0x90] sm:$0xff] %v601
        %v603 = vld [vmem:[%s563 + $0x98] sm:$0xff]
        %604 = vst [vmem:[%s564 + $0x98] sm:$0xff] %v603
        %v605 = vld [vmem:[%s563 + $0xa0] sm:$0xff]
        %606 = vst [vmem:[%s564 + $0xa0] sm:$0xff] %v605
        %v607 = vld [vmem:[%s563 + $0xa8] sm:$0xff]
        %608 = vst [vmem:[%s564 + $0xa8] sm:$0xff] %v607
        %v609 = vld [vmem:[%s563 + $0xb0] sm:$0xff]
        %610 = vst [vmem:[%s564 + $0xb0] sm:$0xff] %v609
        %v611 = vld [vmem:[%s563 + $0xb8] sm:$0xff]
        %612 = vst [vmem:[%s564 + $0xb8] sm:$0xff] %v611
        %v613 = vld [vmem:[%s563 + $0xc0] sm:$0xff]
        %614 = vst [vmem:[%s564 + $0xc0] sm:$0xff] %v613
        %v615 = vld [vmem:[%s563 + $0xc8] sm:$0xff]
        %616 = vst [vmem:[%s564 + $0xc8] sm:$0xff] %v615
        %v617 = vld [vmem:[%s563 + $0xd0] sm:$0xff]
        %618 = vst [vmem:[%s564 + $0xd0] sm:$0xff] %v617
        %v619 = vld [vmem:[%s563 + $0xd8] sm:$0xff]
        %620 = vst [vmem:[%s564 + $0xd8] sm:$0xff] %v619
        %v621 = vld [vmem:[%s563 + $0xe0] sm:$0xff]
        %622 = vst [vmem:[%s564 + $0xe0] sm:$0xff] %v621
        %v623 = vld [vmem:[%s563 + $0xe8] sm:$0xff]
        %624 = vst [vmem:[%s564 + $0xe8] sm:$0xff] %v623
        %v625 = vld [vmem:[%s563 + $0xf0] sm:$0xff]
        %626 = vst [vmem:[%s564 + $0xf0] sm:$0xff] %v625
        %v627 = vld [vmem:[%s563 + $0xf8] sm:$0xff]
        %628 = vst [vmem:[%s564 + $0xf8] sm:$0xff] %v627
        %v629 = vld [vmem:[%s563 + $0x100] sm:$0xff]
        %630 = vst [vmem:[%s564 + $0x100] sm:$0xff] %v629
        %v631 = vld [vmem:[%s563 + $0x108] sm:$0xff]
        %632 = vst [vmem:[%s564 + $0x108] sm:$0xff] %v631
        %v633 = vld [vmem:[%s563 + $0x110] sm:$0xff]
        %634 = vst [vmem:[%s564 + $0x110] sm:$0xff] %v633
        %v635 = vld [vmem:[%s563 + $0x118] sm:$0xff]
        %636 = vst [vmem:[%s564 + $0x118] sm:$0xff] %v635
        %v637 = vld [vmem:[%s563 + $0x120] sm:$0xff]
        %638 = vst [vmem:[%s564 + $0x120] sm:$0xff] %v637
        %v639 = vld [vmem:[%s563 + $0x128] sm:$0xff]
        %640 = vst [vmem:[%s564 + $0x128] sm:$0xff] %v639
        %v641 = vld [vmem:[%s563 + $0x130] sm:$0xff]
        %642 = vst [vmem:[%s564 + $0x130] sm:$0xff] %v641
        %v643 = vld [vmem:[%s563 + $0x138] sm:$0xff]
        %644 = vst [vmem:[%s564 + $0x138] sm:$0xff] %v643
        %v645 = vld [vmem:[%s563 + $0x140] sm:$0xff]
        %646 = vst [vmem:[%s564 + $0x140] sm:$0xff] %v645
        %v647 = vld [vmem:[%s563 + $0x148] sm:$0xff]
        %648 = vst [vmem:[%s564 + $0x148] sm:$0xff] %v647
        %v649 = vld [vmem:[%s563 + $0x150] sm:$0xff]
        %650 = vst [vmem:[%s564 + $0x150] sm:$0xff] %v649
        %v651 = vld [vmem:[%s563 + $0x158] sm:$0xff]
        %652 = vst [vmem:[%s564 + $0x158] sm:$0xff] %v651
        %v653 = vld [vmem:[%s563 + $0x160] sm:$0xff]
        %654 = vst [vmem:[%s564 + $0x160] sm:$0xff] %v653
        %v655 = vld [vmem:[%s563 + $0x168] sm:$0xff]
        %656 = vst [vmem:[%s564 + $0x168] sm:$0xff] %v655
        %v657 = vld [vmem:[%s563 + $0x170] sm:$0xff]
        %658 = vst [vmem:[%s564 + $0x170] sm:$0xff] %v657
        %v659 = vld [vmem:[%s563 + $0x178] sm:$0xff]
        %660 = vst [vmem:[%s564 + $0x178] sm:$0xff] %v659
        %v661 = vld [vmem:[%s563 + $0x180] sm:$0xff]
        %662 = vst [vmem:[%s564 + $0x180] sm:$0xff] %v661
        %v663 = vld [vmem:[%s563 + $0x188] sm:$0xff]
        %664 = vst [vmem:[%s564 + $0x188] sm:$0xff] %v663
        %v665 = vld [vmem:[%s563 + $0x190] sm:$0xff]
        %666 = vst [vmem:[%s564 + $0x190] sm:$0xff] %v665
        %v667 = vld [vmem:[%s563 + $0x198] sm:$0xff]
        %668 = vst [vmem:[%s564 + $0x198] sm:$0xff] %v667
        %v669 = vld [vmem:[%s563 + $0x1a0] sm:$0xff]
        %670 = vst [vmem:[%s564 + $0x1a0] sm:$0xff] %v669
        %v671 = vld [vmem:[%s563 + $0x1a8] sm:$0xff]
        %672 = vst [vmem:[%s564 + $0x1a8] sm:$0xff] %v671
        %v673 = vld [vmem:[%s563 + $0x1b0] sm:$0xff]
        %674 = vst [vmem:[%s564 + $0x1b0] sm:$0xff] %v673
        %v675 = vld [vmem:[%s563 + $0x1b8] sm:$0xff]
        %676 = vst [vmem:[%s564 + $0x1b8] sm:$0xff] %v675
        %v677 = vld [vmem:[%s563 + $0x1c0] sm:$0xff]
        %678 = vst [vmem:[%s564 + $0x1c0] sm:$0xff] %v677
        %v679 = vld [vmem:[%s563 + $0x1c8] sm:$0xff]
        %680 = vst [vmem:[%s564 + $0x1c8] sm:$0xff] %v679
        %v681 = vld [vmem:[%s563 + $0x1d0] sm:$0xff]
        %682 = vst [vmem:[%s564 + $0x1d0] sm:$0xff] %v681
        %v683 = vld [vmem:[%s563 + $0x1d8] sm:$0xff]
        %684 = vst [vmem:[%s564 + $0x1d8] sm:$0xff] %v683
        %v685 = vld [vmem:[%s563 + $0x1e0] sm:$0xff]
        %686 = vst [vmem:[%s564 + $0x1e0] sm:$0xff] %v685
        %v687 = vld [vmem:[%s563 + $0x1e8] sm:$0xff]
        %688 = vst [vmem:[%s564 + $0x1e8] sm:$0xff] %v687
        %v689 = vld [vmem:[%s563 + $0x1f0] sm:$0xff]
        %690 = vst [vmem:[%s564 + $0x1f0] sm:$0xff] %v689
        %v691 = vld [vmem:[%s563 + $0x1f8] sm:$0xff]
        %692 = vst [vmem:[%s564 + $0x1f8] sm:$0xff] %v691
        %v693 = vld [vmem:[%s563 + $0x200] sm:$0xff]
        %694 = vst [vmem:[%s564 + $0x200] sm:$0xff] %v693
        %v695 = vld [vmem:[%s563 + $0x208] sm:$0xff]
        %696 = vst [vmem:[%s564 + $0x208] sm:$0xff] %v695
        %v697 = vld [vmem:[%s563 + $0x210] sm:$0xff]
        %698 = vst [vmem:[%s564 + $0x210] sm:$0xff] %v697
        %v699 = vld [vmem:[%s563 + $0x218] sm:$0xff]
        %700 = vst [vmem:[%s564 + $0x218] sm:$0xff] %v699
        %v701 = vld [vmem:[%s563 + $0x220] sm:$0xff]
        %702 = vst [vmem:[%s564 + $0x220] sm:$0xff] %v701
        %v703 = vld [vmem:[%s563 + $0x228] sm:$0xff]
        %704 = vst [vmem:[%s564 + $0x228] sm:$0xff] %v703
        %v705 = vld [vmem:[%s563 + $0x230] sm:$0xff]
        %706 = vst [vmem:[%s564 + $0x230] sm:$0xff] %v705
        %v707 = vld [vmem:[%s563 + $0x238] sm:$0xff]
        %708 = vst [vmem:[%s564 + $0x238] sm:$0xff] %v707
        %v709 = vld [vmem:[%s563 + $0x240] sm:$0xff]
        %710 = vst [vmem:[%s564 + $0x240] sm:$0xff] %v709
        %v711 = vld [vmem:[%s563 + $0x248] sm:$0xff]
        %712 = vst [vmem:[%s564 + $0x248] sm:$0xff] %v711
        %v713 = vld [vmem:[%s563 + $0x250] sm:$0xff]
        %714 = vst [vmem:[%s564 + $0x250] sm:$0xff] %v713
        %v715 = vld [vmem:[%s563 + $0x258] sm:$0xff]
        %716 = vst [vmem:[%s564 + $0x258] sm:$0xff] %v715
        %v717 = vld [vmem:[%s563 + $0x260] sm:$0xff]
        %718 = vst [vmem:[%s564 + $0x260] sm:$0xff] %v717
        %v719 = vld [vmem:[%s563 + $0x268] sm:$0xff]
        %720 = vst [vmem:[%s564 + $0x268] sm:$0xff] %v719
        %v721 = vld [vmem:[%s563 + $0x270] sm:$0xff]
        %722 = vst [vmem:[%s564 + $0x270] sm:$0xff] %v721
        %v723 = vld [vmem:[%s563 + $0x278] sm:$0xff]
        %724 = vst [vmem:[%s564 + $0x278] sm:$0xff] %v723
        %v725 = vld [vmem:[%s563 + $0x280] sm:$0xff]
        %726 = vst [vmem:[%s564 + $0x280] sm:$0xff] %v725
        %v727 = vld [vmem:[%s563 + $0x288] sm:$0xff]
        %728 = vst [vmem:[%s564 + $0x288] sm:$0xff] %v727
        %v729 = vld [vmem:[%s563 + $0x290] sm:$0xff]
        %730 = vst [vmem:[%s564 + $0x290] sm:$0xff] %v729
        %v731 = vld [vmem:[%s563 + $0x298] sm:$0xff]
        %732 = vst [vmem:[%s564 + $0x298] sm:$0xff] %v731
        %v733 = vld [vmem:[%s563 + $0x2a0] sm:$0xff]
        %734 = vst [vmem:[%s564 + $0x2a0] sm:$0xff] %v733
        %v735 = vld [vmem:[%s563 + $0x2a8] sm:$0xff]
        %736 = vst [vmem:[%s564 + $0x2a8] sm:$0xff] %v735
        %v737 = vld [vmem:[%s563 + $0x2b0] sm:$0xff]
        %738 = vst [vmem:[%s564 + $0x2b0] sm:$0xff] %v737
        %v739 = vld [vmem:[%s563 + $0x2b8] sm:$0xff]
        %740 = vst [vmem:[%s564 + $0x2b8] sm:$0xff] %v739
        %v741 = vld [vmem:[%s563 + $0x2c0] sm:$0xff]
        %742 = vst [vmem:[%s564 + $0x2c0] sm:$0xff] %v741
        %v743 = vld [vmem:[%s563 + $0x2c8] sm:$0xff]
        %744 = vst [vmem:[%s564 + $0x2c8] sm:$0xff] %v743
        %v745 = vld [vmem:[%s563 + $0x2d0] sm:$0xff]
        %746 = vst [vmem:[%s564 + $0x2d0] sm:$0xff] %v745
        %v747 = vld [vmem:[%s563 + $0x2d8] sm:$0xff]
        %748 = vst [vmem:[%s564 + $0x2d8] sm:$0xff] %v747
        %v749 = vld [vmem:[%s563 + $0x2e0] sm:$0xff]
        %750 = vst [vmem:[%s564 + $0x2e0] sm:$0xff] %v749
        %v751 = vld [vmem:[%s563 + $0x2e8] sm:$0xff]
        %752 = vst [vmem:[%s564 + $0x2e8] sm:$0xff] %v751
        %v753 = vld [vmem:[%s563 + $0x2f0] sm:$0xff]
        %754 = vst [vmem:[%s564 + $0x2f0] sm:$0xff] %v753
        %v755 = vld [vmem:[%s563 + $0x2f8] sm:$0xff]
        %756 = vst [vmem:[%s564 + $0x2f8] sm:$0xff] %v755
        %v757 = vld [vmem:[%s563 + $0x300] sm:$0xff]
        %758 = vst [vmem:[%s564 + $0x300] sm:$0xff] %v757
        %v759 = vld [vmem:[%s563 + $0x308] sm:$0xff]
        %760 = vst [vmem:[%s564 + $0x308] sm:$0xff] %v759
        %v761 = vld [vmem:[%s563 + $0x310] sm:$0xff]
        %762 = vst [vmem:[%s564 + $0x310] sm:$0xff] %v761
        %v763 = vld [vmem:[%s563 + $0x318] sm:$0xff]
        %764 = vst [vmem:[%s564 + $0x318] sm:$0xff] %v763
      $region109: #{tpu_custom_call.1} parent=103 // loop_footer
        %s562 = sadd.s32 1, %s558
      $region110: #{tpu_custom_call.1} parent=103 // loop_footer_branch
        %557 = sbr.rel target = $region106
      $region111: #{tpu_custom_call.1} parent=103 // loop_exit
        _
    $region104: #{tpu_custom_call.1} parent=88 // pred_fallthru
      _
    %p765 = pneg %p553
    // Predicated region
    $region112: #{tpu_custom_call.1} parent=88 // pred_check
      _
    $region113: #{tpu_custom_call.1} parent=88 // pred_check_branch
      %767 = sbr.rel (%p553) target = $region115
    $region114: #{tpu_custom_call.1} parent=88 // pred_region
      %s768 = sand.u32 800, 7
    $region115: #{tpu_custom_call.1} parent=88 // pred_fallthru
      _
  $region89: #{tpu_custom_call.1} parent=0 // pred_fallthru
    _
  // Predicated region
  $region90: #{tpu_custom_call.1} parent=0 // pred_check
    %p538 = pneg %p534
  $region91: #{tpu_custom_call.1} parent=0 // pred_check_branch
    %540 = sbr.rel (%p538) target = $region93
  $region92: #{tpu_custom_call.1} parent=0 // pred_region
    %s541 = sshllo.u32 0, 800
    loop: start=0, step=1, limit=1
    $region94: #{tpu_custom_call.1} parent=92 // loop_pre_header
      _
    $region95: #{tpu_custom_call.1} parent=92 // loop_header
      %s543 = sphi 0, %s547
      %p544 = scmp.ge.s32.totalorder %s543, 1
      %s548 = sphi %s6, %s6
      %s549 = sphi [#allocation7], [#allocation7]
    $region96: #{tpu_custom_call.1} parent=92 // loop_header_branch
      %546 = sbr.rel (%p544) target = $region100
    $region97: #{tpu_custom_call.1} parent=92 // loop_body
      %v550 = vld [vmem:[%s548] sm:%s541]
      %551 = vst [vmem:[%s549] sm:%s541] %v550
    $region98: #{tpu_custom_call.1} parent=92 // loop_footer
      %s547 = sadd.s32 1, %s543
    $region99: #{tpu_custom_call.1} parent=92 // loop_footer_branch
      %542 = sbr.rel target = $region95
    $region100: #{tpu_custom_call.1} parent=92 // loop_exit
      _
  $region93: #{tpu_custom_call.1} parent=0 // pred_fallthru
    _
  // Predicated region
  $region116: #{tpu_custom_call.1} parent=0 // pred_check
    _
  $region117: #{tpu_custom_call.1} parent=0 // pred_check_branch
    %771 = sbr.rel (0) target = $region119
  $region118: #{tpu_custom_call.1} parent=0 // pred_region
    %772 = vsyncadd %s532, 12800
  $region119: #{tpu_custom_call.1} parent=0 // pred_fallthru
    _
  %s773 = scalar_lea.sflag [#allocation9], 3
  %p775 = scmp.lt.u32.totalorder 400, 8
  %p776 = pneg %p775
  // Predicated region
  $region120: #{tpu_custom_call.1} parent=0 // pred_check
    _
  $region121: #{tpu_custom_call.1} parent=0 // pred_check_branch
    %778 = sbr.rel (%p775) target = $region123
  $region122: #{tpu_custom_call.1} parent=0 // pred_region
    %s793 = sand.u32 400, 7
    %p794 = scmp.eq.s32.totalorder %s793, 0
    // Predicated region
    $region135: #{tpu_custom_call.1} parent=122 // pred_check
      %p795 = pneg %p794
    $region136: #{tpu_custom_call.1} parent=122 // pred_check_branch
      %797 = sbr.rel (%p795) target = $region138
    $region137: #{tpu_custom_call.1} parent=122 // pred_region
      loop: start=0, step=1, limit=1
      $region139: #{tpu_custom_call.1} parent=137 // loop_pre_header
        _
      $region140: #{tpu_custom_call.1} parent=137 // loop_header
        %s799 = sphi 0, %s803
        %p800 = scmp.ge.s32.totalorder %s799, 1
        %s804 = sphi %s7, %s7
        %s805 = sphi [#allocation8], [#allocation8]
      $region141: #{tpu_custom_call.1} parent=137 // loop_header_branch
        %802 = sbr.rel (%p800) target = $region145
      $region142: #{tpu_custom_call.1} parent=137 // loop_body
        %v806 = vld [vmem:[%s804] sm:$0xff]
        %807 = vst [vmem:[%s805] sm:$0xff] %v806
        %v808 = vld [vmem:[%s804 + $0x8] sm:$0xff]
        %809 = vst [vmem:[%s805 + $0x8] sm:$0xff] %v808
        %v810 = vld [vmem:[%s804 + $0x10] sm:$0xff]
        %811 = vst [vmem:[%s805 + $0x10] sm:$0xff] %v810
        %v812 = vld [vmem:[%s804 + $0x18] sm:$0xff]
        %813 = vst [vmem:[%s805 + $0x18] sm:$0xff] %v812
        %v814 = vld [vmem:[%s804 + $0x20] sm:$0xff]
        %815 = vst [vmem:[%s805 + $0x20] sm:$0xff] %v814
        %v816 = vld [vmem:[%s804 + $0x28] sm:$0xff]
        %817 = vst [vmem:[%s805 + $0x28] sm:$0xff] %v816
        %v818 = vld [vmem:[%s804 + $0x30] sm:$0xff]
        %819 = vst [vmem:[%s805 + $0x30] sm:$0xff] %v818
        %v820 = vld [vmem:[%s804 + $0x38] sm:$0xff]
        %821 = vst [vmem:[%s805 + $0x38] sm:$0xff] %v820
        %v822 = vld [vmem:[%s804 + $0x40] sm:$0xff]
        %823 = vst [vmem:[%s805 + $0x40] sm:$0xff] %v822
        %v824 = vld [vmem:[%s804 + $0x48] sm:$0xff]
        %825 = vst [vmem:[%s805 + $0x48] sm:$0xff] %v824
        %v826 = vld [vmem:[%s804 + $0x50] sm:$0xff]
        %827 = vst [vmem:[%s805 + $0x50] sm:$0xff] %v826
        %v828 = vld [vmem:[%s804 + $0x58] sm:$0xff]
        %829 = vst [vmem:[%s805 + $0x58] sm:$0xff] %v828
        %v830 = vld [vmem:[%s804 + $0x60] sm:$0xff]
        %831 = vst [vmem:[%s805 + $0x60] sm:$0xff] %v830
        %v832 = vld [vmem:[%s804 + $0x68] sm:$0xff]
        %833 = vst [vmem:[%s805 + $0x68] sm:$0xff] %v832
        %v834 = vld [vmem:[%s804 + $0x70] sm:$0xff]
        %835 = vst [vmem:[%s805 + $0x70] sm:$0xff] %v834
        %v836 = vld [vmem:[%s804 + $0x78] sm:$0xff]
        %837 = vst [vmem:[%s805 + $0x78] sm:$0xff] %v836
        %v838 = vld [vmem:[%s804 + $0x80] sm:$0xff]
        %839 = vst [vmem:[%s805 + $0x80] sm:$0xff] %v838
        %v840 = vld [vmem:[%s804 + $0x88] sm:$0xff]
        %841 = vst [vmem:[%s805 + $0x88] sm:$0xff] %v840
        %v842 = vld [vmem:[%s804 + $0x90] sm:$0xff]
        %843 = vst [vmem:[%s805 + $0x90] sm:$0xff] %v842
        %v844 = vld [vmem:[%s804 + $0x98] sm:$0xff]
        %845 = vst [vmem:[%s805 + $0x98] sm:$0xff] %v844
        %v846 = vld [vmem:[%s804 + $0xa0] sm:$0xff]
        %847 = vst [vmem:[%s805 + $0xa0] sm:$0xff] %v846
        %v848 = vld [vmem:[%s804 + $0xa8] sm:$0xff]
        %849 = vst [vmem:[%s805 + $0xa8] sm:$0xff] %v848
        %v850 = vld [vmem:[%s804 + $0xb0] sm:$0xff]
        %851 = vst [vmem:[%s805 + $0xb0] sm:$0xff] %v850
        %v852 = vld [vmem:[%s804 + $0xb8] sm:$0xff]
        %853 = vst [vmem:[%s805 + $0xb8] sm:$0xff] %v852
        %v854 = vld [vmem:[%s804 + $0xc0] sm:$0xff]
        %855 = vst [vmem:[%s805 + $0xc0] sm:$0xff] %v854
        %v856 = vld [vmem:[%s804 + $0xc8] sm:$0xff]
        %857 = vst [vmem:[%s805 + $0xc8] sm:$0xff] %v856
        %v858 = vld [vmem:[%s804 + $0xd0] sm:$0xff]
        %859 = vst [vmem:[%s805 + $0xd0] sm:$0xff] %v858
        %v860 = vld [vmem:[%s804 + $0xd8] sm:$0xff]
        %861 = vst [vmem:[%s805 + $0xd8] sm:$0xff] %v860
        %v862 = vld [vmem:[%s804 + $0xe0] sm:$0xff]
        %863 = vst [vmem:[%s805 + $0xe0] sm:$0xff] %v862
        %v864 = vld [vmem:[%s804 + $0xe8] sm:$0xff]
        %865 = vst [vmem:[%s805 + $0xe8] sm:$0xff] %v864
        %v866 = vld [vmem:[%s804 + $0xf0] sm:$0xff]
        %867 = vst [vmem:[%s805 + $0xf0] sm:$0xff] %v866
        %v868 = vld [vmem:[%s804 + $0xf8] sm:$0xff]
        %869 = vst [vmem:[%s805 + $0xf8] sm:$0xff] %v868
        %v870 = vld [vmem:[%s804 + $0x100] sm:$0xff]
        %871 = vst [vmem:[%s805 + $0x100] sm:$0xff] %v870
        %v872 = vld [vmem:[%s804 + $0x108] sm:$0xff]
        %873 = vst [vmem:[%s805 + $0x108] sm:$0xff] %v872
        %v874 = vld [vmem:[%s804 + $0x110] sm:$0xff]
        %875 = vst [vmem:[%s805 + $0x110] sm:$0xff] %v874
        %v876 = vld [vmem:[%s804 + $0x118] sm:$0xff]
        %877 = vst [vmem:[%s805 + $0x118] sm:$0xff] %v876
        %v878 = vld [vmem:[%s804 + $0x120] sm:$0xff]
        %879 = vst [vmem:[%s805 + $0x120] sm:$0xff] %v878
        %v880 = vld [vmem:[%s804 + $0x128] sm:$0xff]
        %881 = vst [vmem:[%s805 + $0x128] sm:$0xff] %v880
        %v882 = vld [vmem:[%s804 + $0x130] sm:$0xff]
        %883 = vst [vmem:[%s805 + $0x130] sm:$0xff] %v882
        %v884 = vld [vmem:[%s804 + $0x138] sm:$0xff]
        %885 = vst [vmem:[%s805 + $0x138] sm:$0xff] %v884
        %v886 = vld [vmem:[%s804 + $0x140] sm:$0xff]
        %887 = vst [vmem:[%s805 + $0x140] sm:$0xff] %v886
        %v888 = vld [vmem:[%s804 + $0x148] sm:$0xff]
        %889 = vst [vmem:[%s805 + $0x148] sm:$0xff] %v888
        %v890 = vld [vmem:[%s804 + $0x150] sm:$0xff]
        %891 = vst [vmem:[%s805 + $0x150] sm:$0xff] %v890
        %v892 = vld [vmem:[%s804 + $0x158] sm:$0xff]
        %893 = vst [vmem:[%s805 + $0x158] sm:$0xff] %v892
        %v894 = vld [vmem:[%s804 + $0x160] sm:$0xff]
        %895 = vst [vmem:[%s805 + $0x160] sm:$0xff] %v894
        %v896 = vld [vmem:[%s804 + $0x168] sm:$0xff]
        %897 = vst [vmem:[%s805 + $0x168] sm:$0xff] %v896
        %v898 = vld [vmem:[%s804 + $0x170] sm:$0xff]
        %899 = vst [vmem:[%s805 + $0x170] sm:$0xff] %v898
        %v900 = vld [vmem:[%s804 + $0x178] sm:$0xff]
        %901 = vst [vmem:[%s805 + $0x178] sm:$0xff] %v900
        %v902 = vld [vmem:[%s804 + $0x180] sm:$0xff]
        %903 = vst [vmem:[%s805 + $0x180] sm:$0xff] %v902
        %v904 = vld [vmem:[%s804 + $0x188] sm:$0xff]
        %905 = vst [vmem:[%s805 + $0x188] sm:$0xff] %v904
      $region143: #{tpu_custom_call.1} parent=137 // loop_footer
        %s803 = sadd.s32 1, %s799
      $region144: #{tpu_custom_call.1} parent=137 // loop_footer_branch
        %798 = sbr.rel target = $region140
      $region145: #{tpu_custom_call.1} parent=137 // loop_exit
        _
    $region138: #{tpu_custom_call.1} parent=122 // pred_fallthru
      _
    %p906 = pneg %p794
    // Predicated region
    $region146: #{tpu_custom_call.1} parent=122 // pred_check
      _
    $region147: #{tpu_custom_call.1} parent=122 // pred_check_branch
      %908 = sbr.rel (%p794) target = $region149
    $region148: #{tpu_custom_call.1} parent=122 // pred_region
      %s909 = sand.u32 400, 7
    $region149: #{tpu_custom_call.1} parent=122 // pred_fallthru
      _
  $region123: #{tpu_custom_call.1} parent=0 // pred_fallthru
    _
  // Predicated region
  $region124: #{tpu_custom_call.1} parent=0 // pred_check
    %p779 = pneg %p775
  $region125: #{tpu_custom_call.1} parent=0 // pred_check_branch
    %781 = sbr.rel (%p779) target = $region127
  $region126: #{tpu_custom_call.1} parent=0 // pred_region
    %s782 = sshllo.u32 0, 400
    loop: start=0, step=1, limit=1
    $region128: #{tpu_custom_call.1} parent=126 // loop_pre_header
      _
    $region129: #{tpu_custom_call.1} parent=126 // loop_header
      %s784 = sphi 0, %s788
      %p785 = scmp.ge.s32.totalorder %s784, 1
      %s789 = sphi %s7, %s7
      %s790 = sphi [#allocation8], [#allocation8]
    $region130: #{tpu_custom_call.1} parent=126 // loop_header_branch
      %787 = sbr.rel (%p785) target = $region134
    $region131: #{tpu_custom_call.1} parent=126 // loop_body
      %v791 = vld [vmem:[%s789] sm:%s782]
      %792 = vst [vmem:[%s790] sm:%s782] %v791
    $region132: #{tpu_custom_call.1} parent=126 // loop_footer
      %s788 = sadd.s32 1, %s784
    $region133: #{tpu_custom_call.1} parent=126 // loop_footer_branch
      %783 = sbr.rel target = $region129
    $region134: #{tpu_custom_call.1} parent=126 // loop_exit
      _
  $region127: #{tpu_custom_call.1} parent=0 // pred_fallthru
    _
  // Predicated region
  $region150: #{tpu_custom_call.1} parent=0 // pred_check
    _
  $region151: #{tpu_custom_call.1} parent=0 // pred_check_branch
    %912 = sbr.rel (0) target = $region153
  $region152: #{tpu_custom_call.1} parent=0 // pred_region
    %913 = vsyncadd %s773, 6400
  $region153: #{tpu_custom_call.1} parent=0 // pred_fallthru
    _
  %vm914 = vcmask 982016
  %915 = vst.msk [vmem:[#allocation3] sm:$0xff] %vm914, 0.0
  %916 = vst.msk [vmem:[#allocation3 + $0x8] sm:$0xff] %vm914, 0.0
  %917 = vst.msk [vmem:[#allocation3 + $0x10] sm:$0xff] %vm914, 0.0
  %918 = vst.msk [vmem:[#allocation3 + $0x18] sm:$0xff] %vm914, 0.0
  %919 = vst.msk [vmem:[#allocation3 + $0x20] sm:$0xff] %vm914, 0.0
  %920 = vst.msk [vmem:[#allocation3 + $0x28] sm:$0xff] %vm914, 0.0
  %921 = vst.msk [vmem:[#allocation3 + $0x30] sm:$0xff] %vm914, 0.0
  %922 = vst.msk [vmem:[#allocation3 + $0x38] sm:$0xff] %vm914, 0.0
  %923 = vst.msk [vmem:[#allocation3 + $0x40] sm:$0xff] %vm914, 0.0
  %924 = vst.msk [vmem:[#allocation3 + $0x48] sm:$0xff] %vm914, 0.0
  %vm925 = vcmask 979968
  %926 = vst.msk [vmem:[#allocation3 + $0x50] sm:$0x3f] %vm925, 0.0
  %v927 = vld [vmem:[%s2] sm:$0x3]
  %v928 = vld [vmem:[%s0] sm:$0xff]
  %v929 = vld [vmem:[%s0 + $0x8] sm:$0xff]
  %v930 = vld [vmem:[%s0 + $0x10] sm:$0xff]
  %v931 = vld [vmem:[%s0 + $0x18] sm:$0xff]
  %v932 = vld [vmem:[%s0 + $0x20] sm:$0xff]
  %v933 = vld [vmem:[%s0 + $0x28] sm:$0xff]
  %v934 = vld [vmem:[%s0 + $0x30] sm:$0xff]
  %v935 = vld [vmem:[%s0 + $0x38] sm:$0xff]
  %v936 = vld [vmem:[%s1] sm:$0xff]
  %v937 = vld [vmem:[%s1 + $0x8] sm:$0xff]
  %v938 = vld [vmem:[%s1 + $0x10] sm:$0xff]
  %v939 = vld [vmem:[%s1 + $0x18] sm:$0xff]
  %v940 = vld [vmem:[%s1 + $0x20] sm:$0xff]
  %v941 = vld [vmem:[%s1 + $0x28] sm:$0xff]
  %v942 = vld [vmem:[%s1 + $0x30] sm:$0xff]
  %v943 = vld [vmem:[%s1 + $0x38] sm:$0xff]
  %v944 = vld [vmem:[%s1 + $0x40] sm:$0xff]
  %v945 = vld [vmem:[%s1 + $0x48] sm:$0xff]
  %v946 = vld [vmem:[%s1 + $0x50] sm:$0xff]
  %v947 = vld [vmem:[%s1 + $0x58] sm:$0xff]
  %v948 = vld [vmem:[%s1 + $0x60] sm:$0xff]
  %v949 = vld [vmem:[%s1 + $0x68] sm:$0xff]
  %v950 = vld [vmem:[%s1 + $0x70] sm:$0xff]
  %v951 = vld [vmem:[%s1 + $0x78] sm:$0xff]
  %v952 = vld [vmem:[%s1 + $0x80] sm:$0xff]
  %v953 = vld [vmem:[%s1 + $0x88] sm:$0xff]
  %v954 = vld [vmem:[%s1 + $0x90] sm:$0xff]
  %v955 = vld [vmem:[%s1 + $0x98] sm:$0xff]
  %v956 = vld [vmem:[%s1 + $0xa0] sm:$0xff]
  %v957 = vld [vmem:[%s1 + $0xa8] sm:$0xff]
  %v958 = vld [vmem:[%s1 + $0xb0] sm:$0x3]
  %v959 = vld [vmem:[%s1 + $0xb8] sm:$0x3]
  %v961 = vlaneseq
  %v962 = vshrl.u32 %v961, 7
  %v963 = vsub.s32 0, %v962
  %v964 = vrot.slane %v927, %v963
  %v965 = vlaneseq
  %v966 = vshrl.u32 %v965, 7
  %v967 = vsub.s32 1, %v966
  %v968 = vrot.slane %v927, %v967
  %vm971 = vcmask 736256
  %v973 = vsel %vm971, %v928, 0
  %v976 = vsel %vm971, %v929, 0
  %v979 = vsel %vm971, %v930, 0
  %v982 = vsel %vm971, %v931, 0
  %v985 = vsel %vm971, %v932, 0
  %v988 = vsel %vm971, %v933, 0
  %v991 = vsel %vm971, %v934, 0
  %v994 = vsel %vm971, %v935, 0
  %vm996 = vcmask 1041408
  %v998 = vsel %vm996, %v958, 0
  %v1001 = vsel %vm996, %v959, 0
  %1003 = vmatprep.subr.mxu0 %v937
  %1004 = vmatpush1.msra.mxu0 %v936
  %1005 = vmatprep.subr.mxu0 %v939
  %1006 = vmatpush1.msra.mxu0 %v938
  %1007 = vmatprep.subr.mxu0 %v941
  %1008 = vmatpush1.msra.mxu0 %v940
  %1009 = vmatprep.subr.mxu0 %v943
  %1010 = vmatpush1.msra.mxu0 %v942
  %1011 = vmatprep.subr.mxu0 %v945
  %1012 = vmatpush1.msra.mxu0 %v944
  %1013 = vmatprep.subr.mxu0 %v947
  %1014 = vmatpush1.msra.mxu0 %v946
  %1015 = vmatprep.subr.mxu0 %v949
  %1016 = vmatpush1.msra.mxu0 %v948
  %1017 = vmatprep.subr.mxu0 %v951
  %1018 = vmatpush1.msra.mxu0 %v950
  %1019 = vmatprep.subr.mxu0 %v953
  %1020 = vmatpush1.msra.mxu0 %v952
  %1021 = vmatprep.subr.mxu0 %v955
  %1022 = vmatpush1.msra.mxu0 %v954
  %1023 = vmatprep.subr.mxu0 %v957
  %1024 = vmatpush1.msra.mxu0 %v956
  %1025 = vmatprep.subr.mxu0 %v1001
  %1026 = vmatpush1.msra.mxu0 %v998
  %1027 = vmatprep.subr.mxu0 0.0
  %1028 = vmatpush1.msra.mxu0 0.0
  %1029 = vmatprep.subr.mxu0 0.0
  %1030 = vmatpush1.msra.mxu0 0.0
  %1031 = vmatprep.subr.mxu0 0.0
  %1032 = vmatpush1.msra.mxu0 0.0
  %1033 = vmatprep.subr.mxu0 0.0
  %1034 = vmatpush1.msra.mxu0 0.0
  %1035 = vmatprep.subr.mxu0 0.0
  %1036 = vmatpush1.msra.mxu0 0.0
  %1037 = vmatprep.subr.mxu0 0.0
  %1038 = vmatpush1.msra.mxu0 0.0
  %1039 = vmatprep.subr.mxu0 0.0
  %1040 = vmatpush1.msra.mxu0 0.0
  %1041 = vmatprep.subr.mxu0 0.0
  %1042 = vmatpush1.msra.mxu0 0.0
  %1043 = vmatprep.subr.mxu0 0.0
  %1044 = vmatpush1.msra.mxu0 0.0
  %1045 = vmatprep.subr.mxu0 0.0
  %1046 = vmatpush1.msra.mxu0 0.0
  %1047 = vmatprep.subr.mxu0 0.0
  %1048 = vmatpush1.msra.mxu0 0.0
  %1049 = vmatprep.subr.mxu0 0.0
  %1050 = vmatpush1.msra.mxu0 0.0
  %1051 = vmatprep.subr.mxu0 0.0
  %1052 = vmatpush1.msra.mxu0 0.0
  %1053 = vmatprep.subr.mxu0 0.0
  %1054 = vmatpush1.msra.mxu0 0.0
  %1055 = vmatprep.subr.mxu0 0.0
  %1056 = vmatpush1.msra.mxu0 0.0
  %1057 = vmatprep.subr.mxu0 0.0
  %1058 = vmatpush1.msra.mxu0 0.0
  %1059 = vmatprep.subr.mxu0 0.0
  %1060 = vmatpush1.msra.mxu0 0.0
  %1061 = vmatprep.subr.mxu0 0.0
  %1062 = vmatpush1.msra.mxu0 0.0
  %1063 = vmatprep.subr.mxu0 0.0
  %1064 = vmatpush1.msra.mxu0 0.0
  %1065 = vmatprep.subr.mxu0 0.0
  %1066 = vmatpush1.msra.mxu0 0.0
  %1067 = vmatprep.mubr.f32.mxu0 0.0
  %1068 = vmatmul.mubr.f32.gmra.mrb[0].mxu0 %v973
  %v1069 = vpop.f32.mrb[0].mxu0
  %v1070 = vadd.f32 %v964, %v1069
  %v1071 = vpop.f32.mrb[0].mxu0
  %v1072 = vadd.f32 %v968, %v1071
  %1073 = vmatprep.mubr.f32.mxu0 0.0
  %1074 = vmatmul.mubr.f32.gmra.mrb[0].mxu0 %v976
  %v1075 = vpop.f32.mrb[0].mxu0
  %v1076 = vadd.f32 %v964, %v1075
  %v1077 = vpop.f32.mrb[0].mxu0
  %v1078 = vadd.f32 %v968, %v1077
  %1079 = vmatprep.mubr.f32.mxu0 0.0
  %1080 = vmatmul.mubr.f32.gmra.mrb[0].mxu0 %v979
  %v1081 = vpop.f32.mrb[0].mxu0
  %v1082 = vadd.f32 %v964, %v1081
  %v1083 = vpop.f32.mrb[0].mxu0
  %v1084 = vadd.f32 %v968, %v1083
  %1085 = vmatprep.mubr.f32.mxu0 0.0
  %1086 = vmatmul.mubr.f32.gmra.mrb[0].mxu0 %v982
  %v1087 = vpop.f32.mrb[0].mxu0
  %v1088 = vadd.f32 %v964, %v1087
  %v1089 = vpop.f32.mrb[0].mxu0
  %v1090 = vadd.f32 %v968, %v1089
  %1091 = vmatprep.mubr.f32.mxu0 0.0
  %1092 = vmatmul.mubr.f32.gmra.mrb[0].mxu0 %v985
  %v1093 = vpop.f32.mrb[0].mxu0
  %v1094 = vadd.f32 %v964, %v1093
  %v1095 = vpop.f32.mrb[0].mxu0
  %v1096 = vadd.f32 %v968, %v1095
  %1097 = vmatprep.mubr.f32.mxu0 0.0
  %1098 = vmatmul.mubr.f32.gmra.mrb[0].mxu0 %v988
  %v1099 = vpop.f32.mrb[0].mxu0
  %v1100 = vadd.f32 %v964, %v1099
  %v1101 = vpop.f32.mrb[0].mxu0
  %v1102 = vadd.f32 %v968, %v1101
  %1103 = vmatprep.mubr.f32.mxu0 0.0
  %1104 = vmatmul.mubr.f32.gmra.mrb[0].mxu0 %v991
  %v1105 = vpop.f32.mrb[0].mxu0
  %v1106 = vadd.f32 %v964, %v1105
  %v1107 = vpop.f32.mrb[0].mxu0
  %v1108 = vadd.f32 %v968, %v1107
  %1109 = vmatprep.mubr.f32.mxu0 0.0
  %1110 = vmatmul.mubr.f32.gmra.mrb[0].mxu0 %v994
  %v1111 = vpop.f32.mrb[0].mxu0
  %v1112 = vadd.f32 %v964, %v1111
  %v1113 = vpop.f32.mrb[0].mxu0
  %v1114 = vadd.f32 %v968, %v1113
  %1115 = vdwg.mxu0
  %v1116 = vmax.f32 %v1070, 0.0
  %v1117 = vmax.f32 %v1072, 0.0
  %v1118 = vmax.f32 %v1076, 0.0
  %v1119 = vmax.f32 %v1078, 0.0
  %v1120 = vmax.f32 %v1082, 0.0
  %v1121 = vmax.f32 %v1084, 0.0
  %v1122 = vmax.f32 %v1088, 0.0
  %v1123 = vmax.f32 %v1090, 0.0
  %v1124 = vmax.f32 %v1094, 0.0
  %v1125 = vmax.f32 %v1096, 0.0
  %v1126 = vmax.f32 %v1100, 0.0
  %v1127 = vmax.f32 %v1102, 0.0
  %v1128 = vmax.f32 %v1106, 0.0
  %v1129 = vmax.f32 %v1108, 0.0
  %v1130 = vmax.f32 %v1112, 0.0
  %v1131 = vmax.f32 %v1114, 0.0
  %1140 = vrot.lane.b32.xlu0 %v1116, 108
  %v1141 = vpop.permute.xlu0 %1140
  %1142 = vrot.lane.b32.xlu0 %v1118, 108
  %v1143 = vpop.permute.xlu0 %1142
  %1144 = vrot.lane.b32.xlu0 %v1120, 108
  %v1145 = vpop.permute.xlu0 %1144
  %1146 = vrot.lane.b32.xlu0 %v1122, 108
  %v1147 = vpop.permute.xlu0 %1146
  %1148 = vrot.lane.b32.xlu0 %v1124, 108
  %v1149 = vpop.permute.xlu0 %1148
  %1150 = vrot.lane.b32.xlu0 %v1126, 108
  %v1151 = vpop.permute.xlu0 %1150
  %1152 = vrot.lane.b32.xlu0 %v1128, 108
  %v1153 = vpop.permute.xlu0 %1152
  %1154 = vrot.lane.b32.xlu0 %v1130, 108
  %v1155 = vpop.permute.xlu0 %1154
  %v1164 = vmax.f32 %v1116, %v1141
  %v1165 = vmax.f32 %v1118, %v1143
  %v1166 = vmax.f32 %v1120, %v1145
  %v1167 = vmax.f32 %v1122, %v1147
  %v1168 = vmax.f32 %v1124, %v1149
  %v1169 = vmax.f32 %v1126, %v1151
  %v1170 = vmax.f32 %v1128, %v1153
  %v1171 = vmax.f32 %v1130, %v1155
  %1180 = vrot.lane.b32.xlu0 %v1117, 108
  %v1181 = vpop.permute.xlu0 %1180
  %1182 = vrot.lane.b32.xlu0 %v1119, 108
  %v1183 = vpop.permute.xlu0 %1182
  %1184 = vrot.lane.b32.xlu0 %v1121, 108
  %v1185 = vpop.permute.xlu0 %1184
  %1186 = vrot.lane.b32.xlu0 %v1123, 108
  %v1187 = vpop.permute.xlu0 %1186
  %1188 = vrot.lane.b32.xlu0 %v1125, 108
  %v1189 = vpop.permute.xlu0 %1188
  %1190 = vrot.lane.b32.xlu0 %v1127, 108
  %v1191 = vpop.permute.xlu0 %1190
  %1192 = vrot.lane.b32.xlu0 %v1129, 108
  %v1193 = vpop.permute.xlu0 %1192
  %1194 = vrot.lane.b32.xlu0 %v1131, 108
  %v1195 = vpop.permute.xlu0 %1194
  %v1204 = vmax.f32 %v1116, %v1181
  %v1205 = vmax.f32 %v1117, %v1181
  %v1206 = vmax.f32 %v1118, %v1183
  %v1207 = vmax.f32 %v1119, %v1183
  %v1208 = vmax.f32 %v1120, %v1185
  %v1209 = vmax.f32 %v1121, %v1185
  %v1210 = vmax.f32 %v1122, %v1187
  %v1211 = vmax.f32 %v1123, %v1187
  %v1212 = vmax.f32 %v1124, %v1189
  %v1213 = vmax.f32 %v1125, %v1189
  %v1214 = vmax.f32 %v1126, %v1191
  %v1215 = vmax.f32 %v1127, %v1191
  %v1216 = vmax.f32 %v1128, %v1193
  %v1217 = vmax.f32 %v1129, %v1193
  %v1218 = vmax.f32 %v1130, %v1195
  %v1219 = vmax.f32 %v1131, %v1195
  %1228 = vrot.lane.b32.xlu0 %v1164, 108
  %v1229 = vpop.permute.xlu0 %1228
  %1230 = vrot.lane.b32.xlu0 %v1165, 108
  %v1231 = vpop.permute.xlu0 %1230
  %1232 = vrot.lane.b32.xlu0 %v1166, 108
  %v1233 = vpop.permute.xlu0 %1232
  %1234 = vrot.lane.b32.xlu0 %v1167, 108
  %v1235 = vpop.permute.xlu0 %1234
  %1236 = vrot.lane.b32.xlu0 %v1168, 108
  %v1237 = vpop.permute.xlu0 %1236
  %1238 = vrot.lane.b32.xlu0 %v1169, 108
  %v1239 = vpop.permute.xlu0 %1238
  %1240 = vrot.lane.b32.xlu0 %v1170, 108
  %v1241 = vpop.permute.xlu0 %1240
  %1242 = vrot.lane.b32.xlu0 %v1171, 108
  %v1243 = vpop.permute.xlu0 %1242
  %1252 = vrot.lane.b32.xlu0 %v1164, 88
  %v1253 = vpop.permute.xlu0 %1252
  %1254 = vrot.lane.b32.xlu0 %v1165, 88
  %v1255 = vpop.permute.xlu0 %1254
  %1256 = vrot.lane.b32.xlu0 %v1166, 88
  %v1257 = vpop.permute.xlu0 %1256
  %1258 = vrot.lane.b32.xlu0 %v1167, 88
  %v1259 = vpop.permute.xlu0 %1258
  %1260 = vrot.lane.b32.xlu0 %v1168, 88
  %v1261 = vpop.permute.xlu0 %1260
  %1262 = vrot.lane.b32.xlu0 %v1169, 88
  %v1263 = vpop.permute.xlu0 %1262
  %1264 = vrot.lane.b32.xlu0 %v1170, 88
  %v1265 = vpop.permute.xlu0 %1264
  %1266 = vrot.lane.b32.xlu0 %v1171, 88
  %v1267 = vpop.permute.xlu0 %1266
  %1292 = vrot.lane.b32.xlu0 %v1204, 68
  %v1293 = vpop.permute.xlu0 %1292
  %1294 = vrot.lane.b32.xlu0 %v1205, 68
  %v1295 = vpop.permute.xlu0 %1294
  %1296 = vrot.lane.b32.xlu0 %v1206, 68
  %v1297 = vpop.permute.xlu0 %1296
  %1298 = vrot.lane.b32.xlu0 %v1207, 68
  %v1299 = vpop.permute.xlu0 %1298
  %1300 = vrot.lane.b32.xlu0 %v1208, 68
  %v1301 = vpop.permute.xlu0 %1300
  %1302 = vrot.lane.b32.xlu0 %v1209, 68
  %v1303 = vpop.permute.xlu0 %1302
  %1304 = vrot.lane.b32.xlu0 %v1210, 68
  %v1305 = vpop.permute.xlu0 %1304
  %1306 = vrot.lane.b32.xlu0 %v1211, 68
  %v1307 = vpop.permute.xlu0 %1306
  %1308 = vrot.lane.b32.xlu0 %v1212, 68
  %v1309 = vpop.permute.xlu0 %1308
  %1310 = vrot.lane.b32.xlu0 %v1213, 68
  %v1311 = vpop.permute.xlu0 %1310
  %1312 = vrot.lane.b32.xlu0 %v1214, 68
  %v1313 = vpop.permute.xlu0 %1312
  %1314 = vrot.lane.b32.xlu0 %v1215, 68
  %v1315 = vpop.permute.xlu0 %1314
  %1316 = vrot.lane.b32.xlu0 %v1216, 68
  %v1317 = vpop.permute.xlu0 %1316
  %1318 = vrot.lane.b32.xlu0 %v1217, 68
  %v1319 = vpop.permute.xlu0 %1318
  %1320 = vrot.lane.b32.xlu0 %v1218, 68
  %v1321 = vpop.permute.xlu0 %1320
  %1322 = vrot.lane.b32.xlu0 %v1219, 68
  %v1323 = vpop.permute.xlu0 %1322
  %vm1324 = vcmask 556032
  %v1325 = vsel %vm1324, %v1293, %v1295
  %v1326 = vsel %vm1324, %v1297, %v1299
  %v1327 = vsel %vm1324, %v1301, %v1303
  %v1328 = vsel %vm1324, %v1305, %v1307
  %v1329 = vsel %vm1324, %v1309, %v1311
  %v1330 = vsel %vm1324, %v1313, %v1315
  %v1331 = vsel %vm1324, %v1317, %v1319
  %v1332 = vsel %vm1324, %v1321, %v1323
  %vm1341 = vcmask 162816
  %v1342 = vsel %vm1341, %v1164, %v1229
  %v1343 = vsel %vm1341, %v1165, %v1231
  %v1344 = vsel %vm1341, %v1166, %v1233
  %v1345 = vsel %vm1341, %v1167, %v1235
  %v1346 = vsel %vm1341, %v1168, %v1237
  %v1347 = vsel %vm1341, %v1169, %v1239
  %v1348 = vsel %vm1341, %v1170, %v1241
  %v1349 = vsel %vm1341, %v1171, %v1243
  %vm1350 = vcmask 326656
  %v1351 = vsel %vm1350, %v1342, %v1253
  %v1352 = vsel %vm1350, %v1343, %v1255
  %v1353 = vsel %vm1350, %v1344, %v1257
  %v1354 = vsel %vm1350, %v1345, %v1259
  %v1355 = vsel %vm1350, %v1346, %v1261
  %v1356 = vsel %vm1350, %v1347, %v1263
  %v1357 = vsel %vm1350, %v1348, %v1265
  %v1358 = vsel %vm1350, %v1349, %v1267
  %vm1359 = vcmask 490496
  %v1360 = vsel %vm1359, %v1351, %v1325
  %v1361 = vsel %vm1359, %v1352, %v1326
  %v1362 = vsel %vm1359, %v1353, %v1327
  %v1363 = vsel %vm1359, %v1354, %v1328
  %v1364 = vsel %vm1359, %v1355, %v1329
  %v1365 = vsel %vm1359, %v1356, %v1330
  %v1366 = vsel %vm1359, %v1357, %v1331
  %v1367 = vsel %vm1359, %v1358, %v1332
  %vm1368 = vcmask 654336
  %1369 = vst.msk [vmem:[#allocation2] sm:$0xff] %vm1368, %v1360
  %1370 = vst.msk [vmem:[#allocation2 + $0x8] sm:$0xff] %vm1368, %v1361
  %1371 = vst.msk [vmem:[#allocation2 + $0x10] sm:$0xff] %vm1368, %v1362
  %1372 = vst.msk [vmem:[#allocation2 + $0x18] sm:$0xff] %vm1368, %v1363
  %1373 = vst.msk [vmem:[#allocation2 + $0x20] sm:$0xff] %vm1368, %v1364
  %1374 = vst.msk [vmem:[#allocation2 + $0x28] sm:$0xff] %vm1368, %v1365
  %1375 = vst.msk [vmem:[#allocation2 + $0x30] sm:$0xff] %vm1368, %v1366
  %1376 = vst.msk [vmem:[#allocation2 + $0x38] sm:$0xff] %vm1368, %v1367
  %v1377 = vld [vmem:[%s0 + $0x40] sm:$0xff]
  %v1378 = vld [vmem:[%s0 + $0x48] sm:$0xff]
  %v1379 = vld [vmem:[%s0 + $0x50] sm:$0xff]
  %v1380 = vld [vmem:[%s0 + $0x58] sm:$0xff]
  %v1381 = vld [vmem:[%s0 + $0x60] sm:$0xff]
  %v1382 = vld [vmem:[%s0 + $0x68] sm:$0xff]
  %v1383 = vld [vmem:[%s0 + $0x70] sm:$0xff]
  %v1384 = vld [vmem:[%s0 + $0x78] sm:$0xff]
  %v1385 = vld [vmem:[%s1] sm:$0xff]
  %v1386 = vld [vmem:[%s1 + $0x8] sm:$0xff]
  %v1387 = vld [vmem:[%s1 + $0x10] sm:$0xff]
  %v1388 = vld [vmem:[%s1 + $0x18] sm:$0xff]
  %v1389 = vld [vmem:[%s1 + $0x20] sm:$0xff]
  %v1390 = vld [vmem:[%s1 + $0x28] sm:$0xff]
  %v1391 = vld [vmem:[%s1 + $0x30] sm:$0xff]
  %v1392 = vld [vmem:[%s1 + $0x38] sm:$0xff]
  %v1393 = vld [vmem:[%s1 + $0x40] sm:$0xff]
  %v1394 = vld [vmem:[%s1 + $0x48] sm:$0xff]
  %v1395 = vld [vmem:[%s1 + $0x50] sm:$0xff]
  %v1396 = vld [vmem:[%s1 + $0x58] sm:$0xff]
  %v1397 = vld [vmem:[%s1 + $0x60] sm:$0xff]
  %v1398 = vld [vmem:[%s1 + $0x68] sm:$0xff]
  %v1399 = vld [vmem:[%s1 + $0x70] sm:$0xff]
  %v1400 = vld [vmem:[%s1 + $0x78] sm:$0xff]
  %v1401 = vld [vmem:[%s1 + $0x80] sm:$0xff]
  %v1402 = vld [vmem:[%s1 + $0x88] sm:$0xff]
  %v1403 = vld [vmem:[%s1 + $0x90] sm:$0xff]
  %v1404 = vld [vmem:[%s1 + $0x98] sm:$0xff]
  %v1405 = vld [vmem:[%s1 + $0xa0] sm:$0xff]
  %v1406 = vld [vmem:[%s1 + $0xa8] sm:$0xff]
  %v1407 = vld [vmem:[%s1 + $0xb0] sm:$0x3]
  %v1408 = vld [vmem:[%s1 + $0xb8] sm:$0x3]
  %v1410 = vsel %vm971, %v1377, 0
  %v1413 = vsel %vm971, %v1378, 0
  %v1416 = vsel %vm971, %v1379, 0
  %v1419 = vsel %vm971, %v1380, 0
  %v1422 = vsel %vm971, %v1381, 0
  %v1425 = vsel %vm971, %v1382, 0
  %v1428 = vsel %vm971, %v1383, 0
  %v1431 = vsel %vm971, %v1384, 0
  %v1434 = vsel %vm996, %v1407, 0
  %v1437 = vsel %vm996, %v1408, 0
  %1439 = vmatprep.subr.mxu0 %v1386
  %1440 = vmatpush1.msra.mxu0 %v1385
  %1441 = vmatprep.subr.mxu0 %v1388
  %1442 = vmatpush1.msra.mxu0 %v1387
  %1443 = vmatprep.subr.mxu0 %v1390
  %1444 = vmatpush1.msra.mxu0 %v1389
  %1445 = vmatprep.subr.mxu0 %v1392
  %1446 = vmatpush1.msra.mxu0 %v1391
  %1447 = vmatprep.subr.mxu0 %v1394
  %1448 = vmatpush1.msra.mxu0 %v1393
  %1449 = vmatprep.subr.mxu0 %v1396
  %1450 = vmatpush1.msra.mxu0 %v1395
  %1451 = vmatprep.subr.mxu0 %v1398
  %1452 = vmatpush1.msra.mxu0 %v1397
  %1453 = vmatprep.subr.mxu0 %v1400
  %1454 = vmatpush1.msra.mxu0 %v1399
  %1455 = vmatprep.subr.mxu0 %v1402
  %1456 = vmatpush1.msra.mxu0 %v1401
  %1457 = vmatprep.subr.mxu0 %v1404
  %1458 = vmatpush1.msra.mxu0 %v1403
  %1459 = vmatprep.subr.mxu0 %v1406
  %1460 = vmatpush1.msra.mxu0 %v1405
  %1461 = vmatprep.subr.mxu0 %v1437
  %1462 = vmatpush1.msra.mxu0 %v1434
  %1463 = vmatprep.subr.mxu0 0.0
  %1464 = vmatpush1.msra.mxu0 0.0
  %1465 = vmatprep.subr.mxu0 0.0
  %1466 = vmatpush1.msra.mxu0 0.0
  %1467 = vmatprep.subr.mxu0 0.0
  %1468 = vmatpush1.msra.mxu0 0.0
  %1469 = vmatprep.subr.mxu0 0.0
  %1470 = vmatpush1.msra.mxu0 0.0
  %1471 = vmatprep.subr.mxu0 0.0
  %1472 = vmatpush1.msra.mxu0 0.0
  %1473 = vmatprep.subr.mxu0 0.0
  %1474 = vmatpush1.msra.mxu0 0.0
  %1475 = vmatprep.subr.mxu0 0.0
  %1476 = vmatpush1.msra.mxu0 0.0
  %1477 = vmatprep.subr.mxu0 0.0
  %1478 = vmatpush1.msra.mxu0 0.0
  %1479 = vmatprep.subr.mxu0 0.0
  %1480 = vmatpush1.msra.mxu0 0.0
  %1481 = vmatprep.subr.mxu0 0.0
  %1482 = vmatpush1.msra.mxu0 0.0
  %1483 = vmatprep.subr.mxu0 0.0
  %1484 = vmatpush1.msra.mxu0 0.0
  %1485 = vmatprep.subr.mxu0 0.0
  %1486 = vmatpush1.msra.mxu0 0.0
  %1487 = vmatprep.subr.mxu0 0.0
  %1488 = vmatpush1.msra.mxu0 0.0
  %1489 = vmatprep.subr.mxu0 0.0
  %1490 = vmatpush1.msra.mxu0 0.0
  %1491 = vmatprep.subr.mxu0 0.0
  %1492 = vmatpush1.msra.mxu0 0.0
  %1493 = vmatprep.subr.mxu0 0.0
  %1494 = vmatpush1.msra.mxu0 0.0
  %1495 = vmatprep.subr.mxu0 0.0
  %1496 = vmatpush1.msra.mxu0 0.0
  %1497 = vmatprep.subr.mxu0 0.0
  %1498 = vmatpush1.msra.mxu0 0.0
  %1499 = vmatprep.subr.mxu0 0.0
  %1500 = vmatpush1.msra.mxu0 0.0
  %1501 = vmatprep.subr.mxu0 0.0
  %1502 = vmatpush1.msra.mxu0 0.0
  %1503 = vmatprep.mubr.f32.mxu0 0.0
  %1504 = vmatmul.mubr.f32.gmra.mrb[0].mxu0 %v1410
  %v1505 = vpop.f32.mrb[0].mxu0
  %v1506 = vadd.f32 %v964, %v1505
  %v1507 = vpop.f32.mrb[0].mxu0
  %v1508 = vadd.f32 %v968, %v1507
  %1509 = vmatprep.mubr.f32.mxu0 0.0
  %1510 = vmatmul.mubr.f32.gmra.mrb[0].mxu0 %v1413
  %v1511 = vpop.f32.mrb[0].mxu0
  %v1512 = vadd.f32 %v964, %v1511
  %v1513 = vpop.f32.mrb[0].mxu0
  %v1514 = vadd.f32 %v968, %v1513
  %1515 = vmatprep.mubr.f32.mxu0 0.0
  %1516 = vmatmul.mubr.f32.gmra.mrb[0].mxu0 %v1416
  %v1517 = vpop.f32.mrb[0].mxu0
  %v1518 = vadd.f32 %v964, %v1517
  %v1519 = vpop.f32.mrb[0].mxu0
  %v1520 = vadd.f32 %v968, %v1519
  %1521 = vmatprep.mubr.f32.mxu0 0.0
  %1522 = vmatmul.mubr.f32.gmra.mrb[0].mxu0 %v1419
  %v1523 = vpop.f32.mrb[0].mxu0
  %v1524 = vadd.f32 %v964, %v1523
  %v1525 = vpop.f32.mrb[0].mxu0
  %v1526 = vadd.f32 %v968, %v1525
  %1527 = vmatprep.mubr.f32.mxu0 0.0
  %1528 = vmatmul.mubr.f32.gmra.mrb[0].mxu0 %v1422
  %v1529 = vpop.f32.mrb[0].mxu0
  %v1530 = vadd.f32 %v964, %v1529
  %v1531 = vpop.f32.mrb[0].mxu0
  %v1532 = vadd.f32 %v968, %v1531
  %1533 = vmatprep.mubr.f32.mxu0 0.0
  %1534 = vmatmul.mubr.f32.gmra.mrb[0].mxu0 %v1425
  %v1535 = vpop.f32.mrb[0].mxu0
  %v1536 = vadd.f32 %v964, %v1535
  %v1537 = vpop.f32.mrb[0].mxu0
  %v1538 = vadd.f32 %v968, %v1537
  %1539 = vmatprep.mubr.f32.mxu0 0.0
  %1540 = vmatmul.mubr.f32.gmra.mrb[0].mxu0 %v1428
  %v1541 = vpop.f32.mrb[0].mxu0
  %v1542 = vadd.f32 %v964, %v1541
  %v1543 = vpop.f32.mrb[0].mxu0
  %v1544 = vadd.f32 %v968, %v1543
  %1545 = vmatprep.mubr.f32.mxu0 0.0
  %1546 = vmatmul.mubr.f32.gmra.mrb[0].mxu0 %v1431
  %v1547 = vpop.f32.mrb[0].mxu0
  %v1548 = vadd.f32 %v964, %v1547
  %v1549 = vpop.f32.mrb[0].mxu0
  %v1550 = vadd.f32 %v968, %v1549
  %1551 = vdwg.mxu0
  %v1552 = vmax.f32 %v1506, 0.0
  %v1553 = vmax.f32 %v1508, 0.0
  %v1554 = vmax.f32 %v1512, 0.0
  %v1555 = vmax.f32 %v1514, 0.0
  %v1556 = vmax.f32 %v1518, 0.0
  %v1557 = vmax.f32 %v1520, 0.0
  %v1558 = vmax.f32 %v1524, 0.0
  %v1559 = vmax.f32 %v1526, 0.0
  %v1560 = vmax.f32 %v1530, 0.0
  %v1561 = vmax.f32 %v1532, 0.0
  %v1562 = vmax.f32 %v1536, 0.0
  %v1563 = vmax.f32 %v1538, 0.0
  %v1564 = vmax.f32 %v1542, 0.0
  %v1565 = vmax.f32 %v1544, 0.0
  %v1566 = vmax.f32 %v1548, 0.0
  %v1567 = vmax.f32 %v1550, 0.0
  %1576 = vrot.lane.b32.xlu0 %v1552, 108
  %v1577 = vpop.permute.xlu0 %1576
  %1578 = vrot.lane.b32.xlu0 %v1554, 108
  %v1579 = vpop.permute.xlu0 %1578
  %1580 = vrot.lane.b32.xlu0 %v1556, 108
  %v1581 = vpop.permute.xlu0 %1580
  %1582 = vrot.lane.b32.xlu0 %v1558, 108
  %v1583 = vpop.permute.xlu0 %1582
  %1584 = vrot.lane.b32.xlu0 %v1560, 108
  %v1585 = vpop.permute.xlu0 %1584
  %1586 = vrot.lane.b32.xlu0 %v1562, 108
  %v1587 = vpop.permute.xlu0 %1586
  %1588 = vrot.lane.b32.xlu0 %v1564, 108
  %v1589 = vpop.permute.xlu0 %1588
  %1590 = vrot.lane.b32.xlu0 %v1566, 108
  %v1591 = vpop.permute.xlu0 %1590
  %v1600 = vmax.f32 %v1552, %v1577
  %v1601 = vmax.f32 %v1554, %v1579
  %v1602 = vmax.f32 %v1556, %v1581
  %v1603 = vmax.f32 %v1558, %v1583
  %v1604 = vmax.f32 %v1560, %v1585
  %v1605 = vmax.f32 %v1562, %v1587
  %v1606 = vmax.f32 %v1564, %v1589
  %v1607 = vmax.f32 %v1566, %v1591
  %1616 = vrot.lane.b32.xlu0 %v1553, 108
  %v1617 = vpop.permute.xlu0 %1616
  %1618 = vrot.lane.b32.xlu0 %v1555, 108
  %v1619 = vpop.permute.xlu0 %1618
  %1620 = vrot.lane.b32.xlu0 %v1557, 108
  %v1621 = vpop.permute.xlu0 %1620
  %1622 = vrot.lane.b32.xlu0 %v1559, 108
  %v1623 = vpop.permute.xlu0 %1622
  %1624 = vrot.lane.b32.xlu0 %v1561, 108
  %v1625 = vpop.permute.xlu0 %1624
  %1626 = vrot.lane.b32.xlu0 %v1563, 108
  %v1627 = vpop.permute.xlu0 %1626
  %1628 = vrot.lane.b32.xlu0 %v1565, 108
  %v1629 = vpop.permute.xlu0 %1628
  %1630 = vrot.lane.b32.xlu0 %v1567, 108
  %v1631 = vpop.permute.xlu0 %1630
  %v1640 = vmax.f32 %v1552, %v1617
  %v1641 = vmax.f32 %v1553, %v1617
  %v1642 = vmax.f32 %v1554, %v1619
  %v1643 = vmax.f32 %v1555, %v1619
  %v1644 = vmax.f32 %v1556, %v1621
  %v1645 = vmax.f32 %v1557, %v1621
  %v1646 = vmax.f32 %v1558, %v1623
  %v1647 = vmax.f32 %v1559, %v1623
  %v1648 = vmax.f32 %v1560, %v1625
  %v1649 = vmax.f32 %v1561, %v1625
  %v1650 = vmax.f32 %v1562, %v1627
  %v1651 = vmax.f32 %v1563, %v1627
  %v1652 = vmax.f32 %v1564, %v1629
  %v1653 = vmax.f32 %v1565, %v1629
  %v1654 = vmax.f32 %v1566, %v1631
  %v1655 = vmax.f32 %v1567, %v1631
  %1664 = vrot.lane.b32.xlu0 %v1600, 108
  %v1665 = vpop.permute.xlu0 %1664
  %1666 = vrot.lane.b32.xlu0 %v1601, 108
  %v1667 = vpop.permute.xlu0 %1666
  %1668 = vrot.lane.b32.xlu0 %v1602, 108
  %v1669 = vpop.permute.xlu0 %1668
  %1670 = vrot.lane.b32.xlu0 %v1603, 108
  %v1671 = vpop.permute.xlu0 %1670
  %1672 = vrot.lane.b32.xlu0 %v1604, 108
  %v1673 = vpop.permute.xlu0 %1672
  %1674 = vrot.lane.b32.xlu0 %v1605, 108
  %v1675 = vpop.permute.xlu0 %1674
  %1676 = vrot.lane.b32.xlu0 %v1606, 108
  %v1677 = vpop.permute.xlu0 %1676
  %1678 = vrot.lane.b32.xlu0 %v1607, 108
  %v1679 = vpop.permute.xlu0 %1678
  %1688 = vrot.lane.b32.xlu0 %v1600, 88
  %v1689 = vpop.permute.xlu0 %1688
  %1690 = vrot.lane.b32.xlu0 %v1601, 88
  %v1691 = vpop.permute.xlu0 %1690
  %1692 = vrot.lane.b32.xlu0 %v1602, 88
  %v1693 = vpop.permute.xlu0 %1692
  %1694 = vrot.lane.b32.xlu0 %v1603, 88
  %v1695 = vpop.permute.xlu0 %1694
  %1696 = vrot.lane.b32.xlu0 %v1604, 88
  %v1697 = vpop.permute.xlu0 %1696
  %1698 = vrot.lane.b32.xlu0 %v1605, 88
  %v1699 = vpop.permute.xlu0 %1698
  %1700 = vrot.lane.b32.xlu0 %v1606, 88
  %v1701 = vpop.permute.xlu0 %1700
  %1702 = vrot.lane.b32.xlu0 %v1607, 88
  %v1703 = vpop.permute.xlu0 %1702
  %1728 = vrot.lane.b32.xlu0 %v1640, 68
  %v1729 = vpop.permute.xlu0 %1728
  %1730 = vrot.lane.b32.xlu0 %v1641, 68
  %v1731 = vpop.permute.xlu0 %1730
  %1732 = vrot.lane.b32.xlu0 %v1642, 68
  %v1733 = vpop.permute.xlu0 %1732
  %1734 = vrot.lane.b32.xlu0 %v1643, 68
  %v1735 = vpop.permute.xlu0 %1734
  %1736 = vrot.lane.b32.xlu0 %v1644, 68
  %v1737 = vpop.permute.xlu0 %1736
  %1738 = vrot.lane.b32.xlu0 %v1645, 68
  %v1739 = vpop.permute.xlu0 %1738
  %1740 = vrot.lane.b32.xlu0 %v1646, 68
  %v1741 = vpop.permute.xlu0 %1740
  %1742 = vrot.lane.b32.xlu0 %v1647, 68
  %v1743 = vpop.permute.xlu0 %1742
  %1744 = vrot.lane.b32.xlu0 %v1648, 68
  %v1745 = vpop.permute.xlu0 %1744
  %1746 = vrot.lane.b32.xlu0 %v1649, 68
  %v1747 = vpop.permute.xlu0 %1746
  %1748 = vrot.lane.b32.xlu0 %v1650, 68
  %v1749 = vpop.permute.xlu0 %1748
  %1750 = vrot.lane.b32.xlu0 %v1651, 68
  %v1751 = vpop.permute.xlu0 %1750
  %1752 = vrot.lane.b32.xlu0 %v1652, 68
  %v1753 = vpop.permute.xlu0 %1752
  %1754 = vrot.lane.b32.xlu0 %v1653, 68
  %v1755 = vpop.permute.xlu0 %1754
  %1756 = vrot.lane.b32.xlu0 %v1654, 68
  %v1757 = vpop.permute.xlu0 %1756
  %1758 = vrot.lane.b32.xlu0 %v1655, 68
  %v1759 = vpop.permute.xlu0 %1758
  %v1760 = vsel %vm1324, %v1729, %v1731
  %v1761 = vsel %vm1324, %v1733, %v1735
  %v1762 = vsel %vm1324, %v1737, %v1739
  %v1763 = vsel %vm1324, %v1741, %v1743
  %v1764 = vsel %vm1324, %v1745, %v1747
  %v1765 = vsel %vm1324, %v1749, %v1751
  %v1766 = vsel %vm1324, %v1753, %v1755
  %v1767 = vsel %vm1324, %v1757, %v1759
  %v1776 = vsel %vm1341, %v1600, %v1665
  %v1777 = vsel %vm1341, %v1601, %v1667
  %v1778 = vsel %vm1341, %v1602, %v1669
  %v1779 = vsel %vm1341, %v1603, %v1671
  %v1780 = vsel %vm1341, %v1604, %v1673
  %v1781 = vsel %vm1341, %v1605, %v1675
  %v1782 = vsel %vm1341, %v1606, %v1677
  %v1783 = vsel %vm1341, %v1607, %v1679
  %v1784 = vsel %vm1350, %v1776, %v1689
  %v1785 = vsel %vm1350, %v1777, %v1691
  %v1786 = vsel %vm1350, %v1778, %v1693
  %v1787 = vsel %vm1350, %v1779, %v1695
  %v1788 = vsel %vm1350, %v1780, %v1697
  %v1789 = vsel %vm1350, %v1781, %v1699
  %v1790 = vsel %vm1350, %v1782, %v1701
  %v1791 = vsel %vm1350, %v1783, %v1703
  %v1792 = vsel %vm1359, %v1784, %v1760
  %v1793 = vsel %vm1359, %v1785, %v1761
  %v1794 = vsel %vm1359, %v1786, %v1762
  %v1795 = vsel %vm1359, %v1787, %v1763
  %v1796 = vsel %vm1359, %v1788, %v1764
  %v1797 = vsel %vm1359, %v1789, %v1765
  %v1798 = vsel %vm1359, %v1790, %v1766
  %v1799 = vsel %vm1359, %v1791, %v1767
  %1800 = vst.msk [vmem:[#allocation2 + $0x40] sm:$0xff] %vm1368, %v1792
  %1801 = vst.msk [vmem:[#allocation2 + $0x48] sm:$0xff] %vm1368, %v1793
  %1802 = vst.msk [vmem:[#allocation2 + $0x50] sm:$0xff] %vm1368, %v1794
  %1803 = vst.msk [vmem:[#allocation2 + $0x58] sm:$0xff] %vm1368, %v1795
  %1804 = vst.msk [vmem:[#allocation2 + $0x60] sm:$0xff] %vm1368, %v1796
  %1805 = vst.msk [vmem:[#allocation2 + $0x68] sm:$0xff] %vm1368, %v1797
  %1806 = vst.msk [vmem:[#allocation2 + $0x70] sm:$0xff] %vm1368, %v1798
  %1807 = vst.msk [vmem:[#allocation2 + $0x78] sm:$0xff] %vm1368, %v1799
  %v1808 = vld [vmem:[#allocation2] sm:$0xff]
  %v1809 = vld [vmem:[#allocation2 + $0x8] sm:$0xff]
  %v1810 = vmax.f32 %v1808, %v1809
  %v1812 = vrot.slane %v1810, 1
  %v1814 = vmax.f32 %v1810, %v1812
  %v1816 = vrot.slane %v1814, 1
  %v1818 = vrot.slane %v1814, 2
  %v1820 = vrot.slane %v1814, 3
  %vm1822 = vcmask 1040384
  %v1823 = vsel %vm1822, %v1814, %v1816
  %v1824 = vsel %vm996, %v1823, %v1818
  %vm1825 = vcmask 1042432
  %v1826 = vsel %vm1825, %v1824, %v1820
  %1828 = vrot.lane.b32.xlu0 %v1826, 20
  %v1829 = vpop.permute.xlu0 %1828
  %vm1831 = vcmask 814240
  %1832 = vst.msk [vmem:[#allocation3 + $0xe] sm:$0xf] %vm1831, %v1829
  %v1833 = vld [vmem:[#allocation2 + $0x10] sm:$0xff]
  %v1834 = vld [vmem:[#allocation2 + $0x18] sm:$0xff]
  %v1835 = vmax.f32 %v1833, %v1834
  %v1837 = vrot.slane %v1835, 1
  %v1839 = vmax.f32 %v1835, %v1837
  %v1841 = vrot.slane %v1839, 1
  %v1843 = vrot.slane %v1839, 2
  %v1845 = vrot.slane %v1839, 3
  %v1847 = vsel %vm1822, %v1839, %v1841
  %v1848 = vsel %vm996, %v1847, %v1843
  %v1849 = vsel %vm1825, %v1848, %v1845
  %1851 = vrot.lane.b32.xlu0 %v1849, 20
  %v1852 = vpop.permute.xlu0 %1851
  %1854 = vst.msk [vmem:[#allocation3 + $0x14] sm:$0xf] %vm1831, %v1852
  %v1855 = vld [vmem:[#allocation2 + $0x20] sm:$0xff]
  %v1856 = vld [vmem:[#allocation2 + $0x28] sm:$0xff]
  %v1857 = vmax.f32 %v1855, %v1856
  %v1859 = vrot.slane %v1857, 1
  %v1861 = vmax.f32 %v1857, %v1859
  %v1863 = vrot.slane %v1861, 1
  %v1865 = vrot.slane %v1861, 2
  %v1867 = vrot.slane %v1861, 3
  %v1869 = vsel %vm1822, %v1861, %v1863
  %v1870 = vsel %vm996, %v1869, %v1865
  %v1871 = vsel %vm1825, %v1870, %v1867
  %1873 = vrot.lane.b32.xlu0 %v1871, 20
  %v1874 = vpop.permute.xlu0 %1873
  %1876 = vst.msk [vmem:[#allocation3 + $0x1a] sm:$0xf] %vm1831, %v1874
  %v1877 = vld [vmem:[#allocation2 + $0x30] sm:$0xff]
  %v1878 = vld [vmem:[#allocation2 + $0x38] sm:$0xff]
  %v1879 = vmax.f32 %v1877, %v1878
  %v1881 = vrot.slane %v1879, 1
  %v1883 = vmax.f32 %v1879, %v1881
  %v1885 = vrot.slane %v1883, 1
  %v1887 = vrot.slane %v1883, 2
  %v1889 = vrot.slane %v1883, 3
  %v1891 = vsel %vm1822, %v1883, %v1885
  %v1892 = vsel %vm996, %v1891, %v1887
  %v1893 = vsel %vm1825, %v1892, %v1889
  %1895 = vrot.lane.b32.xlu0 %v1893, 20
  %v1896 = vpop.permute.xlu0 %1895
  %1898 = vst.msk [vmem:[#allocation3 + $0x20] sm:$0xf] %vm1831, %v1896
  %v1899 = vld [vmem:[#allocation2 + $0x40] sm:$0xff]
  %v1900 = vld [vmem:[#allocation2 + $0x48] sm:$0xff]
  %v1901 = vmax.f32 %v1899, %v1900
  %v1903 = vrot.slane %v1901, 1
  %v1905 = vmax.f32 %v1901, %v1903
  %v1907 = vrot.slane %v1905, 1
  %v1909 = vrot.slane %v1905, 2
  %v1911 = vrot.slane %v1905, 3
  %v1913 = vsel %vm1822, %v1905, %v1907
  %v1914 = vsel %vm996, %v1913, %v1909
  %v1915 = vsel %vm1825, %v1914, %v1911
  %1917 = vrot.lane.b32.xlu0 %v1915, 20
  %v1918 = vpop.permute.xlu0 %1917
  %1920 = vst.msk [vmem:[#allocation3 + $0x32] sm:$0xf] %vm1831, %v1918
  %v1921 = vld [vmem:[#allocation2 + $0x50] sm:$0xff]
  %v1922 = vld [vmem:[#allocation2 + $0x58] sm:$0xff]
  %v1923 = vmax.f32 %v1921, %v1922
  %v1925 = vrot.slane %v1923, 1
  %v1927 = vmax.f32 %v1923, %v1925
  %v1929 = vrot.slane %v1927, 1
  %v1931 = vrot.slane %v1927, 2
  %v1933 = vrot.slane %v1927, 3
  %v1935 = vsel %vm1822, %v1927, %v1929
  %v1936 = vsel %vm996, %v1935, %v1931
  %v1937 = vsel %vm1825, %v1936, %v1933
  %1939 = vrot.lane.b32.xlu0 %v1937, 20
  %v1940 = vpop.permute.xlu0 %1939
  %1942 = vst.msk [vmem:[#allocation3 + $0x38] sm:$0xf] %vm1831, %v1940
  %v1943 = vld [vmem:[#allocation2 + $0x60] sm:$0xff]
  %v1944 = vld [vmem:[#allocation2 + $0x68] sm:$0xff]
  %v1945 = vmax.f32 %v1943, %v1944
  %v1947 = vrot.slane %v1945, 1
  %v1949 = vmax.f32 %v1945, %v1947
  %v1951 = vrot.slane %v1949, 1
  %v1953 = vrot.slane %v1949, 2
  %v1955 = vrot.slane %v1949, 3
  %v1957 = vsel %vm1822, %v1949, %v1951
  %v1958 = vsel %vm996, %v1957, %v1953
  %v1959 = vsel %vm1825, %v1958, %v1955
  %1961 = vrot.lane.b32.xlu0 %v1959, 20
  %v1962 = vpop.permute.xlu0 %1961
  %1964 = vst.msk [vmem:[#allocation3 + $0x3e] sm:$0xf] %vm1831, %v1962
  %v1965 = vld [vmem:[#allocation2 + $0x70] sm:$0xff]
  %v1966 = vld [vmem:[#allocation2 + $0x78] sm:$0xff]
  %v1967 = vmax.f32 %v1965, %v1966
  %v1969 = vrot.slane %v1967, 1
  %v1971 = vmax.f32 %v1967, %v1969
  %v1973 = vrot.slane %v1971, 1
  %v1975 = vrot.slane %v1971, 2
  %v1977 = vrot.slane %v1971, 3
  %v1979 = vsel %vm1822, %v1971, %v1973
  %v1980 = vsel %vm996, %v1979, %v1975
  %v1981 = vsel %vm1825, %v1980, %v1977
  %1983 = vrot.lane.b32.xlu0 %v1981, 20
  %v1984 = vpop.permute.xlu0 %1983
  %1986 = vst.msk [vmem:[#allocation3 + $0x44] sm:$0xf] %vm1831, %v1984
  %s1987 = smul.u32 9, 120
  %s1988 = smul.u32 %s1987, 1
  %s1989 = sshll.u32 %s1988, 4
  %1990 = dma.done [#allocation9], %s1989
  %v1991 = vld [vmem:[#allocation3] sm:$0xff]
  %v1992 = vld [vmem:[#allocation3 + $0x8] sm:$0xff]
  %v1993 = vld [vmem:[#allocation3 + $0x10] sm:$0xff]
  %v1994 = vld [vmem:[#allocation3 + $0x18] sm:$0xff]
  %v1995 = vld [vmem:[#allocation3 + $0x20] sm:$0xff]
  %v1996 = vld [vmem:[#allocation3 + $0x28] sm:$0xff]
  %v1997 = vld [vmem:[#allocation3 + $0x30] sm:$0xff]
  %v1998 = vld [vmem:[#allocation3 + $0x38] sm:$0xff]
  %v1999 = vld [vmem:[#allocation3 + $0x40] sm:$0xff]
  %v2000 = vld [vmem:[#allocation5] sm:$0xff]
  %v2001 = vld [vmem:[#allocation5 + $0x8] sm:$0xff]
  %v2002 = vld [vmem:[#allocation5 + $0x10] sm:$0xff]
  %v2003 = vld [vmem:[#allocation5 + $0x18] sm:$0xff]
  %v2004 = vld [vmem:[#allocation5 + $0x20] sm:$0xff]
  %v2005 = vld [vmem:[#allocation5 + $0x28] sm:$0xff]
  %v2006 = vld [vmem:[#allocation5 + $0x30] sm:$0xff]
  %v2007 = vld [vmem:[#allocation5 + $0x38] sm:$0xff]
  %v2008 = vld [vmem:[#allocation5 + $0x40] sm:$0xff]
  %v2009 = vld [vmem:[#allocation5 + $0x48] sm:$0xff]
  %v2010 = vld [vmem:[#allocation5 + $0x50] sm:$0xff]
  %v2011 = vld [vmem:[#allocation5 + $0x58] sm:$0xff]
  %v2012 = vld [vmem:[#allocation5 + $0x60] sm:$0xff]
  %v2013 = vld [vmem:[#allocation5 + $0x68] sm:$0xff]
  %v2014 = vld [vmem:[#allocation5 + $0x70] sm:$0xff]
  %v2015 = vld [vmem:[#allocation3 + $0x1] sm:$0xff]
  %v2016 = vld [vmem:[#allocation3 + $0x9] sm:$0xff]
  %v2017 = vld [vmem:[#allocation3 + $0x11] sm:$0xff]
  %v2018 = vld [vmem:[#allocation3 + $0x19] sm:$0xff]
  %v2019 = vld [vmem:[#allocation3 + $0x21] sm:$0xff]
  %v2020 = vld [vmem:[#allocation3 + $0x29] sm:$0xff]
  %v2021 = vld [vmem:[#allocation3 + $0x31] sm:$0xff]
  %v2022 = vld [vmem:[#allocation3 + $0x39] sm:$0xff]
  %v2023 = vld [vmem:[#allocation3 + $0x41] sm:$0xff]
  %s2024 = scalar_lea.vmem [#allocation5], 120
  %v2025 = vld [vmem:[%s2024] sm:$0xff]
  %v2026 = vld [vmem:[%s2024 + $0x8] sm:$0xff]
  %v2027 = vld [vmem:[%s2024 + $0x10] sm:$0xff]
  %v2028 = vld [vmem:[%s2024 + $0x18] sm:$0xff]
  %v2029 = vld [vmem:[%s2024 + $0x20] sm:$0xff]
  %v2030 = vld [vmem:[%s2024 + $0x28] sm:$0xff]
  %v2031 = vld [vmem:[%s2024 + $0x30] sm:$0xff]
  %v2032 = vld [vmem:[%s2024 + $0x38] sm:$0xff]
  %v2033 = vld [vmem:[%s2024 + $0x40] sm:$0xff]
  %v2034 = vld [vmem:[%s2024 + $0x48] sm:$0xff]
  %v2035 = vld [vmem:[%s2024 + $0x50] sm:$0xff]
  %v2036 = vld [vmem:[%s2024 + $0x58] sm:$0xff]
  %v2037 = vld [vmem:[%s2024 + $0x60] sm:$0xff]
  %v2038 = vld [vmem:[%s2024 + $0x68] sm:$0xff]
  %v2039 = vld [vmem:[%s2024 + $0x70] sm:$0xff]
  %v2041 = vsel %vm914, %v2015, 0
  %v2044 = vsel %vm914, %v2016, 0
  %v2047 = vsel %vm914, %v2017, 0
  %v2050 = vsel %vm914, %v2018, 0
  %v2053 = vsel %vm914, %v2019, 0
  %v2056 = vsel %vm914, %v2020, 0
  %v2059 = vsel %vm914, %v2021, 0
  %v2062 = vsel %vm914, %v2022, 0
  %v2065 = vsel %vm914, %v2023, 0
  %2067 = vmatprep.subr.mxu0 0.0
  %2068 = vmatpush1.msra.mxu0 %v2025
  %2069 = vmatprep.subr.mxu0 0.0
  %2070 = vmatpush1.msra.mxu0 %v2026
  %2071 = vmatprep.subr.mxu0 0.0
  %2072 = vmatpush1.msra.mxu0 %v2027
  %2073 = vmatprep.subr.mxu0 0.0
  %2074 = vmatpush1.msra.mxu0 %v2028
  %2075 = vmatprep.subr.mxu0 0.0
  %2076 = vmatpush1.msra.mxu0 %v2029
  %2077 = vmatprep.subr.mxu0 0.0
  %2078 = vmatpush1.msra.mxu0 %v2030
  %2079 = vmatprep.subr.mxu0 0.0
  %2080 = vmatpush1.msra.mxu0 %v2031
  %2081 = vmatprep.subr.mxu0 0.0
  %2082 = vmatpush1.msra.mxu0 %v2032
  %2083 = vmatprep.subr.mxu0 0.0
  %2084 = vmatpush1.msra.mxu0 %v2033
  %2085 = vmatprep.subr.mxu0 0.0
  %2086 = vmatpush1.msra.mxu0 %v2034
  %2087 = vmatprep.subr.mxu0 0.0
  %2088 = vmatpush1.msra.mxu0 %v2035
  %2089 = vmatprep.subr.mxu0 0.0
  %2090 = vmatpush1.msra.mxu0 %v2036
  %2091 = vmatprep.subr.mxu0 0.0
  %2092 = vmatpush1.msra.mxu0 %v2037
  %2093 = vmatprep.subr.mxu0 0.0
  %2094 = vmatpush1.msra.mxu0 %v2038
  %2095 = vmatprep.subr.mxu0 0.0
  %2096 = vmatpush1.msra.mxu0 %v2039
  %2097 = vmatprep.subr.mxu0 0.0
  %2098 = vmatpush1.msra.mxu0 0.0
  %2099 = vmatprep.subr.mxu0 0.0
  %2100 = vmatpush1.msra.mxu0 0.0
  %2101 = vmatprep.subr.mxu0 0.0
  %2102 = vmatpush1.msra.mxu0 0.0
  %2103 = vmatprep.subr.mxu0 0.0
  %2104 = vmatpush1.msra.mxu0 0.0
  %2105 = vmatprep.subr.mxu0 0.0
  %2106 = vmatpush1.msra.mxu0 0.0
  %2107 = vmatprep.subr.mxu0 0.0
  %2108 = vmatpush1.msra.mxu0 0.0
  %2109 = vmatprep.subr.mxu0 0.0
  %2110 = vmatpush1.msra.mxu0 0.0
  %2111 = vmatprep.subr.mxu0 0.0
  %2112 = vmatpush1.msra.mxu0 0.0
  %2113 = vmatprep.subr.mxu0 0.0
  %2114 = vmatpush1.msra.mxu0 0.0
  %2115 = vmatprep.subr.mxu0 0.0
  %2116 = vmatpush1.msra.mxu0 0.0
  %2117 = vmatprep.subr.mxu0 0.0
  %2118 = vmatpush1.msra.mxu0 0.0
  %2119 = vmatprep.subr.mxu0 0.0
  %2120 = vmatpush1.msra.mxu0 0.0
  %2121 = vmatprep.subr.mxu0 0.0
  %2122 = vmatpush1.msra.mxu0 0.0
  %2123 = vmatprep.subr.mxu0 0.0
  %2124 = vmatpush1.msra.mxu0 0.0
  %2125 = vmatprep.subr.mxu0 0.0
  %2126 = vmatpush1.msra.mxu0 0.0
  %2127 = vmatprep.subr.mxu0 0.0
  %2128 = vmatpush1.msra.mxu0 0.0
  %2129 = vmatprep.subr.mxu0 0.0
  %2130 = vmatpush1.msra.mxu0 0.0
  %2131 = vmatprep.mubr.f32.mxu0 0.0
  %2132 = vmatmul.mubr.f32.gmra.mrb[0].mxu0 %v2041
  %v2133 = vpop.f32.mrb[0].mxu0
  %v2134 = vadd.f32 0.0, %v2133
  %v2135 = vpop.f32.mrb[0].mxu0
  %2136 = vmatprep.mubr.f32.mxu0 0.0
  %2137 = vmatmul.mubr.f32.gmra.mrb[0].mxu0 %v2044
  %v2138 = vpop.f32.mrb[0].mxu0
  %v2139 = vadd.f32 0.0, %v2138
  %v2140 = vpop.f32.mrb[0].mxu0
  %2141 = vmatprep.mubr.f32.mxu0 0.0
  %2142 = vmatmul.mubr.f32.gmra.mrb[0].mxu0 %v2047
  %v2143 = vpop.f32.mrb[0].mxu0
  %v2144 = vadd.f32 0.0, %v2143
  %v2145 = vpop.f32.mrb[0].mxu0
  %2146 = vmatprep.mubr.f32.mxu0 0.0
  %2147 = vmatmul.mubr.f32.gmra.mrb[0].mxu0 %v2050
  %v2148 = vpop.f32.mrb[0].mxu0
  %v2149 = vadd.f32 0.0, %v2148
  %v2150 = vpop.f32.mrb[0].mxu0
  %2151 = vmatprep.mubr.f32.mxu0 0.0
  %2152 = vmatmul.mubr.f32.gmra.mrb[0].mxu0 %v2053
  %v2153 = vpop.f32.mrb[0].mxu0
  %v2154 = vadd.f32 0.0, %v2153
  %v2155 = vpop.f32.mrb[0].mxu0
  %2156 = vmatprep.mubr.f32.mxu0 0.0
  %2157 = vmatmul.mubr.f32.gmra.mrb[0].mxu0 %v2056
  %v2158 = vpop.f32.mrb[0].mxu0
  %v2159 = vadd.f32 0.0, %v2158
  %v2160 = vpop.f32.mrb[0].mxu0
  %2161 = vmatprep.mubr.f32.mxu0 0.0
  %2162 = vmatmul.mubr.f32.gmra.mrb[0].mxu0 %v2059
  %v2163 = vpop.f32.mrb[0].mxu0
  %v2164 = vadd.f32 0.0, %v2163
  %v2165 = vpop.f32.mrb[0].mxu0
  %2166 = vmatprep.mubr.f32.mxu0 0.0
  %2167 = vmatmul.mubr.f32.gmra.mrb[0].mxu0 %v2062
  %v2168 = vpop.f32.mrb[0].mxu0
  %v2169 = vadd.f32 0.0, %v2168
  %v2170 = vpop.f32.mrb[0].mxu0
  %2171 = vmatprep.mubr.f32.mxu0 0.0
  %2172 = vmatmul.mubr.f32.gmra.mrb[0].mxu0 %v2065
  %v2173 = vpop.f32.mrb[0].mxu0
  %v2174 = vadd.f32 0.0, %v2173
  %v2175 = vpop.f32.mrb[0].mxu0
  %2176 = vdwg.mxu0
  %v2178 = vsel %vm914, %v1991, 0
  %v2181 = vsel %vm914, %v1992, 0
  %v2184 = vsel %vm914, %v1993, 0
  %v2187 = vsel %vm914, %v1994, 0
  %v2190 = vsel %vm914, %v1995, 0
  %v2193 = vsel %vm914, %v1996, 0
  %v2196 = vsel %vm914, %v1997, 0
  %v2199 = vsel %vm914, %v1998, 0
  %v2202 = vsel %vm914, %v1999, 0
  %2204 = vmatprep.subr.mxu0 0.0
  %2205 = vmatpush1.msra.mxu0 %v2000
  %2206 = vmatprep.subr.mxu0 0.0
  %2207 = vmatpush1.msra.mxu0 %v2001
  %2208 = vmatprep.subr.mxu0 0.0
  %2209 = vmatpush1.msra.mxu0 %v2002
  %2210 = vmatprep.subr.mxu0 0.0
  %2211 = vmatpush1.msra.mxu0 %v2003
  %2212 = vmatprep.subr.mxu0 0.0
  %2213 = vmatpush1.msra.mxu0 %v2004
  %2214 = vmatprep.subr.mxu0 0.0
  %2215 = vmatpush1.msra.mxu0 %v2005
  %2216 = vmatprep.subr.mxu0 0.0
  %2217 = vmatpush1.msra.mxu0 %v2006
  %2218 = vmatprep.subr.mxu0 0.0
  %2219 = vmatpush1.msra.mxu0 %v2007
  %2220 = vmatprep.subr.mxu0 0.0
  %2221 = vmatpush1.msra.mxu0 %v2008
  %2222 = vmatprep.subr.mxu0 0.0
  %2223 = vmatpush1.msra.mxu0 %v2009
  %2224 = vmatprep.subr.mxu0 0.0
  %2225 = vmatpush1.msra.mxu0 %v2010
  %2226 = vmatprep.subr.mxu0 0.0
  %2227 = vmatpush1.msra.mxu0 %v2011
  %2228 = vmatprep.subr.mxu0 0.0
  %2229 = vmatpush1.msra.mxu0 %v2012
  %2230 = vmatprep.subr.mxu0 0.0
  %2231 = vmatpush1.msra.mxu0 %v2013
  %2232 = vmatprep.subr.mxu0 0.0
  %2233 = vmatpush1.msra.mxu0 %v2014
  %2234 = vmatprep.subr.mxu0 0.0
  %2235 = vmatpush1.msra.mxu0 0.0
  %2236 = vmatprep.subr.mxu0 0.0
  %2237 = vmatpush1.msra.mxu0 0.0
  %2238 = vmatprep.subr.mxu0 0.0
  %2239 = vmatpush1.msra.mxu0 0.0
  %2240 = vmatprep.subr.mxu0 0.0
  %2241 = vmatpush1.msra.mxu0 0.0
  %2242 = vmatprep.subr.mxu0 0.0
  %2243 = vmatpush1.msra.mxu0 0.0
  %2244 = vmatprep.subr.mxu0 0.0
  %2245 = vmatpush1.msra.mxu0 0.0
  %2246 = vmatprep.subr.mxu0 0.0
  %2247 = vmatpush1.msra.mxu0 0.0
  %2248 = vmatprep.subr.mxu0 0.0
  %2249 = vmatpush1.msra.mxu0 0.0
  %2250 = vmatprep.subr.mxu0 0.0
  %2251 = vmatpush1.msra.mxu0 0.0
  %2252 = vmatprep.subr.mxu0 0.0
  %2253 = vmatpush1.msra.mxu0 0.0
  %2254 = vmatprep.subr.mxu0 0.0
  %2255 = vmatpush1.msra.mxu0 0.0
  %2256 = vmatprep.subr.mxu0 0.0
  %2257 = vmatpush1.msra.mxu0 0.0
  %2258 = vmatprep.subr.mxu0 0.0
  %2259 = vmatpush1.msra.mxu0 0.0
  %2260 = vmatprep.subr.mxu0 0.0
  %2261 = vmatpush1.msra.mxu0 0.0
  %2262 = vmatprep.subr.mxu0 0.0
  %2263 = vmatpush1.msra.mxu0 0.0
  %2264 = vmatprep.subr.mxu0 0.0
  %2265 = vmatpush1.msra.mxu0 0.0
  %2266 = vmatprep.subr.mxu0 0.0
  %2267 = vmatpush1.msra.mxu0 0.0
  %2268 = vmatprep.mubr.f32.mxu0 0.0
  %2269 = vmatmul.mubr.f32.gmra.mrb[0].mxu0 %v2178
  %v2270 = vpop.f32.mrb[0].mxu0
  %v2271 = vadd.f32 %v2134, %v2270
  %v2272 = vpop.f32.mrb[0].mxu0
  %2273 = vmatprep.mubr.f32.mxu0 0.0
  %2274 = vmatmul.mubr.f32.gmra.mrb[0].mxu0 %v2181
  %v2275 = vpop.f32.mrb[0].mxu0
  %v2276 = vadd.f32 %v2139, %v2275
  %v2277 = vpop.f32.mrb[0].mxu0
  %2278 = vmatprep.mubr.f32.mxu0 0.0
  %2279 = vmatmul.mubr.f32.gmra.mrb[0].mxu0 %v2184
  %v2280 = vpop.f32.mrb[0].mxu0
  %v2281 = vadd.f32 %v2144, %v2280
  %v2282 = vpop.f32.mrb[0].mxu0
  %2283 = vmatprep.mubr.f32.mxu0 0.0
  %2284 = vmatmul.mubr.f32.gmra.mrb[0].mxu0 %v2187
  %v2285 = vpop.f32.mrb[0].mxu0
  %v2286 = vadd.f32 %v2149, %v2285
  %v2287 = vpop.f32.mrb[0].mxu0
  %2288 = vmatprep.mubr.f32.mxu0 0.0
  %2289 = vmatmul.mubr.f32.gmra.mrb[0].mxu0 %v2190
  %v2290 = vpop.f32.mrb[0].mxu0
  %v2291 = vadd.f32 %v2154, %v2290
  %v2292 = vpop.f32.mrb[0].mxu0
  %2293 = vmatprep.mubr.f32.mxu0 0.0
  %2294 = vmatmul.mubr.f32.gmra.mrb[0].mxu0 %v2193
  %v2295 = vpop.f32.mrb[0].mxu0
  %v2296 = vadd.f32 %v2159, %v2295
  %v2297 = vpop.f32.mrb[0].mxu0
  %2298 = vmatprep.mubr.f32.mxu0 0.0
  %2299 = vmatmul.mubr.f32.gmra.mrb[0].mxu0 %v2196
  %v2300 = vpop.f32.mrb[0].mxu0
  %v2301 = vadd.f32 %v2164, %v2300
  %v2302 = vpop.f32.mrb[0].mxu0
  %2303 = vmatprep.mubr.f32.mxu0 0.0
  %2304 = vmatmul.mubr.f32.gmra.mrb[0].mxu0 %v2199
  %v2305 = vpop.f32.mrb[0].mxu0
  %v2306 = vadd.f32 %v2169, %v2305
  %v2307 = vpop.f32.mrb[0].mxu0
  %2308 = vmatprep.mubr.f32.mxu0 0.0
  %2309 = vmatmul.mubr.f32.gmra.mrb[0].mxu0 %v2202
  %v2310 = vpop.f32.mrb[0].mxu0
  %v2311 = vadd.f32 %v2174, %v2310
  %v2312 = vpop.f32.mrb[0].mxu0
  %2313 = vdwg.mxu0
  %v2314 = vld [vmem:[#allocation3 + $0x2] sm:$0xff]
  %v2315 = vld [vmem:[#allocation3 + $0xa] sm:$0xff]
  %v2316 = vld [vmem:[#allocation3 + $0x12] sm:$0xff]
  %v2317 = vld [vmem:[#allocation3 + $0x1a] sm:$0xff]
  %v2318 = vld [vmem:[#allocation3 + $0x22] sm:$0xff]
  %v2319 = vld [vmem:[#allocation3 + $0x2a] sm:$0xff]
  %v2320 = vld [vmem:[#allocation3 + $0x32] sm:$0xff]
  %v2321 = vld [vmem:[#allocation3 + $0x3a] sm:$0xff]
  %v2322 = vld [vmem:[#allocation3 + $0x42] sm:$0xff]
  %s2323 = scalar_lea.vmem [#allocation5], 240
  %v2324 = vld [vmem:[%s2323] sm:$0xff]
  %v2325 = vld [vmem:[%s2323 + $0x8] sm:$0xff]
  %v2326 = vld [vmem:[%s2323 + $0x10] sm:$0xff]
  %v2327 = vld [vmem:[%s2323 + $0x18] sm:$0xff]
  %v2328 = vld [vmem:[%s2323 + $0x20] sm:$0xff]
  %v2329 = vld [vmem:[%s2323 + $0x28] sm:$0xff]
  %v2330 = vld [vmem:[%s2323 + $0x30] sm:$0xff]
  %v2331 = vld [vmem:[%s2323 + $0x38] sm:$0xff]
  %v2332 = vld [vmem:[%s2323 + $0x40] sm:$0xff]
  %v2333 = vld [vmem:[%s2323 + $0x48] sm:$0xff]
  %v2334 = vld [vmem:[%s2323 + $0x50] sm:$0xff]
  %v2335 = vld [vmem:[%s2323 + $0x58] sm:$0xff]
  %v2336 = vld [vmem:[%s2323 + $0x60] sm:$0xff]
  %v2337 = vld [vmem:[%s2323 + $0x68] sm:$0xff]
  %v2338 = vld [vmem:[%s2323 + $0x70] sm:$0xff]
  %v2340 = vsel %vm914, %v2314, 0
  %v2343 = vsel %vm914, %v2315, 0
  %v2346 = vsel %vm914, %v2316, 0
  %v2349 = vsel %vm914, %v2317, 0
  %v2352 = vsel %vm914, %v2318, 0
  %v2355 = vsel %vm914, %v2319, 0
  %v2358 = vsel %vm914, %v2320, 0
  %v2361 = vsel %vm914, %v2321, 0
  %v2364 = vsel %vm914, %v2322, 0
  %2366 = vmatprep.subr.mxu0 0.0
  %2367 = vmatpush1.msra.mxu0 %v2324
  %2368 = vmatprep.subr.mxu0 0.0
  %2369 = vmatpush1.msra.mxu0 %v2325
  %2370 = vmatprep.subr.mxu0 0.0
  %2371 = vmatpush1.msra.mxu0 %v2326
  %2372 = vmatprep.subr.mxu0 0.0
  %2373 = vmatpush1.msra.mxu0 %v2327
  %2374 = vmatprep.subr.mxu0 0.0
  %2375 = vmatpush1.msra.mxu0 %v2328
  %2376 = vmatprep.subr.mxu0 0.0
  %2377 = vmatpush1.msra.mxu0 %v2329
  %2378 = vmatprep.subr.mxu0 0.0
  %2379 = vmatpush1.msra.mxu0 %v2330
  %2380 = vmatprep.subr.mxu0 0.0
  %2381 = vmatpush1.msra.mxu0 %v2331
  %2382 = vmatprep.subr.mxu0 0.0
  %2383 = vmatpush1.msra.mxu0 %v2332
  %2384 = vmatprep.subr.mxu0 0.0
  %2385 = vmatpush1.msra.mxu0 %v2333
  %2386 = vmatprep.subr.mxu0 0.0
  %2387 = vmatpush1.msra.mxu0 %v2334
  %2388 = vmatprep.subr.mxu0 0.0
  %2389 = vmatpush1.msra.mxu0 %v2335
  %2390 = vmatprep.subr.mxu0 0.0
  %2391 = vmatpush1.msra.mxu0 %v2336
  %2392 = vmatprep.subr.mxu0 0.0
  %2393 = vmatpush1.msra.mxu0 %v2337
  %2394 = vmatprep.subr.mxu0 0.0
  %2395 = vmatpush1.msra.mxu0 %v2338
  %2396 = vmatprep.subr.mxu0 0.0
  %2397 = vmatpush1.msra.mxu0 0.0
  %2398 = vmatprep.subr.mxu0 0.0
  %2399 = vmatpush1.msra.mxu0 0.0
  %2400 = vmatprep.subr.mxu0 0.0
  %2401 = vmatpush1.msra.mxu0 0.0
  %2402 = vmatprep.subr.mxu0 0.0
  %2403 = vmatpush1.msra.mxu0 0.0
  %2404 = vmatprep.subr.mxu0 0.0
  %2405 = vmatpush1.msra.mxu0 0.0
  %2406 = vmatprep.subr.mxu0 0.0
  %2407 = vmatpush1.msra.mxu0 0.0
  %2408 = vmatprep.subr.mxu0 0.0
  %2409 = vmatpush1.msra.mxu0 0.0
  %2410 = vmatprep.subr.mxu0 0.0
  %2411 = vmatpush1.msra.mxu0 0.0
  %2412 = vmatprep.subr.mxu0 0.0
  %2413 = vmatpush1.msra.mxu0 0.0
  %2414 = vmatprep.subr.mxu0 0.0
  %2415 = vmatpush1.msra.mxu0 0.0
  %2416 = vmatprep.subr.mxu0 0.0
  %2417 = vmatpush1.msra.mxu0 0.0
  %2418 = vmatprep.subr.mxu0 0.0
  %2419 = vmatpush1.msra.mxu0 0.0
  %2420 = vmatprep.subr.mxu0 0.0
  %2421 = vmatpush1.msra.mxu0 0.0
  %2422 = vmatprep.subr.mxu0 0.0
  %2423 = vmatpush1.msra.mxu0 0.0
  %2424 = vmatprep.subr.mxu0 0.0
  %2425 = vmatpush1.msra.mxu0 0.0
  %2426 = vmatprep.subr.mxu0 0.0
  %2427 = vmatpush1.msra.mxu0 0.0
  %2428 = vmatprep.subr.mxu0 0.0
  %2429 = vmatpush1.msra.mxu0 0.0
  %2430 = vmatprep.mubr.f32.mxu0 0.0
  %2431 = vmatmul.mubr.f32.gmra.mrb[0].mxu0 %v2340
  %v2432 = vpop.f32.mrb[0].mxu0
  %v2433 = vadd.f32 0.0, %v2432
  %v2434 = vpop.f32.mrb[0].mxu0
  %2435 = vmatprep.mubr.f32.mxu0 0.0
  %2436 = vmatmul.mubr.f32.gmra.mrb[0].mxu0 %v2343
  %v2437 = vpop.f32.mrb[0].mxu0
  %v2438 = vadd.f32 0.0, %v2437
  %v2439 = vpop.f32.mrb[0].mxu0
  %2440 = vmatprep.mubr.f32.mxu0 0.0
  %2441 = vmatmul.mubr.f32.gmra.mrb[0].mxu0 %v2346
  %v2442 = vpop.f32.mrb[0].mxu0
  %v2443 = vadd.f32 0.0, %v2442
  %v2444 = vpop.f32.mrb[0].mxu0
  %2445 = vmatprep.mubr.f32.mxu0 0.0
  %2446 = vmatmul.mubr.f32.gmra.mrb[0].mxu0 %v2349
  %v2447 = vpop.f32.mrb[0].mxu0
  %v2448 = vadd.f32 0.0, %v2447
  %v2449 = vpop.f32.mrb[0].mxu0
  %2450 = vmatprep.mubr.f32.mxu0 0.0
  %2451 = vmatmul.mubr.f32.gmra.mrb[0].mxu0 %v2352
  %v2452 = vpop.f32.mrb[0].mxu0
  %v2453 = vadd.f32 0.0, %v2452
  %v2454 = vpop.f32.mrb[0].mxu0
  %2455 = vmatprep.mubr.f32.mxu0 0.0
  %2456 = vmatmul.mubr.f32.gmra.mrb[0].mxu0 %v2355
  %v2457 = vpop.f32.mrb[0].mxu0
  %v2458 = vadd.f32 0.0, %v2457
  %v2459 = vpop.f32.mrb[0].mxu0
  %2460 = vmatprep.mubr.f32.mxu0 0.0
  %2461 = vmatmul.mubr.f32.gmra.mrb[0].mxu0 %v2358
  %v2462 = vpop.f32.mrb[0].mxu0
  %v2463 = vadd.f32 0.0, %v2462
  %v2464 = vpop.f32.mrb[0].mxu0
  %2465 = vmatprep.mubr.f32.mxu0 0.0
  %2466 = vmatmul.mubr.f32.gmra.mrb[0].mxu0 %v2361
  %v2467 = vpop.f32.mrb[0].mxu0
  %v2468 = vadd.f32 0.0, %v2467
  %v2469 = vpop.f32.mrb[0].mxu0
  %2470 = vmatprep.mubr.f32.mxu0 0.0
  %2471 = vmatmul.mubr.f32.gmra.mrb[0].mxu0 %v2364
  %v2472 = vpop.f32.mrb[0].mxu0
  %v2473 = vadd.f32 0.0, %v2472
  %v2474 = vpop.f32.mrb[0].mxu0
  %2475 = vdwg.mxu0
  %v2476 = vadd.f32 %v2271, %v2433
  %v2477 = vadd.f32 %v2276, %v2438
  %v2478 = vadd.f32 %v2281, %v2443
  %v2479 = vadd.f32 %v2286, %v2448
  %v2480 = vadd.f32 %v2291, %v2453
  %v2481 = vadd.f32 %v2296, %v2458
  %v2482 = vadd.f32 %v2301, %v2463
  %v2483 = vadd.f32 %v2306, %v2468
  %v2484 = vadd.f32 %v2311, %v2473
  %v2485 = vld [vmem:[#allocation3 + $0x6] sm:$0xff]
  %v2486 = vld [vmem:[#allocation3 + $0xe] sm:$0xff]
  %v2487 = vld [vmem:[#allocation3 + $0x16] sm:$0xff]
  %v2488 = vld [vmem:[#allocation3 + $0x1e] sm:$0xff]
  %v2489 = vld [vmem:[#allocation3 + $0x26] sm:$0xff]
  %v2490 = vld [vmem:[#allocation3 + $0x2e] sm:$0xff]
  %v2491 = vld [vmem:[#allocation3 + $0x36] sm:$0xff]
  %v2492 = vld [vmem:[#allocation3 + $0x3e] sm:$0xff]
  %v2493 = vld [vmem:[#allocation3 + $0x46] sm:$0xff]
  %s2494 = scalar_lea.vmem [#allocation5], 360
  %v2495 = vld [vmem:[%s2494] sm:$0xff]
  %v2496 = vld [vmem:[%s2494 + $0x8] sm:$0xff]
  %v2497 = vld [vmem:[%s2494 + $0x10] sm:$0xff]
  %v2498 = vld [vmem:[%s2494 + $0x18] sm:$0xff]
  %v2499 = vld [vmem:[%s2494 + $0x20] sm:$0xff]
  %v2500 = vld [vmem:[%s2494 + $0x28] sm:$0xff]
  %v2501 = vld [vmem:[%s2494 + $0x30] sm:$0xff]
  %v2502 = vld [vmem:[%s2494 + $0x38] sm:$0xff]
  %v2503 = vld [vmem:[%s2494 + $0x40] sm:$0xff]
  %v2504 = vld [vmem:[%s2494 + $0x48] sm:$0xff]
  %v2505 = vld [vmem:[%s2494 + $0x50] sm:$0xff]
  %v2506 = vld [vmem:[%s2494 + $0x58] sm:$0xff]
  %v2507 = vld [vmem:[%s2494 + $0x60] sm:$0xff]
  %v2508 = vld [vmem:[%s2494 + $0x68] sm:$0xff]
  %v2509 = vld [vmem:[%s2494 + $0x70] sm:$0xff]
  %v2511 = vsel %vm914, %v2485, 0
  %v2514 = vsel %vm914, %v2486, 0
  %v2517 = vsel %vm914, %v2487, 0
  %v2520 = vsel %vm914, %v2488, 0
  %v2523 = vsel %vm914, %v2489, 0
  %v2526 = vsel %vm914, %v2490, 0
  %v2529 = vsel %vm914, %v2491, 0
  %v2532 = vsel %vm914, %v2492, 0
  %v2535 = vsel %vm914, %v2493, 0
  %2537 = vmatprep.subr.mxu0 0.0
  %2538 = vmatpush1.msra.mxu0 %v2495
  %2539 = vmatprep.subr.mxu0 0.0
  %2540 = vmatpush1.msra.mxu0 %v2496
  %2541 = vmatprep.subr.mxu0 0.0
  %2542 = vmatpush1.msra.mxu0 %v2497
  %2543 = vmatprep.subr.mxu0 0.0
  %2544 = vmatpush1.msra.mxu0 %v2498
  %2545 = vmatprep.subr.mxu0 0.0
  %2546 = vmatpush1.msra.mxu0 %v2499
  %2547 = vmatprep.subr.mxu0 0.0
  %2548 = vmatpush1.msra.mxu0 %v2500
  %2549 = vmatprep.subr.mxu0 0.0
  %2550 = vmatpush1.msra.mxu0 %v2501
  %2551 = vmatprep.subr.mxu0 0.0
  %2552 = vmatpush1.msra.mxu0 %v2502
  %2553 = vmatprep.subr.mxu0 0.0
  %2554 = vmatpush1.msra.mxu0 %v2503
  %2555 = vmatprep.subr.mxu0 0.0
  %2556 = vmatpush1.msra.mxu0 %v2504
  %2557 = vmatprep.subr.mxu0 0.0
  %2558 = vmatpush1.msra.mxu0 %v2505
  %2559 = vmatprep.subr.mxu0 0.0
  %2560 = vmatpush1.msra.mxu0 %v2506
  %2561 = vmatprep.subr.mxu0 0.0
  %2562 = vmatpush1.msra.mxu0 %v2507
  %2563 = vmatprep.subr.mxu0 0.0
  %2564 = vmatpush1.msra.mxu0 %v2508
  %2565 = vmatprep.subr.mxu0 0.0
  %2566 = vmatpush1.msra.mxu0 %v2509
  %2567 = vmatprep.subr.mxu0 0.0
  %2568 = vmatpush1.msra.mxu0 0.0
  %2569 = vmatprep.subr.mxu0 0.0
  %2570 = vmatpush1.msra.mxu0 0.0
  %2571 = vmatprep.subr.mxu0 0.0
  %2572 = vmatpush1.msra.mxu0 0.0
  %2573 = vmatprep.subr.mxu0 0.0
  %2574 = vmatpush1.msra.mxu0 0.0
  %2575 = vmatprep.subr.mxu0 0.0
  %2576 = vmatpush1.msra.mxu0 0.0
  %2577 = vmatprep.subr.mxu0 0.0
  %2578 = vmatpush1.msra.mxu0 0.0
  %2579 = vmatprep.subr.mxu0 0.0
  %2580 = vmatpush1.msra.mxu0 0.0
  %2581 = vmatprep.subr.mxu0 0.0
  %2582 = vmatpush1.msra.mxu0 0.0
  %2583 = vmatprep.subr.mxu0 0.0
  %2584 = vmatpush1.msra.mxu0 0.0
  %2585 = vmatprep.subr.mxu0 0.0
  %2586 = vmatpush1.msra.mxu0 0.0
  %2587 = vmatprep.subr.mxu0 0.0
  %2588 = vmatpush1.msra.mxu0 0.0
  %2589 = vmatprep.subr.mxu0 0.0
  %2590 = vmatpush1.msra.mxu0 0.0
  %2591 = vmatprep.subr.mxu0 0.0
  %2592 = vmatpush1.msra.mxu0 0.0
  %2593 = vmatprep.subr.mxu0 0.0
  %2594 = vmatpush1.msra.mxu0 0.0
  %2595 = vmatprep.subr.mxu0 0.0
  %2596 = vmatpush1.msra.mxu0 0.0
  %2597 = vmatprep.subr.mxu0 0.0
  %2598 = vmatpush1.msra.mxu0 0.0
  %2599 = vmatprep.subr.mxu0 0.0
  %2600 = vmatpush1.msra.mxu0 0.0
  %2601 = vmatprep.mubr.f32.mxu0 0.0
  %2602 = vmatmul.mubr.f32.gmra.mrb[0].mxu0 %v2511
  %v2603 = vpop.f32.mrb[0].mxu0
  %v2604 = vadd.f32 0.0, %v2603
  %v2605 = vpop.f32.mrb[0].mxu0
  %2606 = vmatprep.mubr.f32.mxu0 0.0
  %2607 = vmatmul.mubr.f32.gmra.mrb[0].mxu0 %v2514
  %v2608 = vpop.f32.mrb[0].mxu0
  %v2609 = vadd.f32 0.0, %v2608
  %v2610 = vpop.f32.mrb[0].mxu0
  %2611 = vmatprep.mubr.f32.mxu0 0.0
  %2612 = vmatmul.mubr.f32.gmra.mrb[0].mxu0 %v2517
  %v2613 = vpop.f32.mrb[0].mxu0
  %v2614 = vadd.f32 0.0, %v2613
  %v2615 = vpop.f32.mrb[0].mxu0
  %2616 = vmatprep.mubr.f32.mxu0 0.0
  %2617 = vmatmul.mubr.f32.gmra.mrb[0].mxu0 %v2520
  %v2618 = vpop.f32.mrb[0].mxu0
  %v2619 = vadd.f32 0.0, %v2618
  %v2620 = vpop.f32.mrb[0].mxu0
  %2621 = vmatprep.mubr.f32.mxu0 0.0
  %2622 = vmatmul.mubr.f32.gmra.mrb[0].mxu0 %v2523
  %v2623 = vpop.f32.mrb[0].mxu0
  %v2624 = vadd.f32 0.0, %v2623
  %v2625 = vpop.f32.mrb[0].mxu0
  %2626 = vmatprep.mubr.f32.mxu0 0.0
  %2627 = vmatmul.mubr.f32.gmra.mrb[0].mxu0 %v2526
  %v2628 = vpop.f32.mrb[0].mxu0
  %v2629 = vadd.f32 0.0, %v2628
  %v2630 = vpop.f32.mrb[0].mxu0
  %2631 = vmatprep.mubr.f32.mxu0 0.0
  %2632 = vmatmul.mubr.f32.gmra.mrb[0].mxu0 %v2529
  %v2633 = vpop.f32.mrb[0].mxu0
  %v2634 = vadd.f32 0.0, %v2633
  %v2635 = vpop.f32.mrb[0].mxu0
  %2636 = vmatprep.mubr.f32.mxu0 0.0
  %2637 = vmatmul.mubr.f32.gmra.mrb[0].mxu0 %v2532
  %v2638 = vpop.f32.mrb[0].mxu0
  %v2639 = vadd.f32 0.0, %v2638
  %v2640 = vpop.f32.mrb[0].mxu0
  %2641 = vmatprep.mubr.f32.mxu0 0.0
  %2642 = vmatmul.mubr.f32.gmra.mrb[0].mxu0 %v2535
  %v2643 = vpop.f32.mrb[0].mxu0
  %v2644 = vadd.f32 0.0, %v2643
  %v2645 = vpop.f32.mrb[0].mxu0
  %2646 = vdwg.mxu0
  %v2647 = vadd.f32 %v2476, %v2604
  %v2648 = vadd.f32 %v2477, %v2609
  %v2649 = vadd.f32 %v2478, %v2614
  %v2650 = vadd.f32 %v2479, %v2619
  %v2651 = vadd.f32 %v2480, %v2624
  %v2652 = vadd.f32 %v2481, %v2629
  %v2653 = vadd.f32 %v2482, %v2634
  %v2654 = vadd.f32 %v2483, %v2639
  %v2655 = vadd.f32 %v2484, %v2644
  %v2656 = vld [vmem:[#allocation3 + $0x7] sm:$0xff]
  %v2657 = vld [vmem:[#allocation3 + $0xf] sm:$0xff]
  %v2658 = vld [vmem:[#allocation3 + $0x17] sm:$0xff]
  %v2659 = vld [vmem:[#allocation3 + $0x1f] sm:$0xff]
  %v2660 = vld [vmem:[#allocation3 + $0x27] sm:$0xff]
  %v2661 = vld [vmem:[#allocation3 + $0x2f] sm:$0xff]
  %v2662 = vld [vmem:[#allocation3 + $0x37] sm:$0xff]
  %v2663 = vld [vmem:[#allocation3 + $0x3f] sm:$0xff]
  %v2664 = vld [vmem:[#allocation3 + $0x47] sm:$0xff]
  %s2665 = scalar_lea.vmem [#allocation5], 480
  %v2666 = vld [vmem:[%s2665] sm:$0xff]
  %v2667 = vld [vmem:[%s2665 + $0x8] sm:$0xff]
  %v2668 = vld [vmem:[%s2665 + $0x10] sm:$0xff]
  %v2669 = vld [vmem:[%s2665 + $0x18] sm:$0xff]
  %v2670 = vld [vmem:[%s2665 + $0x20] sm:$0xff]
  %v2671 = vld [vmem:[%s2665 + $0x28] sm:$0xff]
  %v2672 = vld [vmem:[%s2665 + $0x30] sm:$0xff]
  %v2673 = vld [vmem:[%s2665 + $0x38] sm:$0xff]
  %v2674 = vld [vmem:[%s2665 + $0x40] sm:$0xff]
  %v2675 = vld [vmem:[%s2665 + $0x48] sm:$0xff]
  %v2676 = vld [vmem:[%s2665 + $0x50] sm:$0xff]
  %v2677 = vld [vmem:[%s2665 + $0x58] sm:$0xff]
  %v2678 = vld [vmem:[%s2665 + $0x60] sm:$0xff]
  %v2679 = vld [vmem:[%s2665 + $0x68] sm:$0xff]
  %v2680 = vld [vmem:[%s2665 + $0x70] sm:$0xff]
  %v2682 = vsel %vm914, %v2656, 0
  %v2685 = vsel %vm914, %v2657, 0
  %v2688 = vsel %vm914, %v2658, 0
  %v2691 = vsel %vm914, %v2659, 0
  %v2694 = vsel %vm914, %v2660, 0
  %v2697 = vsel %vm914, %v2661, 0
  %v2700 = vsel %vm914, %v2662, 0
  %v2703 = vsel %vm914, %v2663, 0
  %v2706 = vsel %vm914, %v2664, 0
  %2708 = vmatprep.subr.mxu0 0.0
  %2709 = vmatpush1.msra.mxu0 %v2666
  %2710 = vmatprep.subr.mxu0 0.0
  %2711 = vmatpush1.msra.mxu0 %v2667
  %2712 = vmatprep.subr.mxu0 0.0
  %2713 = vmatpush1.msra.mxu0 %v2668
  %2714 = vmatprep.subr.mxu0 0.0
  %2715 = vmatpush1.msra.mxu0 %v2669
  %2716 = vmatprep.subr.mxu0 0.0
  %2717 = vmatpush1.msra.mxu0 %v2670
  %2718 = vmatprep.subr.mxu0 0.0
  %2719 = vmatpush1.msra.mxu0 %v2671
  %2720 = vmatprep.subr.mxu0 0.0
  %2721 = vmatpush1.msra.mxu0 %v2672
  %2722 = vmatprep.subr.mxu0 0.0
  %2723 = vmatpush1.msra.mxu0 %v2673
  %2724 = vmatprep.subr.mxu0 0.0
  %2725 = vmatpush1.msra.mxu0 %v2674
  %2726 = vmatprep.subr.mxu0 0.0
  %2727 = vmatpush1.msra.mxu0 %v2675
  %2728 = vmatprep.subr.mxu0 0.0
  %2729 = vmatpush1.msra.mxu0 %v2676
  %2730 = vmatprep.subr.mxu0 0.0
  %2731 = vmatpush1.msra.mxu0 %v2677
  %2732 = vmatprep.subr.mxu0 0.0
  %2733 = vmatpush1.msra.mxu0 %v2678
  %2734 = vmatprep.subr.mxu0 0.0
  %2735 = vmatpush1.msra.mxu0 %v2679
  %2736 = vmatprep.subr.mxu0 0.0
  %2737 = vmatpush1.msra.mxu0 %v2680
  %2738 = vmatprep.subr.mxu0 0.0
  %2739 = vmatpush1.msra.mxu0 0.0
  %2740 = vmatprep.subr.mxu0 0.0
  %2741 = vmatpush1.msra.mxu0 0.0
  %2742 = vmatprep.subr.mxu0 0.0
  %2743 = vmatpush1.msra.mxu0 0.0
  %2744 = vmatprep.subr.mxu0 0.0
  %2745 = vmatpush1.msra.mxu0 0.0
  %2746 = vmatprep.subr.mxu0 0.0
  %2747 = vmatpush1.msra.mxu0 0.0
  %2748 = vmatprep.subr.mxu0 0.0
  %2749 = vmatpush1.msra.mxu0 0.0
  %2750 = vmatprep.subr.mxu0 0.0
  %2751 = vmatpush1.msra.mxu0 0.0
  %2752 = vmatprep.subr.mxu0 0.0
  %2753 = vmatpush1.msra.mxu0 0.0
  %2754 = vmatprep.subr.mxu0 0.0
  %2755 = vmatpush1.msra.mxu0 0.0
  %2756 = vmatprep.subr.mxu0 0.0
  %2757 = vmatpush1.msra.mxu0 0.0
  %2758 = vmatprep.subr.mxu0 0.0
  %2759 = vmatpush1.msra.mxu0 0.0
  %2760 = vmatprep.subr.mxu0 0.0
  %2761 = vmatpush1.msra.mxu0 0.0
  %2762 = vmatprep.subr.mxu0 0.0
  %2763 = vmatpush1.msra.mxu0 0.0
  %2764 = vmatprep.subr.mxu0 0.0
  %2765 = vmatpush1.msra.mxu0 0.0
  %2766 = vmatprep.subr.mxu0 0.0
  %2767 = vmatpush1.msra.mxu0 0.0
  %2768 = vmatprep.subr.mxu0 0.0
  %2769 = vmatpush1.msra.mxu0 0.0
  %2770 = vmatprep.subr.mxu0 0.0
  %2771 = vmatpush1.msra.mxu0 0.0
  %2772 = vmatprep.mubr.f32.mxu0 0.0
  %2773 = vmatmul.mubr.f32.gmra.mrb[0].mxu0 %v2682
  %v2774 = vpop.f32.mrb[0].mxu0
  %v2775 = vadd.f32 0.0, %v2774
  %v2776 = vpop.f32.mrb[0].mxu0
  %2777 = vmatprep.mubr.f32.mxu0 0.0
  %2778 = vmatmul.mubr.f32.gmra.mrb[0].mxu0 %v2685
  %v2779 = vpop.f32.mrb[0].mxu0
  %v2780 = vadd.f32 0.0, %v2779
  %v2781 = vpop.f32.mrb[0].mxu0
  %2782 = vmatprep.mubr.f32.mxu0 0.0
  %2783 = vmatmul.mubr.f32.gmra.mrb[0].mxu0 %v2688
  %v2784 = vpop.f32.mrb[0].mxu0
  %v2785 = vadd.f32 0.0, %v2784
  %v2786 = vpop.f32.mrb[0].mxu0
  %2787 = vmatprep.mubr.f32.mxu0 0.0
  %2788 = vmatmul.mubr.f32.gmra.mrb[0].mxu0 %v2691
  %v2789 = vpop.f32.mrb[0].mxu0
  %v2790 = vadd.f32 0.0, %v2789
  %v2791 = vpop.f32.mrb[0].mxu0
  %2792 = vmatprep.mubr.f32.mxu0 0.0
  %2793 = vmatmul.mubr.f32.gmra.mrb[0].mxu0 %v2694
  %v2794 = vpop.f32.mrb[0].mxu0
  %v2795 = vadd.f32 0.0, %v2794
  %v2796 = vpop.f32.mrb[0].mxu0
  %2797 = vmatprep.mubr.f32.mxu0 0.0
  %2798 = vmatmul.mubr.f32.gmra.mrb[0].mxu0 %v2697
  %v2799 = vpop.f32.mrb[0].mxu0
  %v2800 = vadd.f32 0.0, %v2799
  %v2801 = vpop.f32.mrb[0].mxu0
  %2802 = vmatprep.mubr.f32.mxu0 0.0
  %2803 = vmatmul.mubr.f32.gmra.mrb[0].mxu0 %v2700
  %v2804 = vpop.f32.mrb[0].mxu0
  %v2805 = vadd.f32 0.0, %v2804
  %v2806 = vpop.f32.mrb[0].mxu0
  %2807 = vmatprep.mubr.f32.mxu0 0.0
  %2808 = vmatmul.mubr.f32.gmra.mrb[0].mxu0 %v2703
  %v2809 = vpop.f32.mrb[0].mxu0
  %v2810 = vadd.f32 0.0, %v2809
  %v2811 = vpop.f32.mrb[0].mxu0
  %2812 = vmatprep.mubr.f32.mxu0 0.0
  %2813 = vmatmul.mubr.f32.gmra.mrb[0].mxu0 %v2706
  %v2814 = vpop.f32.mrb[0].mxu0
  %v2815 = vadd.f32 0.0, %v2814
  %v2816 = vpop.f32.mrb[0].mxu0
  %2817 = vdwg.mxu0
  %v2818 = vadd.f32 %v2647, %v2775
  %v2819 = vadd.f32 %v2648, %v2780
  %v2820 = vadd.f32 %v2649, %v2785
  %v2821 = vadd.f32 %v2650, %v2790
  %v2822 = vadd.f32 %v2651, %v2795
  %v2823 = vadd.f32 %v2652, %v2800
  %v2824 = vadd.f32 %v2653, %v2805
  %v2825 = vadd.f32 %v2654, %v2810
  %v2826 = vadd.f32 %v2655, %v2815
  %v2827 = vld [vmem:[#allocation3 + $0x8] sm:$0xff]
  %v2828 = vld [vmem:[#allocation3 + $0x10] sm:$0xff]
  %v2829 = vld [vmem:[#allocation3 + $0x18] sm:$0xff]
  %v2830 = vld [vmem:[#allocation3 + $0x20] sm:$0xff]
  %v2831 = vld [vmem:[#allocation3 + $0x28] sm:$0xff]
  %v2832 = vld [vmem:[#allocation3 + $0x30] sm:$0xff]
  %v2833 = vld [vmem:[#allocation3 + $0x38] sm:$0xff]
  %v2834 = vld [vmem:[#allocation3 + $0x40] sm:$0xff]
  %v2835 = vld [vmem:[#allocation3 + $0x48] sm:$0xff]
  %s2836 = scalar_lea.vmem [#allocation5], 600
  %v2837 = vld [vmem:[%s2836] sm:$0xff]
  %v2838 = vld [vmem:[%s2836 + $0x8] sm:$0xff]
  %v2839 = vld [vmem:[%s2836 + $0x10] sm:$0xff]
  %v2840 = vld [vmem:[%s2836 + $0x18] sm:$0xff]
  %v2841 = vld [vmem:[%s2836 + $0x20] sm:$0xff]
  %v2842 = vld [vmem:[%s2836 + $0x28] sm:$0xff]
  %v2843 = vld [vmem:[%s2836 + $0x30] sm:$0xff]
  %v2844 = vld [vmem:[%s2836 + $0x38] sm:$0xff]
  %v2845 = vld [vmem:[%s2836 + $0x40] sm:$0xff]
  %v2846 = vld [vmem:[%s2836 + $0x48] sm:$0xff]
  %v2847 = vld [vmem:[%s2836 + $0x50] sm:$0xff]
  %v2848 = vld [vmem:[%s2836 + $0x58] sm:$0xff]
  %v2849 = vld [vmem:[%s2836 + $0x60] sm:$0xff]
  %v2850 = vld [vmem:[%s2836 + $0x68] sm:$0xff]
  %v2851 = vld [vmem:[%s2836 + $0x70] sm:$0xff]
  %v2853 = vsel %vm914, %v2827, 0
  %v2856 = vsel %vm914, %v2828, 0
  %v2859 = vsel %vm914, %v2829, 0
  %v2862 = vsel %vm914, %v2830, 0
  %v2865 = vsel %vm914, %v2831, 0
  %v2868 = vsel %vm914, %v2832, 0
  %v2871 = vsel %vm914, %v2833, 0
  %v2874 = vsel %vm914, %v2834, 0
  %v2877 = vsel %vm914, %v2835, 0
  %2879 = vmatprep.subr.mxu0 0.0
  %2880 = vmatpush1.msra.mxu0 %v2837
  %2881 = vmatprep.subr.mxu0 0.0
  %2882 = vmatpush1.msra.mxu0 %v2838
  %2883 = vmatprep.subr.mxu0 0.0
  %2884 = vmatpush1.msra.mxu0 %v2839
  %2885 = vmatprep.subr.mxu0 0.0
  %2886 = vmatpush1.msra.mxu0 %v2840
  %2887 = vmatprep.subr.mxu0 0.0
  %2888 = vmatpush1.msra.mxu0 %v2841
  %2889 = vmatprep.subr.mxu0 0.0
  %2890 = vmatpush1.msra.mxu0 %v2842
  %2891 = vmatprep.subr.mxu0 0.0
  %2892 = vmatpush1.msra.mxu0 %v2843
  %2893 = vmatprep.subr.mxu0 0.0
  %2894 = vmatpush1.msra.mxu0 %v2844
  %2895 = vmatprep.subr.mxu0 0.0
  %2896 = vmatpush1.msra.mxu0 %v2845
  %2897 = vmatprep.subr.mxu0 0.0
  %2898 = vmatpush1.msra.mxu0 %v2846
  %2899 = vmatprep.subr.mxu0 0.0
  %2900 = vmatpush1.msra.mxu0 %v2847
  %2901 = vmatprep.subr.mxu0 0.0
  %2902 = vmatpush1.msra.mxu0 %v2848
  %2903 = vmatprep.subr.mxu0 0.0
  %2904 = vmatpush1.msra.mxu0 %v2849
  %2905 = vmatprep.subr.mxu0 0.0
  %2906 = vmatpush1.msra.mxu0 %v2850
  %2907 = vmatprep.subr.mxu0 0.0
  %2908 = vmatpush1.msra.mxu0 %v2851
  %2909 = vmatprep.subr.mxu0 0.0
  %2910 = vmatpush1.msra.mxu0 0.0
  %2911 = vmatprep.subr.mxu0 0.0
  %2912 = vmatpush1.msra.mxu0 0.0
  %2913 = vmatprep.subr.mxu0 0.0
  %2914 = vmatpush1.msra.mxu0 0.0
  %2915 = vmatprep.subr.mxu0 0.0
  %2916 = vmatpush1.msra.mxu0 0.0
  %2917 = vmatprep.subr.mxu0 0.0
  %2918 = vmatpush1.msra.mxu0 0.0
  %2919 = vmatprep.subr.mxu0 0.0
  %2920 = vmatpush1.msra.mxu0 0.0
  %2921 = vmatprep.subr.mxu0 0.0
  %2922 = vmatpush1.msra.mxu0 0.0
  %2923 = vmatprep.subr.mxu0 0.0
  %2924 = vmatpush1.msra.mxu0 0.0
  %2925 = vmatprep.subr.mxu0 0.0
  %2926 = vmatpush1.msra.mxu0 0.0
  %2927 = vmatprep.subr.mxu0 0.0
  %2928 = vmatpush1.msra.mxu0 0.0
  %2929 = vmatprep.subr.mxu0 0.0
  %2930 = vmatpush1.msra.mxu0 0.0
  %2931 = vmatprep.subr.mxu0 0.0
  %2932 = vmatpush1.msra.mxu0 0.0
  %2933 = vmatprep.subr.mxu0 0.0
  %2934 = vmatpush1.msra.mxu0 0.0
  %2935 = vmatprep.subr.mxu0 0.0
  %2936 = vmatpush1.msra.mxu0 0.0
  %2937 = vmatprep.subr.mxu0 0.0
  %2938 = vmatpush1.msra.mxu0 0.0
  %2939 = vmatprep.subr.mxu0 0.0
  %2940 = vmatpush1.msra.mxu0 0.0
  %2941 = vmatprep.subr.mxu0 0.0
  %2942 = vmatpush1.msra.mxu0 0.0
  %2943 = vmatprep.mubr.f32.mxu0 0.0
  %2944 = vmatmul.mubr.f32.gmra.mrb[0].mxu0 %v2853
  %v2945 = vpop.f32.mrb[0].mxu0
  %v2946 = vadd.f32 0.0, %v2945
  %v2947 = vpop.f32.mrb[0].mxu0
  %2948 = vmatprep.mubr.f32.mxu0 0.0
  %2949 = vmatmul.mubr.f32.gmra.mrb[0].mxu0 %v2856
  %v2950 = vpop.f32.mrb[0].mxu0
  %v2951 = vadd.f32 0.0, %v2950
  %v2952 = vpop.f32.mrb[0].mxu0
  %2953 = vmatprep.mubr.f32.mxu0 0.0
  %2954 = vmatmul.mubr.f32.gmra.mrb[0].mxu0 %v2859
  %v2955 = vpop.f32.mrb[0].mxu0
  %v2956 = vadd.f32 0.0, %v2955
  %v2957 = vpop.f32.mrb[0].mxu0
  %2958 = vmatprep.mubr.f32.mxu0 0.0
  %2959 = vmatmul.mubr.f32.gmra.mrb[0].mxu0 %v2862
  %v2960 = vpop.f32.mrb[0].mxu0
  %v2961 = vadd.f32 0.0, %v2960
  %v2962 = vpop.f32.mrb[0].mxu0
  %2963 = vmatprep.mubr.f32.mxu0 0.0
  %2964 = vmatmul.mubr.f32.gmra.mrb[0].mxu0 %v2865
  %v2965 = vpop.f32.mrb[0].mxu0
  %v2966 = vadd.f32 0.0, %v2965
  %v2967 = vpop.f32.mrb[0].mxu0
  %2968 = vmatprep.mubr.f32.mxu0 0.0
  %2969 = vmatmul.mubr.f32.gmra.mrb[0].mxu0 %v2868
  %v2970 = vpop.f32.mrb[0].mxu0
  %v2971 = vadd.f32 0.0, %v2970
  %v2972 = vpop.f32.mrb[0].mxu0
  %2973 = vmatprep.mubr.f32.mxu0 0.0
  %2974 = vmatmul.mubr.f32.gmra.mrb[0].mxu0 %v2871
  %v2975 = vpop.f32.mrb[0].mxu0
  %v2976 = vadd.f32 0.0, %v2975
  %v2977 = vpop.f32.mrb[0].mxu0
  %2978 = vmatprep.mubr.f32.mxu0 0.0
  %2979 = vmatmul.mubr.f32.gmra.mrb[0].mxu0 %v2874
  %v2980 = vpop.f32.mrb[0].mxu0
  %v2981 = vadd.f32 0.0, %v2980
  %v2982 = vpop.f32.mrb[0].mxu0
  %2983 = vmatprep.mubr.f32.mxu0 0.0
  %2984 = vmatmul.mubr.f32.gmra.mrb[0].mxu0 %v2877
  %v2985 = vpop.f32.mrb[0].mxu0
  %v2986 = vadd.f32 0.0, %v2985
  %v2987 = vpop.f32.mrb[0].mxu0
  %2988 = vdwg.mxu0
  %v2989 = vadd.f32 %v2818, %v2946
  %v2990 = vadd.f32 %v2819, %v2951
  %v2991 = vadd.f32 %v2820, %v2956
  %v2992 = vadd.f32 %v2821, %v2961
  %v2993 = vadd.f32 %v2822, %v2966
  %v2994 = vadd.f32 %v2823, %v2971
  %v2995 = vadd.f32 %v2824, %v2976
  %v2996 = vadd.f32 %v2825, %v2981
  %v2997 = vadd.f32 %v2826, %v2986
  %v2998 = vld [vmem:[#allocation3 + $0xc] sm:$0xff]
  %v2999 = vld [vmem:[#allocation3 + $0x14] sm:$0xff]
  %v3000 = vld [vmem:[#allocation3 + $0x1c] sm:$0xff]
  %v3001 = vld [vmem:[#allocation3 + $0x24] sm:$0xff]
  %v3002 = vld [vmem:[#allocation3 + $0x2c] sm:$0xff]
  %v3003 = vld [vmem:[#allocation3 + $0x34] sm:$0xff]
  %v3004 = vld [vmem:[#allocation3 + $0x3c] sm:$0xff]
  %v3005 = vld [vmem:[#allocation3 + $0x44] sm:$0xff]
  %v3006 = vld [vmem:[#allocation3 + $0x4c] sm:$0xff]
  %s3007 = scalar_lea.vmem [#allocation5], 720
  %v3008 = vld [vmem:[%s3007] sm:$0xff]
  %v3009 = vld [vmem:[%s3007 + $0x8] sm:$0xff]
  %v3010 = vld [vmem:[%s3007 + $0x10] sm:$0xff]
  %v3011 = vld [vmem:[%s3007 + $0x18] sm:$0xff]
  %v3012 = vld [vmem:[%s3007 + $0x20] sm:$0xff]
  %v3013 = vld [vmem:[%s3007 + $0x28] sm:$0xff]
  %v3014 = vld [vmem:[%s3007 + $0x30] sm:$0xff]
  %v3015 = vld [vmem:[%s3007 + $0x38] sm:$0xff]
  %v3016 = vld [vmem:[%s3007 + $0x40] sm:$0xff]
  %v3017 = vld [vmem:[%s3007 + $0x48] sm:$0xff]
  %v3018 = vld [vmem:[%s3007 + $0x50] sm:$0xff]
  %v3019 = vld [vmem:[%s3007 + $0x58] sm:$0xff]
  %v3020 = vld [vmem:[%s3007 + $0x60] sm:$0xff]
  %v3021 = vld [vmem:[%s3007 + $0x68] sm:$0xff]
  %v3022 = vld [vmem:[%s3007 + $0x70] sm:$0xff]
  %v3024 = vsel %vm914, %v2998, 0
  %v3027 = vsel %vm914, %v2999, 0
  %v3030 = vsel %vm914, %v3000, 0
  %v3033 = vsel %vm914, %v3001, 0
  %v3036 = vsel %vm914, %v3002, 0
  %v3039 = vsel %vm914, %v3003, 0
  %v3042 = vsel %vm914, %v3004, 0
  %v3045 = vsel %vm914, %v3005, 0
  %v3048 = vsel %vm914, %v3006, 0
  %3050 = vmatprep.subr.mxu0 0.0
  %3051 = vmatpush1.msra.mxu0 %v3008
  %3052 = vmatprep.subr.mxu0 0.0
  %3053 = vmatpush1.msra.mxu0 %v3009
  %3054 = vmatprep.subr.mxu0 0.0
  %3055 = vmatpush1.msra.mxu0 %v3010
  %3056 = vmatprep.subr.mxu0 0.0
  %3057 = vmatpush1.msra.mxu0 %v3011
  %3058 = vmatprep.subr.mxu0 0.0
  %3059 = vmatpush1.msra.mxu0 %v3012
  %3060 = vmatprep.subr.mxu0 0.0
  %3061 = vmatpush1.msra.mxu0 %v3013
  %3062 = vmatprep.subr.mxu0 0.0
  %3063 = vmatpush1.msra.mxu0 %v3014
  %3064 = vmatprep.subr.mxu0 0.0
  %3065 = vmatpush1.msra.mxu0 %v3015
  %3066 = vmatprep.subr.mxu0 0.0
  %3067 = vmatpush1.msra.mxu0 %v3016
  %3068 = vmatprep.subr.mxu0 0.0
  %3069 = vmatpush1.msra.mxu0 %v3017
  %3070 = vmatprep.subr.mxu0 0.0
  %3071 = vmatpush1.msra.mxu0 %v3018
  %3072 = vmatprep.subr.mxu0 0.0
  %3073 = vmatpush1.msra.mxu0 %v3019
  %3074 = vmatprep.subr.mxu0 0.0
  %3075 = vmatpush1.msra.mxu0 %v3020
  %3076 = vmatprep.subr.mxu0 0.0
  %3077 = vmatpush1.msra.mxu0 %v3021
  %3078 = vmatprep.subr.mxu0 0.0
  %3079 = vmatpush1.msra.mxu0 %v3022
  %3080 = vmatprep.subr.mxu0 0.0
  %3081 = vmatpush1.msra.mxu0 0.0
  %3082 = vmatprep.subr.mxu0 0.0
  %3083 = vmatpush1.msra.mxu0 0.0
  %3084 = vmatprep.subr.mxu0 0.0
  %3085 = vmatpush1.msra.mxu0 0.0
  %3086 = vmatprep.subr.mxu0 0.0
  %3087 = vmatpush1.msra.mxu0 0.0
  %3088 = vmatprep.subr.mxu0 0.0
  %3089 = vmatpush1.msra.mxu0 0.0
  %3090 = vmatprep.subr.mxu0 0.0
  %3091 = vmatpush1.msra.mxu0 0.0
  %3092 = vmatprep.subr.mxu0 0.0
  %3093 = vmatpush1.msra.mxu0 0.0
  %3094 = vmatprep.subr.mxu0 0.0
  %3095 = vmatpush1.msra.mxu0 0.0
  %3096 = vmatprep.subr.mxu0 0.0
  %3097 = vmatpush1.msra.mxu0 0.0
  %3098 = vmatprep.subr.mxu0 0.0
  %3099 = vmatpush1.msra.mxu0 0.0
  %3100 = vmatprep.subr.mxu0 0.0
  %3101 = vmatpush1.msra.mxu0 0.0
  %3102 = vmatprep.subr.mxu0 0.0
  %3103 = vmatpush1.msra.mxu0 0.0
  %3104 = vmatprep.subr.mxu0 0.0
  %3105 = vmatpush1.msra.mxu0 0.0
  %3106 = vmatprep.subr.mxu0 0.0
  %3107 = vmatpush1.msra.mxu0 0.0
  %3108 = vmatprep.subr.mxu0 0.0
  %3109 = vmatpush1.msra.mxu0 0.0
  %3110 = vmatprep.subr.mxu0 0.0
  %3111 = vmatpush1.msra.mxu0 0.0
  %3112 = vmatprep.subr.mxu0 0.0
  %3113 = vmatpush1.msra.mxu0 0.0
  %3114 = vmatprep.mubr.f32.mxu0 0.0
  %3115 = vmatmul.mubr.f32.gmra.mrb[0].mxu0 %v3024
  %v3116 = vpop.f32.mrb[0].mxu0
  %v3117 = vadd.f32 0.0, %v3116
  %v3118 = vpop.f32.mrb[0].mxu0
  %3119 = vmatprep.mubr.f32.mxu0 0.0
  %3120 = vmatmul.mubr.f32.gmra.mrb[0].mxu0 %v3027
  %v3121 = vpop.f32.mrb[0].mxu0
  %v3122 = vadd.f32 0.0, %v3121
  %v3123 = vpop.f32.mrb[0].mxu0
  %3124 = vmatprep.mubr.f32.mxu0 0.0
  %3125 = vmatmul.mubr.f32.gmra.mrb[0].mxu0 %v3030
  %v3126 = vpop.f32.mrb[0].mxu0
  %v3127 = vadd.f32 0.0, %v3126
  %v3128 = vpop.f32.mrb[0].mxu0
  %3129 = vmatprep.mubr.f32.mxu0 0.0
  %3130 = vmatmul.mubr.f32.gmra.mrb[0].mxu0 %v3033
  %v3131 = vpop.f32.mrb[0].mxu0
  %v3132 = vadd.f32 0.0, %v3131
  %v3133 = vpop.f32.mrb[0].mxu0
  %3134 = vmatprep.mubr.f32.mxu0 0.0
  %3135 = vmatmul.mubr.f32.gmra.mrb[0].mxu0 %v3036
  %v3136 = vpop.f32.mrb[0].mxu0
  %v3137 = vadd.f32 0.0, %v3136
  %v3138 = vpop.f32.mrb[0].mxu0
  %3139 = vmatprep.mubr.f32.mxu0 0.0
  %3140 = vmatmul.mubr.f32.gmra.mrb[0].mxu0 %v3039
  %v3141 = vpop.f32.mrb[0].mxu0
  %v3142 = vadd.f32 0.0, %v3141
  %v3143 = vpop.f32.mrb[0].mxu0
  %3144 = vmatprep.mubr.f32.mxu0 0.0
  %3145 = vmatmul.mubr.f32.gmra.mrb[0].mxu0 %v3042
  %v3146 = vpop.f32.mrb[0].mxu0
  %v3147 = vadd.f32 0.0, %v3146
  %v3148 = vpop.f32.mrb[0].mxu0
  %3149 = vmatprep.mubr.f32.mxu0 0.0
  %3150 = vmatmul.mubr.f32.gmra.mrb[0].mxu0 %v3045
  %v3151 = vpop.f32.mrb[0].mxu0
  %v3152 = vadd.f32 0.0, %v3151
  %v3153 = vpop.f32.mrb[0].mxu0
  %3154 = vmatprep.mubr.f32.mxu0 0.0
  %3155 = vmatmul.mubr.f32.gmra.mrb[0].mxu0 %v3048
  %v3156 = vpop.f32.mrb[0].mxu0
  %v3157 = vadd.f32 0.0, %v3156
  %v3158 = vpop.f32.mrb[0].mxu0
  %3159 = vdwg.mxu0
  %v3160 = vadd.f32 %v2989, %v3117
  %v3161 = vadd.f32 %v2990, %v3122
  %v3162 = vadd.f32 %v2991, %v3127
  %v3163 = vadd.f32 %v2992, %v3132
  %v3164 = vadd.f32 %v2993, %v3137
  %v3165 = vadd.f32 %v2994, %v3142
  %v3166 = vadd.f32 %v2995, %v3147
  %v3167 = vadd.f32 %v2996, %v3152
  %v3168 = vadd.f32 %v2997, %v3157
  %v3169 = vld [vmem:[#allocation3 + $0xd] sm:$0xff]
  %v3170 = vld [vmem:[#allocation3 + $0x15] sm:$0xff]
  %v3171 = vld [vmem:[#allocation3 + $0x1d] sm:$0xff]
  %v3172 = vld [vmem:[#allocation3 + $0x25] sm:$0xff]
  %v3173 = vld [vmem:[#allocation3 + $0x2d] sm:$0xff]
  %v3174 = vld [vmem:[#allocation3 + $0x35] sm:$0xff]
  %v3175 = vld [vmem:[#allocation3 + $0x3d] sm:$0xff]
  %v3176 = vld [vmem:[#allocation3 + $0x45] sm:$0xff]
  %v3177 = vld [vmem:[#allocation3 + $0x4d] sm:$0xff]
  %s3178 = scalar_lea.vmem [#allocation5], 840
  %v3179 = vld [vmem:[%s3178] sm:$0xff]
  %v3180 = vld [vmem:[%s3178 + $0x8] sm:$0xff]
  %v3181 = vld [vmem:[%s3178 + $0x10] sm:$0xff]
  %v3182 = vld [vmem:[%s3178 + $0x18] sm:$0xff]
  %v3183 = vld [vmem:[%s3178 + $0x20] sm:$0xff]
  %v3184 = vld [vmem:[%s3178 + $0x28] sm:$0xff]
  %v3185 = vld [vmem:[%s3178 + $0x30] sm:$0xff]
  %v3186 = vld [vmem:[%s3178 + $0x38] sm:$0xff]
  %v3187 = vld [vmem:[%s3178 + $0x40] sm:$0xff]
  %v3188 = vld [vmem:[%s3178 + $0x48] sm:$0xff]
  %v3189 = vld [vmem:[%s3178 + $0x50] sm:$0xff]
  %v3190 = vld [vmem:[%s3178 + $0x58] sm:$0xff]
  %v3191 = vld [vmem:[%s3178 + $0x60] sm:$0xff]
  %v3192 = vld [vmem:[%s3178 + $0x68] sm:$0xff]
  %v3193 = vld [vmem:[%s3178 + $0x70] sm:$0xff]
  %v3195 = vsel %vm914, %v3169, 0
  %v3198 = vsel %vm914, %v3170, 0
  %v3201 = vsel %vm914, %v3171, 0
  %v3204 = vsel %vm914, %v3172, 0
  %v3207 = vsel %vm914, %v3173, 0
  %v3210 = vsel %vm914, %v3174, 0
  %v3213 = vsel %vm914, %v3175, 0
  %v3216 = vsel %vm914, %v3176, 0
  %v3219 = vsel %vm914, %v3177, 0
  %3221 = vmatprep.subr.mxu0 0.0
  %3222 = vmatpush1.msra.mxu0 %v3179
  %3223 = vmatprep.subr.mxu0 0.0
  %3224 = vmatpush1.msra.mxu0 %v3180
  %3225 = vmatprep.subr.mxu0 0.0
  %3226 = vmatpush1.msra.mxu0 %v3181
  %3227 = vmatprep.subr.mxu0 0.0
  %3228 = vmatpush1.msra.mxu0 %v3182
  %3229 = vmatprep.subr.mxu0 0.0
  %3230 = vmatpush1.msra.mxu0 %v3183
  %3231 = vmatprep.subr.mxu0 0.0
  %3232 = vmatpush1.msra.mxu0 %v3184
  %3233 = vmatprep.subr.mxu0 0.0
  %3234 = vmatpush1.msra.mxu0 %v3185
  %3235 = vmatprep.subr.mxu0 0.0
  %3236 = vmatpush1.msra.mxu0 %v3186
  %3237 = vmatprep.subr.mxu0 0.0
  %3238 = vmatpush1.msra.mxu0 %v3187
  %3239 = vmatprep.subr.mxu0 0.0
  %3240 = vmatpush1.msra.mxu0 %v3188
  %3241 = vmatprep.subr.mxu0 0.0
  %3242 = vmatpush1.msra.mxu0 %v3189
  %3243 = vmatprep.subr.mxu0 0.0
  %3244 = vmatpush1.msra.mxu0 %v3190
  %3245 = vmatprep.subr.mxu0 0.0
  %3246 = vmatpush1.msra.mxu0 %v3191
  %3247 = vmatprep.subr.mxu0 0.0
  %3248 = vmatpush1.msra.mxu0 %v3192
  %3249 = vmatprep.subr.mxu0 0.0
  %3250 = vmatpush1.msra.mxu0 %v3193
  %3251 = vmatprep.subr.mxu0 0.0
  %3252 = vmatpush1.msra.mxu0 0.0
  %3253 = vmatprep.subr.mxu0 0.0
  %3254 = vmatpush1.msra.mxu0 0.0
  %3255 = vmatprep.subr.mxu0 0.0
  %3256 = vmatpush1.msra.mxu0 0.0
  %3257 = vmatprep.subr.mxu0 0.0
  %3258 = vmatpush1.msra.mxu0 0.0
  %3259 = vmatprep.subr.mxu0 0.0
  %3260 = vmatpush1.msra.mxu0 0.0
  %3261 = vmatprep.subr.mxu0 0.0
  %3262 = vmatpush1.msra.mxu0 0.0
  %3263 = vmatprep.subr.mxu0 0.0
  %3264 = vmatpush1.msra.mxu0 0.0
  %3265 = vmatprep.subr.mxu0 0.0
  %3266 = vmatpush1.msra.mxu0 0.0
  %3267 = vmatprep.subr.mxu0 0.0
  %3268 = vmatpush1.msra.mxu0 0.0
  %3269 = vmatprep.subr.mxu0 0.0
  %3270 = vmatpush1.msra.mxu0 0.0
  %3271 = vmatprep.subr.mxu0 0.0
  %3272 = vmatpush1.msra.mxu0 0.0
  %3273 = vmatprep.subr.mxu0 0.0
  %3274 = vmatpush1.msra.mxu0 0.0
  %3275 = vmatprep.subr.mxu0 0.0
  %3276 = vmatpush1.msra.mxu0 0.0
  %3277 = vmatprep.subr.mxu0 0.0
  %3278 = vmatpush1.msra.mxu0 0.0
  %3279 = vmatprep.subr.mxu0 0.0
  %3280 = vmatpush1.msra.mxu0 0.0
  %3281 = vmatprep.subr.mxu0 0.0
  %3282 = vmatpush1.msra.mxu0 0.0
  %3283 = vmatprep.subr.mxu0 0.0
  %3284 = vmatpush1.msra.mxu0 0.0
  %3285 = vmatprep.mubr.f32.mxu0 0.0
  %3286 = vmatmul.mubr.f32.gmra.mrb[0].mxu0 %v3195
  %v3287 = vpop.f32.mrb[0].mxu0
  %v3288 = vadd.f32 0.0, %v3287
  %v3289 = vpop.f32.mrb[0].mxu0
  %3290 = vmatprep.mubr.f32.mxu0 0.0
  %3291 = vmatmul.mubr.f32.gmra.mrb[0].mxu0 %v3198
  %v3292 = vpop.f32.mrb[0].mxu0
  %v3293 = vadd.f32 0.0, %v3292
  %v3294 = vpop.f32.mrb[0].mxu0
  %3295 = vmatprep.mubr.f32.mxu0 0.0
  %3296 = vmatmul.mubr.f32.gmra.mrb[0].mxu0 %v3201
  %v3297 = vpop.f32.mrb[0].mxu0
  %v3298 = vadd.f32 0.0, %v3297
  %v3299 = vpop.f32.mrb[0].mxu0
  %3300 = vmatprep.mubr.f32.mxu0 0.0
  %3301 = vmatmul.mubr.f32.gmra.mrb[0].mxu0 %v3204
  %v3302 = vpop.f32.mrb[0].mxu0
  %v3303 = vadd.f32 0.0, %v3302
  %v3304 = vpop.f32.mrb[0].mxu0
  %3305 = vmatprep.mubr.f32.mxu0 0.0
  %3306 = vmatmul.mubr.f32.gmra.mrb[0].mxu0 %v3207
  %v3307 = vpop.f32.mrb[0].mxu0
  %v3308 = vadd.f32 0.0, %v3307
  %v3309 = vpop.f32.mrb[0].mxu0
  %3310 = vmatprep.mubr.f32.mxu0 0.0
  %3311 = vmatmul.mubr.f32.gmra.mrb[0].mxu0 %v3210
  %v3312 = vpop.f32.mrb[0].mxu0
  %v3313 = vadd.f32 0.0, %v3312
  %v3314 = vpop.f32.mrb[0].mxu0
  %3315 = vmatprep.mubr.f32.mxu0 0.0
  %3316 = vmatmul.mubr.f32.gmra.mrb[0].mxu0 %v3213
  %v3317 = vpop.f32.mrb[0].mxu0
  %v3318 = vadd.f32 0.0, %v3317
  %v3319 = vpop.f32.mrb[0].mxu0
  %3320 = vmatprep.mubr.f32.mxu0 0.0
  %3321 = vmatmul.mubr.f32.gmra.mrb[0].mxu0 %v3216
  %v3322 = vpop.f32.mrb[0].mxu0
  %v3323 = vadd.f32 0.0, %v3322
  %v3324 = vpop.f32.mrb[0].mxu0
  %3325 = vmatprep.mubr.f32.mxu0 0.0
  %3326 = vmatmul.mubr.f32.gmra.mrb[0].mxu0 %v3219
  %v3327 = vpop.f32.mrb[0].mxu0
  %v3328 = vadd.f32 0.0, %v3327
  %v3329 = vpop.f32.mrb[0].mxu0
  %3330 = vdwg.mxu0
  %v3331 = vadd.f32 %v3160, %v3288
  %v3332 = vadd.f32 %v3161, %v3293
  %v3333 = vadd.f32 %v3162, %v3298
  %v3334 = vadd.f32 %v3163, %v3303
  %v3335 = vadd.f32 %v3164, %v3308
  %v3336 = vadd.f32 %v3165, %v3313
  %v3337 = vadd.f32 %v3166, %v3318
  %v3338 = vadd.f32 %v3167, %v3323
  %v3339 = vadd.f32 %v3168, %v3328
  %v3340 = vld [vmem:[#allocation3 + $0xe] sm:$0xff]
  %v3341 = vld [vmem:[#allocation3 + $0x16] sm:$0xff]
  %v3342 = vld [vmem:[#allocation3 + $0x1e] sm:$0xff]
  %v3343 = vld [vmem:[#allocation3 + $0x26] sm:$0xff]
  %v3344 = vld [vmem:[#allocation3 + $0x2e] sm:$0xff]
  %v3345 = vld [vmem:[#allocation3 + $0x36] sm:$0xff]
  %v3346 = vld [vmem:[#allocation3 + $0x3e] sm:$0xff]
  %v3347 = vld [vmem:[#allocation3 + $0x46] sm:$0xff]
  %v3348 = vld [vmem:[#allocation3 + $0x4e] sm:$0xff]
  %s3349 = scalar_lea.vmem [#allocation5], 960
  %v3350 = vld [vmem:[%s3349] sm:$0xff]
  %v3351 = vld [vmem:[%s3349 + $0x8] sm:$0xff]
  %v3352 = vld [vmem:[%s3349 + $0x10] sm:$0xff]
  %v3353 = vld [vmem:[%s3349 + $0x18] sm:$0xff]
  %v3354 = vld [vmem:[%s3349 + $0x20] sm:$0xff]
  %v3355 = vld [vmem:[%s3349 + $0x28] sm:$0xff]
  %v3356 = vld [vmem:[%s3349 + $0x30] sm:$0xff]
  %v3357 = vld [vmem:[%s3349 + $0x38] sm:$0xff]
  %v3358 = vld [vmem:[%s3349 + $0x40] sm:$0xff]
  %v3359 = vld [vmem:[%s3349 + $0x48] sm:$0xff]
  %v3360 = vld [vmem:[%s3349 + $0x50] sm:$0xff]
  %v3361 = vld [vmem:[%s3349 + $0x58] sm:$0xff]
  %v3362 = vld [vmem:[%s3349 + $0x60] sm:$0xff]
  %v3363 = vld [vmem:[%s3349 + $0x68] sm:$0xff]
  %v3364 = vld [vmem:[%s3349 + $0x70] sm:$0xff]
  %v3366 = vsel %vm914, %v3340, 0
  %v3369 = vsel %vm914, %v3341, 0
  %v3372 = vsel %vm914, %v3342, 0
  %v3375 = vsel %vm914, %v3343, 0
  %v3378 = vsel %vm914, %v3344, 0
  %v3381 = vsel %vm914, %v3345, 0
  %v3384 = vsel %vm914, %v3346, 0
  %v3387 = vsel %vm914, %v3347, 0
  %v3390 = vsel %vm914, %v3348, 0
  %3392 = vmatprep.subr.mxu0 0.0
  %3393 = vmatpush1.msra.mxu0 %v3350
  %3394 = vmatprep.subr.mxu0 0.0
  %3395 = vmatpush1.msra.mxu0 %v3351
  %3396 = vmatprep.subr.mxu0 0.0
  %3397 = vmatpush1.msra.mxu0 %v3352
  %3398 = vmatprep.subr.mxu0 0.0
  %3399 = vmatpush1.msra.mxu0 %v3353
  %3400 = vmatprep.subr.mxu0 0.0
  %3401 = vmatpush1.msra.mxu0 %v3354
  %3402 = vmatprep.subr.mxu0 0.0
  %3403 = vmatpush1.msra.mxu0 %v3355
  %3404 = vmatprep.subr.mxu0 0.0
  %3405 = vmatpush1.msra.mxu0 %v3356
  %3406 = vmatprep.subr.mxu0 0.0
  %3407 = vmatpush1.msra.mxu0 %v3357
  %3408 = vmatprep.subr.mxu0 0.0
  %3409 = vmatpush1.msra.mxu0 %v3358
  %3410 = vmatprep.subr.mxu0 0.0
  %3411 = vmatpush1.msra.mxu0 %v3359
  %3412 = vmatprep.subr.mxu0 0.0
  %3413 = vmatpush1.msra.mxu0 %v3360
  %3414 = vmatprep.subr.mxu0 0.0
  %3415 = vmatpush1.msra.mxu0 %v3361
  %3416 = vmatprep.subr.mxu0 0.0
  %3417 = vmatpush1.msra.mxu0 %v3362
  %3418 = vmatprep.subr.mxu0 0.0
  %3419 = vmatpush1.msra.mxu0 %v3363
  %3420 = vmatprep.subr.mxu0 0.0
  %3421 = vmatpush1.msra.mxu0 %v3364
  %3422 = vmatprep.subr.mxu0 0.0
  %3423 = vmatpush1.msra.mxu0 0.0
  %3424 = vmatprep.subr.mxu0 0.0
  %3425 = vmatpush1.msra.mxu0 0.0
  %3426 = vmatprep.subr.mxu0 0.0
  %3427 = vmatpush1.msra.mxu0 0.0
  %3428 = vmatprep.subr.mxu0 0.0
  %3429 = vmatpush1.msra.mxu0 0.0
  %3430 = vmatprep.subr.mxu0 0.0
  %3431 = vmatpush1.msra.mxu0 0.0
  %3432 = vmatprep.subr.mxu0 0.0
  %3433 = vmatpush1.msra.mxu0 0.0
  %3434 = vmatprep.subr.mxu0 0.0
  %3435 = vmatpush1.msra.mxu0 0.0
  %3436 = vmatprep.subr.mxu0 0.0
  %3437 = vmatpush1.msra.mxu0 0.0
  %3438 = vmatprep.subr.mxu0 0.0
  %3439 = vmatpush1.msra.mxu0 0.0
  %3440 = vmatprep.subr.mxu0 0.0
  %3441 = vmatpush1.msra.mxu0 0.0
  %3442 = vmatprep.subr.mxu0 0.0
  %3443 = vmatpush1.msra.mxu0 0.0
  %3444 = vmatprep.subr.mxu0 0.0
  %3445 = vmatpush1.msra.mxu0 0.0
  %3446 = vmatprep.subr.mxu0 0.0
  %3447 = vmatpush1.msra.mxu0 0.0
  %3448 = vmatprep.subr.mxu0 0.0
  %3449 = vmatpush1.msra.mxu0 0.0
  %3450 = vmatprep.subr.mxu0 0.0
  %3451 = vmatpush1.msra.mxu0 0.0
  %3452 = vmatprep.subr.mxu0 0.0
  %3453 = vmatpush1.msra.mxu0 0.0
  %3454 = vmatprep.subr.mxu0 0.0
  %3455 = vmatpush1.msra.mxu0 0.0
  %3456 = vmatprep.mubr.f32.mxu0 0.0
  %3457 = vmatmul.mubr.f32.gmra.mrb[0].mxu0 %v3366
  %v3458 = vpop.f32.mrb[0].mxu0
  %v3459 = vadd.f32 0.0, %v3458
  %v3460 = vpop.f32.mrb[0].mxu0
  %3461 = vmatprep.mubr.f32.mxu0 0.0
  %3462 = vmatmul.mubr.f32.gmra.mrb[0].mxu0 %v3369
  %v3463 = vpop.f32.mrb[0].mxu0
  %v3464 = vadd.f32 0.0, %v3463
  %v3465 = vpop.f32.mrb[0].mxu0
  %3466 = vmatprep.mubr.f32.mxu0 0.0
  %3467 = vmatmul.mubr.f32.gmra.mrb[0].mxu0 %v3372
  %v3468 = vpop.f32.mrb[0].mxu0
  %v3469 = vadd.f32 0.0, %v3468
  %v3470 = vpop.f32.mrb[0].mxu0
  %3471 = vmatprep.mubr.f32.mxu0 0.0
  %3472 = vmatmul.mubr.f32.gmra.mrb[0].mxu0 %v3375
  %v3473 = vpop.f32.mrb[0].mxu0
  %v3474 = vadd.f32 0.0, %v3473
  %v3475 = vpop.f32.mrb[0].mxu0
  %3476 = vmatprep.mubr.f32.mxu0 0.0
  %3477 = vmatmul.mubr.f32.gmra.mrb[0].mxu0 %v3378
  %v3478 = vpop.f32.mrb[0].mxu0
  %v3479 = vadd.f32 0.0, %v3478
  %v3480 = vpop.f32.mrb[0].mxu0
  %3481 = vmatprep.mubr.f32.mxu0 0.0
  %3482 = vmatmul.mubr.f32.gmra.mrb[0].mxu0 %v3381
  %v3483 = vpop.f32.mrb[0].mxu0
  %v3484 = vadd.f32 0.0, %v3483
  %v3485 = vpop.f32.mrb[0].mxu0
  %3486 = vmatprep.mubr.f32.mxu0 0.0
  %3487 = vmatmul.mubr.f32.gmra.mrb[0].mxu0 %v3384
  %v3488 = vpop.f32.mrb[0].mxu0
  %v3489 = vadd.f32 0.0, %v3488
  %v3490 = vpop.f32.mrb[0].mxu0
  %3491 = vmatprep.mubr.f32.mxu0 0.0
  %3492 = vmatmul.mubr.f32.gmra.mrb[0].mxu0 %v3387
  %v3493 = vpop.f32.mrb[0].mxu0
  %v3494 = vadd.f32 0.0, %v3493
  %v3495 = vpop.f32.mrb[0].mxu0
  %3496 = vmatprep.mubr.f32.mxu0 0.0
  %3497 = vmatmul.mubr.f32.gmra.mrb[0].mxu0 %v3390
  %v3498 = vpop.f32.mrb[0].mxu0
  %v3499 = vadd.f32 0.0, %v3498
  %v3500 = vpop.f32.mrb[0].mxu0
  %3501 = vdwg.mxu0
  %v3502 = vadd.f32 %v3331, %v3459
  %v3503 = vadd.f32 %v3332, %v3464
  %v3504 = vadd.f32 %v3333, %v3469
  %v3505 = vadd.f32 %v3334, %v3474
  %v3506 = vadd.f32 %v3335, %v3479
  %v3507 = vadd.f32 %v3336, %v3484
  %v3508 = vadd.f32 %v3337, %v3489
  %v3509 = vadd.f32 %v3338, %v3494
  %v3510 = vadd.f32 %v3339, %v3499
  %v3511 = vld [vmem:[%s2 + $0x2] sm:$0x1]
  %v3513 = vlaneseq
  %v3514 = vshrl.u32 %v3513, 7
  %v3515 = vsub.s32 0, %v3514
  %v3516 = vrot.slane %v3511, %v3515
  %v3518 = vadd.f32 %v3502, %v3516
  %v3519 = vadd.f32 %v3503, %v3516
  %v3520 = vadd.f32 %v3504, %v3516
  %v3521 = vadd.f32 %v3505, %v3516
  %v3522 = vadd.f32 %v3506, %v3516
  %v3523 = vadd.f32 %v3507, %v3516
  %v3524 = vadd.f32 %v3508, %v3516
  %v3525 = vadd.f32 %v3509, %v3516
  %v3526 = vadd.f32 %v3510, %v3516
  %v3527 = vmax.f32 %v3518, 0.0
  %v3528 = vmax.f32 %v3519, 0.0
  %v3529 = vmax.f32 %v3520, 0.0
  %v3530 = vmax.f32 %v3521, 0.0
  %v3531 = vmax.f32 %v3522, 0.0
  %v3532 = vmax.f32 %v3523, 0.0
  %v3533 = vmax.f32 %v3524, 0.0
  %v3534 = vmax.f32 %v3525, 0.0
  %v3535 = vmax.f32 %v3526, 0.0
  %3536 = vst.msk [vmem:[#allocation4] sm:$0xff] %vm1368, %v3527
  %3537 = vst.msk [vmem:[#allocation4 + $0x8] sm:$0xff] %vm1368, %v3528
  %3538 = vst.msk [vmem:[#allocation4 + $0x10] sm:$0xff] %vm1368, %v3529
  %3539 = vst.msk [vmem:[#allocation4 + $0x18] sm:$0xff] %vm1368, %v3530
  %3540 = vst.msk [vmem:[#allocation4 + $0x20] sm:$0xff] %vm1368, %v3531
  %3541 = vst.msk [vmem:[#allocation4 + $0x28] sm:$0xff] %vm1368, %v3532
  %3542 = vst.msk [vmem:[#allocation4 + $0x30] sm:$0xff] %vm1368, %v3533
  %3543 = vst.msk [vmem:[#allocation4 + $0x38] sm:$0xff] %vm1368, %v3534
  %3544 = vst.msk [vmem:[#allocation4 + $0x40] sm:$0xff] %vm1368, %v3535
  %v3545 = vld [vmem:[#allocation4 + $0x7] sm:$0xf]
  %3547 = vrot.lane.b32.xlu0 %v3545, 108
  %v3548 = vpop.permute.xlu0 %3547
  %v3550 = vmax.f32 %v3545, %v3548
  %v3551 = vsel %vm1350, %v3550, %v3550
  %v3552 = vld [vmem:[#allocation4 + $0xd] sm:$0xf]
  %3554 = vrot.lane.b32.xlu0 %v3552, 108
  %v3555 = vpop.permute.xlu0 %3554
  %v3557 = vmax.f32 %v3552, %v3555
  %v3558 = vsel %vm1350, %v3557, %v3557
  %v3559 = vld [vmem:[#allocation4 + $0x13] sm:$0xf]
  %3561 = vrot.lane.b32.xlu0 %v3559, 108
  %v3562 = vpop.permute.xlu0 %3561
  %v3564 = vmax.f32 %v3559, %v3562
  %v3565 = vsel %vm1350, %v3564, %v3564
  %v3566 = vld [vmem:[#allocation4 + $0x19] sm:$0xf]
  %3568 = vrot.lane.b32.xlu0 %v3566, 108
  %v3569 = vpop.permute.xlu0 %3568
  %v3571 = vmax.f32 %v3566, %v3569
  %v3572 = vsel %vm1350, %v3571, %v3571
  %v3573 = vmax.f32 %v3551, %v3558
  %v3574 = vmax.f32 %v3558, %v3565
  %v3575 = vmax.f32 %v3565, %v3572
  %v3577 = vrot.slane %v3573, 1
  %v3579 = vmax.f32 %v3573, %v3577
  %v3581 = vrot.slane %v3574, 1
  %v3583 = vmax.f32 %v3574, %v3581
  %v3585 = vrot.slane %v3575, 1
  %v3587 = vmax.f32 %v3575, %v3585
  %v3588 = vadd.f32 %v3579, %v3583
  %v3590 = vrot.slane %v3588, 1
  %v3592 = vadd.f32 %v3588, %v3590
  %3594 = vrot.lane.b32.xlu0 %v3592, 108
  %v3595 = vpop.permute.xlu0 %3594
  %v3597 = vadd.f32 %v3592, %v3595
  %v3598 = vmul.f32 %v3597, 0.125
  %v3599 = vadd.f32 %v3583, %v3587
  %v3601 = vrot.slane %v3599, 1
  %v3603 = vadd.f32 %v3599, %v3601
  %3605 = vrot.lane.b32.xlu0 %v3603, 108
  %v3606 = vpop.permute.xlu0 %3605
  %v3608 = vadd.f32 %v3603, %v3606
  %v3609 = vmul.f32 %v3608, 0.125
  %v3611 = vrot.slane %v3598, 1
  %3612 = vrot.lane.b32.xlu0 %v3611, 40
  %v3613 = vpop.permute.xlu0 %3612
  %3616 = vrot.lane.b32.xlu0 %v3609, 80
  %v3617 = vpop.permute.xlu0 %3616
  %v3619 = vrot.slane %v3609, 1
  %3620 = vrot.lane.b32.xlu0 %v3619, 120
  %v3621 = vpop.permute.xlu0 %3620
  %v3623 = vsel %vm1350, %v3598, %v3613
  %v3624 = vsel %vm1368, %v3623, %v3617
  %v3625 = vsel %vm914, %v3624, %v3621
  %v3626 = vld [vmem:[#allocation4 + $0x2b] sm:$0xf]
  %3628 = vrot.lane.b32.xlu0 %v3626, 108
  %v3629 = vpop.permute.xlu0 %3628
  %v3631 = vmax.f32 %v3626, %v3629
  %v3632 = vsel %vm1350, %v3631, %v3631
  %v3633 = vld [vmem:[#allocation4 + $0x31] sm:$0xf]
  %3635 = vrot.lane.b32.xlu0 %v3633, 108
  %v3636 = vpop.permute.xlu0 %3635
  %v3638 = vmax.f32 %v3633, %v3636
  %v3639 = vsel %vm1350, %v3638, %v3638
  %v3640 = vld [vmem:[#allocation4 + $0x37] sm:$0xf]
  %3642 = vrot.lane.b32.xlu0 %v3640, 108
  %v3643 = vpop.permute.xlu0 %3642
  %v3645 = vmax.f32 %v3640, %v3643
  %v3646 = vsel %vm1350, %v3645, %v3645
  %v3647 = vld [vmem:[#allocation4 + $0x3d] sm:$0xf]
  %3649 = vrot.lane.b32.xlu0 %v3647, 108
  %v3650 = vpop.permute.xlu0 %3649
  %v3652 = vmax.f32 %v3647, %v3650
  %v3653 = vsel %vm1350, %v3652, %v3652
  %v3654 = vmax.f32 %v3632, %v3639
  %v3655 = vmax.f32 %v3639, %v3646
  %v3656 = vmax.f32 %v3646, %v3653
  %v3658 = vrot.slane %v3654, 1
  %v3660 = vmax.f32 %v3654, %v3658
  %v3662 = vrot.slane %v3655, 1
  %v3664 = vmax.f32 %v3655, %v3662
  %v3666 = vrot.slane %v3656, 1
  %v3668 = vmax.f32 %v3656, %v3666
  %v3669 = vadd.f32 %v3660, %v3664
  %v3671 = vrot.slane %v3669, 1
  %v3673 = vadd.f32 %v3669, %v3671
  %3675 = vrot.lane.b32.xlu0 %v3673, 108
  %v3676 = vpop.permute.xlu0 %3675
  %v3678 = vadd.f32 %v3673, %v3676
  %v3679 = vmul.f32 %v3678, 0.125
  %v3680 = vadd.f32 %v3664, %v3668
  %v3682 = vrot.slane %v3680, 1
  %v3684 = vadd.f32 %v3680, %v3682
  %3686 = vrot.lane.b32.xlu0 %v3684, 108
  %v3687 = vpop.permute.xlu0 %3686
  %v3689 = vadd.f32 %v3684, %v3687
  %v3690 = vmul.f32 %v3689, 0.125
  %v3692 = vrot.slane %v3679, 1
  %3693 = vrot.lane.b32.xlu0 %v3692, 40
  %v3694 = vpop.permute.xlu0 %3693
  %3697 = vrot.lane.b32.xlu0 %v3690, 80
  %v3698 = vpop.permute.xlu0 %3697
  %v3700 = vrot.slane %v3690, 1
  %3701 = vrot.lane.b32.xlu0 %v3700, 120
  %v3702 = vpop.permute.xlu0 %3701
  %v3704 = vsel %vm1350, %v3679, %v3694
  %v3705 = vsel %vm1368, %v3704, %v3698
  %v3706 = vsel %vm914, %v3705, %v3702
  %v3708 = vrot.slane %v3706, 7
  %v3709 = vrot.slane %v3702, 7
  %v3712 = vsel %vm1822, %v3625, %v3708
  %v3713 = vsel %vm1822, %v3621, %v3709
  %s3714 = smul.u32 8, 20
  %s3715 = smul.u32 %s3714, 4
  %s3716 = sshll.u32 %s3715, 4
  %3717 = dma.done %s331, %s3716
  %s3718 = smul.u32 8, 50
  %s3719 = smul.u32 %s3718, 2
  %s3720 = sshll.u32 %s3719, 4
  %3721 = dma.done %s532, %s3720
  %s3722 = smul.u32 8, 25
  %s3723 = smul.u32 %s3722, 2
  %s3724 = sshll.u32 %s3723, 4
  %3725 = dma.done %s773, %s3724
  %v3726 = vld [vmem:[#allocation6] sm:$0xff]
  %v3727 = vld [vmem:[#allocation6 + $0x8] sm:$0xff]
  %v3728 = vld [vmem:[#allocation6 + $0x10] sm:$0xff]
  %v3729 = vld [vmem:[#allocation6 + $0x18] sm:$0xff]
  %v3730 = vld [vmem:[#allocation6 + $0x20] sm:$0xff]
  %v3731 = vld [vmem:[#allocation6 + $0x28] sm:$0xff]
  %v3732 = vld [vmem:[#allocation6 + $0x30] sm:$0xff]
  %v3733 = vld [vmem:[#allocation6 + $0x38] sm:$0xff]
  %v3734 = vld [vmem:[#allocation6 + $0x40] sm:$0xff]
  %v3735 = vld [vmem:[#allocation6 + $0x48] sm:$0xff]
  %v3736 = vld [vmem:[#allocation6 + $0x50] sm:$0xff]
  %v3737 = vld [vmem:[#allocation6 + $0x58] sm:$0xff]
  %v3738 = vld [vmem:[#allocation6 + $0x60] sm:$0xff]
  %v3739 = vld [vmem:[#allocation6 + $0x68] sm:$0xff]
  %v3740 = vld [vmem:[#allocation6 + $0x70] sm:$0xff]
  %v3741 = vld [vmem:[#allocation6 + $0x78] sm:$0xff]
  %v3742 = vld [vmem:[#allocation6 + $0x80] sm:$0xff]
  %v3743 = vld [vmem:[#allocation6 + $0x88] sm:$0xff]
  %v3744 = vld [vmem:[#allocation6 + $0x90] sm:$0xff]
  %v3745 = vld [vmem:[#allocation6 + $0x98] sm:$0xff]
  %v3746 = vld [vmem:[#allocation6 + $0xa0] sm:$0xff]
  %v3747 = vld [vmem:[#allocation6 + $0xa8] sm:$0xff]
  %v3748 = vld [vmem:[#allocation6 + $0xb0] sm:$0xff]
  %v3749 = vld [vmem:[#allocation6 + $0xb8] sm:$0xff]
  %v3750 = vld [vmem:[#allocation6 + $0xc0] sm:$0xff]
  %v3751 = vld [vmem:[#allocation6 + $0xc8] sm:$0xff]
  %v3752 = vld [vmem:[#allocation6 + $0xd0] sm:$0xff]
  %v3753 = vld [vmem:[#allocation6 + $0xd8] sm:$0xff]
  %v3754 = vld [vmem:[#allocation6 + $0xe0] sm:$0xff]
  %v3755 = vld [vmem:[#allocation6 + $0xe8] sm:$0xff]
  %v3756 = vld [vmem:[#allocation6 + $0xf0] sm:$0xff]
  %v3757 = vld [vmem:[#allocation6 + $0xf8] sm:$0xff]
  %v3758 = vld [vmem:[#allocation6 + $0x100] sm:$0xff]
  %v3759 = vld [vmem:[#allocation6 + $0x108] sm:$0xff]
  %v3760 = vld [vmem:[#allocation6 + $0x110] sm:$0xff]
  %v3761 = vld [vmem:[#allocation6 + $0x118] sm:$0xff]
  %v3762 = vld [vmem:[#allocation6 + $0x120] sm:$0xff]
  %v3763 = vld [vmem:[#allocation6 + $0x128] sm:$0xff]
  %v3764 = vld [vmem:[#allocation6 + $0x130] sm:$0xff]
  %v3765 = vld [vmem:[#allocation6 + $0x138] sm:$0xff]
  %v3766 = vld [vmem:[#allocation6 + $0x140] sm:$0xff]
  %v3767 = vld [vmem:[#allocation6 + $0x148] sm:$0xff]
  %v3768 = vld [vmem:[#allocation6 + $0x150] sm:$0xff]
  %v3769 = vld [vmem:[#allocation6 + $0x158] sm:$0xff]
  %v3770 = vld [vmem:[#allocation6 + $0x160] sm:$0xff]
  %v3771 = vld [vmem:[#allocation6 + $0x168] sm:$0xff]
  %v3772 = vld [vmem:[#allocation6 + $0x170] sm:$0xff]
  %v3773 = vld [vmem:[#allocation6 + $0x178] sm:$0xff]
  %v3774 = vld [vmem:[#allocation6 + $0x180] sm:$0xff]
  %v3775 = vld [vmem:[#allocation6 + $0x188] sm:$0xff]
  %v3776 = vld [vmem:[#allocation6 + $0x190] sm:$0xff]
  %v3777 = vld [vmem:[#allocation6 + $0x198] sm:$0xff]
  %v3778 = vld [vmem:[#allocation6 + $0x1a0] sm:$0xff]
  %v3779 = vld [vmem:[#allocation6 + $0x1a8] sm:$0xff]
  %v3780 = vld [vmem:[#allocation6 + $0x1b0] sm:$0xff]
  %v3781 = vld [vmem:[#allocation6 + $0x1b8] sm:$0xff]
  %v3782 = vld [vmem:[#allocation6 + $0x1c0] sm:$0xff]
  %v3783 = vld [vmem:[#allocation6 + $0x1c8] sm:$0xff]
  %v3784 = vld [vmem:[#allocation6 + $0x1d0] sm:$0xff]
  %v3785 = vld [vmem:[#allocation6 + $0x1d8] sm:$0xff]
  %v3786 = vld [vmem:[#allocation6 + $0x1e0] sm:$0xff]
  %v3787 = vld [vmem:[#allocation6 + $0x1e8] sm:$0xff]
  %v3788 = vld [vmem:[#allocation6 + $0x1f0] sm:$0xff]
  %v3789 = vld [vmem:[#allocation6 + $0x1f8] sm:$0xff]
  %v3790 = vld [vmem:[#allocation6 + $0x200] sm:$0xff]
  %v3791 = vld [vmem:[#allocation6 + $0x208] sm:$0xff]
  %v3792 = vld [vmem:[#allocation6 + $0x210] sm:$0xff]
  %v3793 = vld [vmem:[#allocation6 + $0x218] sm:$0xff]
  %v3794 = vld [vmem:[#allocation6 + $0x220] sm:$0xff]
  %v3795 = vld [vmem:[#allocation6 + $0x228] sm:$0xff]
  %v3796 = vld [vmem:[#allocation6 + $0x230] sm:$0xff]
  %v3797 = vld [vmem:[#allocation6 + $0x238] sm:$0xff]
  %v3798 = vld [vmem:[#allocation6 + $0x240] sm:$0xff]
  %v3799 = vld [vmem:[#allocation6 + $0x248] sm:$0xff]
  %v3800 = vld [vmem:[#allocation6 + $0x250] sm:$0xff]
  %v3801 = vld [vmem:[#allocation6 + $0x258] sm:$0xff]
  %v3802 = vld [vmem:[#allocation6 + $0x260] sm:$0xff]
  %v3803 = vld [vmem:[#allocation6 + $0x268] sm:$0xff]
  %v3804 = vld [vmem:[#allocation6 + $0x270] sm:$0xff]
  %v3805 = vld [vmem:[#allocation6 + $0x278] sm:$0xff]
  %v3806 = vld [vmem:[%s2 + $0x3] sm:$0xf]
  %v3808 = vlaneseq
  %v3809 = vshrl.u32 %v3808, 7
  %v3810 = vsub.s32 0, %v3809
  %v3811 = vrot.slane %v3806, %v3810
  %v3812 = vlaneseq
  %v3813 = vshrl.u32 %v3812, 7
  %v3814 = vsub.s32 1, %v3813
  %v3815 = vrot.slane %v3806, %v3814
  %v3816 = vlaneseq
  %v3817 = vshrl.u32 %v3816, 7
  %v3818 = vsub.s32 2, %v3817
  %v3819 = vrot.slane %v3806, %v3818
  %v3820 = vlaneseq
  %v3821 = vshrl.u32 %v3820, 7
  %v3822 = vsub.s32 3, %v3821
  %v3823 = vrot.slane %v3806, %v3822
  %vm3828 = vcmask 261120
  %v3830 = vsel %vm3828, %v3713, 0
  %3832 = vmatprep.subr.mxu0 %v3727
  %3833 = vmatpush1.msra.mxu0 %v3726
  %3834 = vmatprep.subr.mxu0 %v3731
  %3835 = vmatpush1.msra.mxu0 %v3730
  %3836 = vmatprep.subr.mxu0 %v3735
  %3837 = vmatpush1.msra.mxu0 %v3734
  %3838 = vmatprep.subr.mxu0 %v3739
  %3839 = vmatpush1.msra.mxu0 %v3738
  %3840 = vmatprep.subr.mxu0 %v3743
  %3841 = vmatpush1.msra.mxu0 %v3742
  %3842 = vmatprep.subr.mxu0 %v3747
  %3843 = vmatpush1.msra.mxu0 %v3746
  %3844 = vmatprep.subr.mxu0 %v3751
  %3845 = vmatpush1.msra.mxu0 %v3750
  %3846 = vmatprep.subr.mxu0 %v3755
  %3847 = vmatpush1.msra.mxu0 %v3754
  %3848 = vmatprep.subr.mxu0 %v3759
  %3849 = vmatpush1.msra.mxu0 %v3758
  %3850 = vmatprep.subr.mxu0 %v3763
  %3851 = vmatpush1.msra.mxu0 %v3762
  %3852 = vmatprep.subr.mxu0 %v3767
  %3853 = vmatpush1.msra.mxu0 %v3766
  %3854 = vmatprep.subr.mxu0 %v3771
  %3855 = vmatpush1.msra.mxu0 %v3770
  %3856 = vmatprep.subr.mxu0 %v3775
  %3857 = vmatpush1.msra.mxu0 %v3774
  %3858 = vmatprep.subr.mxu0 %v3779
  %3859 = vmatpush1.msra.mxu0 %v3778
  %3860 = vmatprep.subr.mxu0 %v3783
  %3861 = vmatpush1.msra.mxu0 %v3782
  %3862 = vmatprep.subr.mxu0 %v3787
  %3863 = vmatpush1.msra.mxu0 %v3786
  %3864 = vmatprep.subr.mxu0 %v3791
  %3865 = vmatpush1.msra.mxu0 %v3790
  %3866 = vmatprep.subr.mxu0 %v3795
  %3867 = vmatpush1.msra.mxu0 %v3794
  %3868 = vmatprep.subr.mxu0 %v3799
  %3869 = vmatpush1.msra.mxu0 %v3798
  %3870 = vmatprep.subr.mxu0 %v3803
  %3871 = vmatpush1.msra.mxu0 %v3802
  %3872 = vmatprep.subr.mxu0 0.0
  %3873 = vmatpush1.msra.mxu0 0.0
  %3874 = vmatprep.subr.mxu0 0.0
  %3875 = vmatpush1.msra.mxu0 0.0
  %3876 = vmatprep.subr.mxu0 0.0
  %3877 = vmatpush1.msra.mxu0 0.0
  %3878 = vmatprep.subr.mxu0 0.0
  %3879 = vmatpush1.msra.mxu0 0.0
  %3880 = vmatprep.subr.mxu0 0.0
  %3881 = vmatpush1.msra.mxu0 0.0
  %3882 = vmatprep.subr.mxu0 0.0
  %3883 = vmatpush1.msra.mxu0 0.0
  %3884 = vmatprep.subr.mxu0 0.0
  %3885 = vmatpush1.msra.mxu0 0.0
  %3886 = vmatprep.subr.mxu0 0.0
  %3887 = vmatpush1.msra.mxu0 0.0
  %3888 = vmatprep.subr.mxu0 0.0
  %3889 = vmatpush1.msra.mxu0 0.0
  %3890 = vmatprep.subr.mxu0 0.0
  %3891 = vmatpush1.msra.mxu0 0.0
  %3892 = vmatprep.subr.mxu0 0.0
  %3893 = vmatpush1.msra.mxu0 0.0
  %3894 = vmatprep.subr.mxu0 0.0
  %3895 = vmatpush1.msra.mxu0 0.0
  %3896 = vmatprep.mubr.f32.mxu0 %v3830
  %3897 = vmatmul.mubr.f32.gmra.mrb[0].mxu0 %v3712
  %v3898 = vpop.f32.mrb[0].mxu0
  %v3899 = vadd.f32 %v3811, %v3898
  %v3900 = vpop.f32.mrb[0].mxu0
  %v3901 = vadd.f32 %v3815, %v3900
  %3902 = vdwg.mxu0
  %3903 = vmatprep.subr.mxu0 %v3729
  %3904 = vmatpush1.msra.mxu0 %v3728
  %3905 = vmatprep.subr.mxu0 %v3733
  %3906 = vmatpush1.msra.mxu0 %v3732
  %3907 = vmatprep.subr.mxu0 %v3737
  %3908 = vmatpush1.msra.mxu0 %v3736
  %3909 = vmatprep.subr.mxu0 %v3741
  %3910 = vmatpush1.msra.mxu0 %v3740
  %3911 = vmatprep.subr.mxu0 %v3745
  %3912 = vmatpush1.msra.mxu0 %v3744
  %3913 = vmatprep.subr.mxu0 %v3749
  %3914 = vmatpush1.msra.mxu0 %v3748
  %3915 = vmatprep.subr.mxu0 %v3753
  %3916 = vmatpush1.msra.mxu0 %v3752
  %3917 = vmatprep.subr.mxu0 %v3757
  %3918 = vmatpush1.msra.mxu0 %v3756
  %3919 = vmatprep.subr.mxu0 %v3761
  %3920 = vmatpush1.msra.mxu0 %v3760
  %3921 = vmatprep.subr.mxu0 %v3765
  %3922 = vmatpush1.msra.mxu0 %v3764
  %3923 = vmatprep.subr.mxu0 %v3769
  %3924 = vmatpush1.msra.mxu0 %v3768
  %3925 = vmatprep.subr.mxu0 %v3773
  %3926 = vmatpush1.msra.mxu0 %v3772
  %3927 = vmatprep.subr.mxu0 %v3777
  %3928 = vmatpush1.msra.mxu0 %v3776
  %3929 = vmatprep.subr.mxu0 %v3781
  %3930 = vmatpush1.msra.mxu0 %v3780
  %3931 = vmatprep.subr.mxu0 %v3785
  %3932 = vmatpush1.msra.mxu0 %v3784
  %3933 = vmatprep.subr.mxu0 %v3789
  %3934 = vmatpush1.msra.mxu0 %v3788
  %3935 = vmatprep.subr.mxu0 %v3793
  %3936 = vmatpush1.msra.mxu0 %v3792
  %3937 = vmatprep.subr.mxu0 %v3797
  %3938 = vmatpush1.msra.mxu0 %v3796
  %3939 = vmatprep.subr.mxu0 %v3801
  %3940 = vmatpush1.msra.mxu0 %v3800
  %3941 = vmatprep.subr.mxu0 %v3805
  %3942 = vmatpush1.msra.mxu0 %v3804
  %3943 = vmatprep.subr.mxu0 0.0
  %3944 = vmatpush1.msra.mxu0 0.0
  %3945 = vmatprep.subr.mxu0 0.0
  %3946 = vmatpush1.msra.mxu0 0.0
  %3947 = vmatprep.subr.mxu0 0.0
  %3948 = vmatpush1.msra.mxu0 0.0
  %3949 = vmatprep.subr.mxu0 0.0
  %3950 = vmatpush1.msra.mxu0 0.0
  %3951 = vmatprep.subr.mxu0 0.0
  %3952 = vmatpush1.msra.mxu0 0.0
  %3953 = vmatprep.subr.mxu0 0.0
  %3954 = vmatpush1.msra.mxu0 0.0
  %3955 = vmatprep.subr.mxu0 0.0
  %3956 = vmatpush1.msra.mxu0 0.0
  %3957 = vmatprep.subr.mxu0 0.0
  %3958 = vmatpush1.msra.mxu0 0.0
  %3959 = vmatprep.subr.mxu0 0.0
  %3960 = vmatpush1.msra.mxu0 0.0
  %3961 = vmatprep.subr.mxu0 0.0
  %3962 = vmatpush1.msra.mxu0 0.0
  %3963 = vmatprep.subr.mxu0 0.0
  %3964 = vmatpush1.msra.mxu0 0.0
  %3965 = vmatprep.subr.mxu0 0.0
  %3966 = vmatpush1.msra.mxu0 0.0
  %3967 = vmatprep.mubr.f32.mxu0 %v3830
  %3968 = vmatmul.mubr.f32.gmra.mrb[0].mxu0 %v3712
  %v3969 = vpop.f32.mrb[0].mxu0
  %v3970 = vadd.f32 %v3819, %v3969
  %v3971 = vpop.f32.mrb[0].mxu0
  %v3972 = vadd.f32 %v3823, %v3971
  %3973 = vdwg.mxu0
  %v3974 = vmax.f32 %v3899, 0.0
  %v3975 = vmax.f32 %v3901, 0.0
  %v3976 = vmax.f32 %v3970, 0.0
  %v3977 = vmax.f32 %v3972, 0.0
  %v3978 = vld [vmem:[#allocation7] sm:$0xff]
  %v3979 = vld [vmem:[#allocation7 + $0x8] sm:$0xff]
  %v3980 = vld [vmem:[#allocation7 + $0x10] sm:$0xff]
  %v3981 = vld [vmem:[#allocation7 + $0x18] sm:$0xff]
  %v3982 = vld [vmem:[#allocation7 + $0x20] sm:$0xff]
  %v3983 = vld [vmem:[#allocation7 + $0x28] sm:$0xff]
  %v3984 = vld [vmem:[#allocation7 + $0x30] sm:$0xff]
  %v3985 = vld [vmem:[#allocation7 + $0x38] sm:$0xff]
  %v3986 = vld [vmem:[#allocation7 + $0x40] sm:$0xff]
  %v3987 = vld [vmem:[#allocation7 + $0x48] sm:$0xff]
  %v3988 = vld [vmem:[#allocation7 + $0x50] sm:$0xff]
  %v3989 = vld [vmem:[#allocation7 + $0x58] sm:$0xff]
  %v3990 = vld [vmem:[#allocation7 + $0x60] sm:$0xff]
  %v3991 = vld [vmem:[#allocation7 + $0x68] sm:$0xff]
  %v3992 = vld [vmem:[#allocation7 + $0x70] sm:$0xff]
  %v3993 = vld [vmem:[#allocation7 + $0x78] sm:$0xff]
  %v3994 = vld [vmem:[#allocation7 + $0x80] sm:$0xff]
  %v3995 = vld [vmem:[#allocation7 + $0x88] sm:$0xff]
  %v3996 = vld [vmem:[#allocation7 + $0x90] sm:$0xff]
  %v3997 = vld [vmem:[#allocation7 + $0x98] sm:$0xff]
  %v3998 = vld [vmem:[#allocation7 + $0xa0] sm:$0xff]
  %v3999 = vld [vmem:[#allocation7 + $0xa8] sm:$0xff]
  %v4000 = vld [vmem:[#allocation7 + $0xb0] sm:$0xff]
  %v4001 = vld [vmem:[#allocation7 + $0xb8] sm:$0xff]
  %v4002 = vld [vmem:[#allocation7 + $0xc0] sm:$0xff]
  %v4003 = vld [vmem:[#allocation7 + $0xc8] sm:$0xff]
  %v4004 = vld [vmem:[#allocation7 + $0xd0] sm:$0xff]
  %v4005 = vld [vmem:[#allocation7 + $0xd8] sm:$0xff]
  %v4006 = vld [vmem:[#allocation7 + $0xe0] sm:$0xff]
  %v4007 = vld [vmem:[#allocation7 + $0xe8] sm:$0xff]
  %v4008 = vld [vmem:[#allocation7 + $0xf0] sm:$0xff]
  %v4009 = vld [vmem:[#allocation7 + $0xf8] sm:$0xff]
  %v4010 = vld [vmem:[#allocation7 + $0x100] sm:$0xff]
  %v4011 = vld [vmem:[#allocation7 + $0x108] sm:$0xff]
  %v4012 = vld [vmem:[#allocation7 + $0x110] sm:$0xff]
  %v4013 = vld [vmem:[#allocation7 + $0x118] sm:$0xff]
  %v4014 = vld [vmem:[#allocation7 + $0x120] sm:$0xff]
  %v4015 = vld [vmem:[#allocation7 + $0x128] sm:$0xff]
  %v4016 = vld [vmem:[#allocation7 + $0x130] sm:$0xff]
  %v4017 = vld [vmem:[#allocation7 + $0x138] sm:$0xff]
  %v4018 = vld [vmem:[#allocation7 + $0x140] sm:$0xff]
  %v4019 = vld [vmem:[#allocation7 + $0x148] sm:$0xff]
  %v4020 = vld [vmem:[#allocation7 + $0x150] sm:$0xff]
  %v4021 = vld [vmem:[#allocation7 + $0x158] sm:$0xff]
  %v4022 = vld [vmem:[#allocation7 + $0x160] sm:$0xff]
  %v4023 = vld [vmem:[#allocation7 + $0x168] sm:$0xff]
  %v4024 = vld [vmem:[#allocation7 + $0x170] sm:$0xff]
  %v4025 = vld [vmem:[#allocation7 + $0x178] sm:$0xff]
  %v4026 = vld [vmem:[#allocation7 + $0x180] sm:$0xff]
  %v4027 = vld [vmem:[#allocation7 + $0x188] sm:$0xff]
  %v4028 = vld [vmem:[#allocation7 + $0x190] sm:$0xff]
  %v4029 = vld [vmem:[#allocation7 + $0x198] sm:$0xff]
  %v4030 = vld [vmem:[#allocation7 + $0x1a0] sm:$0xff]
  %v4031 = vld [vmem:[#allocation7 + $0x1a8] sm:$0xff]
  %v4032 = vld [vmem:[#allocation7 + $0x1b0] sm:$0xff]
  %v4033 = vld [vmem:[#allocation7 + $0x1b8] sm:$0xff]
  %v4034 = vld [vmem:[#allocation7 + $0x1c0] sm:$0xff]
  %v4035 = vld [vmem:[#allocation7 + $0x1c8] sm:$0xff]
  %v4036 = vld [vmem:[#allocation7 + $0x1d0] sm:$0xff]
  %v4037 = vld [vmem:[#allocation7 + $0x1d8] sm:$0xff]
  %v4038 = vld [vmem:[#allocation7 + $0x1e0] sm:$0xff]
  %v4039 = vld [vmem:[#allocation7 + $0x1e8] sm:$0xff]
  %v4040 = vld [vmem:[#allocation7 + $0x1f0] sm:$0xff]
  %v4041 = vld [vmem:[#allocation7 + $0x1f8] sm:$0xff]
  %v4042 = vld [vmem:[#allocation7 + $0x200] sm:$0xff]
  %v4043 = vld [vmem:[#allocation7 + $0x208] sm:$0xff]
  %v4044 = vld [vmem:[#allocation7 + $0x210] sm:$0xff]
  %v4045 = vld [vmem:[#allocation7 + $0x218] sm:$0xff]
  %v4046 = vld [vmem:[#allocation7 + $0x220] sm:$0xff]
  %v4047 = vld [vmem:[#allocation7 + $0x228] sm:$0xff]
  %v4048 = vld [vmem:[#allocation7 + $0x230] sm:$0xff]
  %v4049 = vld [vmem:[#allocation7 + $0x238] sm:$0xff]
  %v4050 = vld [vmem:[#allocation7 + $0x240] sm:$0xff]
  %v4051 = vld [vmem:[#allocation7 + $0x248] sm:$0xff]
  %v4052 = vld [vmem:[#allocation7 + $0x250] sm:$0xff]
  %v4053 = vld [vmem:[#allocation7 + $0x258] sm:$0xff]
  %v4054 = vld [vmem:[#allocation7 + $0x260] sm:$0xff]
  %v4055 = vld [vmem:[#allocation7 + $0x268] sm:$0xff]
  %v4056 = vld [vmem:[#allocation7 + $0x270] sm:$0xff]
  %v4057 = vld [vmem:[#allocation7 + $0x278] sm:$0xff]
  %v4058 = vld [vmem:[#allocation7 + $0x280] sm:$0xff]
  %v4059 = vld [vmem:[#allocation7 + $0x288] sm:$0xff]
  %v4060 = vld [vmem:[#allocation7 + $0x290] sm:$0xff]
  %v4061 = vld [vmem:[#allocation7 + $0x298] sm:$0xff]
  %v4062 = vld [vmem:[#allocation7 + $0x2a0] sm:$0xff]
  %v4063 = vld [vmem:[#allocation7 + $0x2a8] sm:$0xff]
  %v4064 = vld [vmem:[#allocation7 + $0x2b0] sm:$0xff]
  %v4065 = vld [vmem:[#allocation7 + $0x2b8] sm:$0xff]
  %v4066 = vld [vmem:[#allocation7 + $0x2c0] sm:$0xff]
  %v4067 = vld [vmem:[#allocation7 + $0x2c8] sm:$0xff]
  %v4068 = vld [vmem:[#allocation7 + $0x2d0] sm:$0xff]
  %v4069 = vld [vmem:[#allocation7 + $0x2d8] sm:$0xff]
  %v4070 = vld [vmem:[#allocation7 + $0x2e0] sm:$0xff]
  %v4071 = vld [vmem:[#allocation7 + $0x2e8] sm:$0xff]
  %v4072 = vld [vmem:[#allocation7 + $0x2f0] sm:$0xff]
  %v4073 = vld [vmem:[#allocation7 + $0x2f8] sm:$0xff]
  %v4074 = vld [vmem:[#allocation7 + $0x300] sm:$0xff]
  %v4075 = vld [vmem:[#allocation7 + $0x308] sm:$0xff]
  %v4076 = vld [vmem:[#allocation7 + $0x310] sm:$0xff]
  %v4077 = vld [vmem:[#allocation7 + $0x318] sm:$0xff]
  %v4078 = vld [vmem:[%s2 + $0x7] sm:$0x3]
  %v4080 = vlaneseq
  %v4081 = vshrl.u32 %v4080, 7
  %v4082 = vsub.s32 0, %v4081
  %v4083 = vrot.slane %v4078, %v4082
  %v4084 = vlaneseq
  %v4085 = vshrl.u32 %v4084, 7
  %v4086 = vsub.s32 1, %v4085
  %v4087 = vrot.slane %v4078, %v4086
  %vm4090 = vcmask 130048
  %v4092 = vsel %vm4090, %v3977, 0
  %4094 = vmatprep.subr.mxu0 %v3979
  %4095 = vmatpush1.msra.mxu0 %v3978
  %4096 = vmatprep.subr.mxu0 %v3981
  %4097 = vmatpush1.msra.mxu0 %v3980
  %4098 = vmatprep.subr.mxu0 %v3983
  %4099 = vmatpush1.msra.mxu0 %v3982
  %4100 = vmatprep.subr.mxu0 %v3985
  %4101 = vmatpush1.msra.mxu0 %v3984
  %4102 = vmatprep.subr.mxu0 %v3987
  %4103 = vmatpush1.msra.mxu0 %v3986
  %4104 = vmatprep.subr.mxu0 %v3989
  %4105 = vmatpush1.msra.mxu0 %v3988
  %4106 = vmatprep.subr.mxu0 %v3991
  %4107 = vmatpush1.msra.mxu0 %v3990
  %4108 = vmatprep.subr.mxu0 %v3993
  %4109 = vmatpush1.msra.mxu0 %v3992
  %4110 = vmatprep.subr.mxu0 %v3995
  %4111 = vmatpush1.msra.mxu0 %v3994
  %4112 = vmatprep.subr.mxu0 %v3997
  %4113 = vmatpush1.msra.mxu0 %v3996
  %4114 = vmatprep.subr.mxu0 %v3999
  %4115 = vmatpush1.msra.mxu0 %v3998
  %4116 = vmatprep.subr.mxu0 %v4001
  %4117 = vmatpush1.msra.mxu0 %v4000
  %4118 = vmatprep.subr.mxu0 %v4003
  %4119 = vmatpush1.msra.mxu0 %v4002
  %4120 = vmatprep.subr.mxu0 %v4005
  %4121 = vmatpush1.msra.mxu0 %v4004
  %4122 = vmatprep.subr.mxu0 %v4007
  %4123 = vmatpush1.msra.mxu0 %v4006
  %4124 = vmatprep.subr.mxu0 %v4009
  %4125 = vmatpush1.msra.mxu0 %v4008
  %4126 = vmatprep.subr.mxu0 %v4011
  %4127 = vmatpush1.msra.mxu0 %v4010
  %4128 = vmatprep.subr.mxu0 %v4013
  %4129 = vmatpush1.msra.mxu0 %v4012
  %4130 = vmatprep.subr.mxu0 %v4015
  %4131 = vmatpush1.msra.mxu0 %v4014
  %4132 = vmatprep.subr.mxu0 %v4017
  %4133 = vmatpush1.msra.mxu0 %v4016
  %4134 = vmatprep.subr.mxu0 %v4019
  %4135 = vmatpush1.msra.mxu0 %v4018
  %4136 = vmatprep.subr.mxu0 %v4021
  %4137 = vmatpush1.msra.mxu0 %v4020
  %4138 = vmatprep.subr.mxu0 %v4023
  %4139 = vmatpush1.msra.mxu0 %v4022
  %4140 = vmatprep.subr.mxu0 %v4025
  %4141 = vmatpush1.msra.mxu0 %v4024
  %4142 = vmatprep.subr.mxu0 %v4027
  %4143 = vmatpush1.msra.mxu0 %v4026
  %4144 = vmatprep.subr.mxu0 %v4029
  %4145 = vmatpush1.msra.mxu0 %v4028
  %4146 = vmatprep.subr.mxu0 %v4031
  %4147 = vmatpush1.msra.mxu0 %v4030
  %4148 = vmatprep.subr.mxu0 %v4033
  %4149 = vmatpush1.msra.mxu0 %v4032
  %4150 = vmatprep.subr.mxu0 %v4035
  %4151 = vmatpush1.msra.mxu0 %v4034
  %4152 = vmatprep.subr.mxu0 %v4037
  %4153 = vmatpush1.msra.mxu0 %v4036
  %4154 = vmatprep.subr.mxu0 %v4039
  %4155 = vmatpush1.msra.mxu0 %v4038
  %4156 = vmatprep.subr.mxu0 %v4041
  %4157 = vmatpush1.msra.mxu0 %v4040
  %4158 = vmatprep.mubr.f32.mxu0 %v3975
  %4159 = vmatmul.mubr.f32.gmra.mrb[0].mxu0 %v3974
  %v4160 = vpop.f32.mrb[0].mxu0
  %v4161 = vadd.f32 %v4083, %v4160
  %v4162 = vpop.f32.mrb[0].mxu0
  %v4163 = vadd.f32 %v4087, %v4162
  %4164 = vdwg.mxu0
  %4165 = vmatprep.subr.mxu0 %v4043
  %4166 = vmatpush1.msra.mxu0 %v4042
  %4167 = vmatprep.subr.mxu0 %v4045
  %4168 = vmatpush1.msra.mxu0 %v4044
  %4169 = vmatprep.subr.mxu0 %v4047
  %4170 = vmatpush1.msra.mxu0 %v4046
  %4171 = vmatprep.subr.mxu0 %v4049
  %4172 = vmatpush1.msra.mxu0 %v4048
  %4173 = vmatprep.subr.mxu0 %v4051
  %4174 = vmatpush1.msra.mxu0 %v4050
  %4175 = vmatprep.subr.mxu0 %v4053
  %4176 = vmatpush1.msra.mxu0 %v4052
  %4177 = vmatprep.subr.mxu0 %v4055
  %4178 = vmatpush1.msra.mxu0 %v4054
  %4179 = vmatprep.subr.mxu0 %v4057
  %4180 = vmatpush1.msra.mxu0 %v4056
  %4181 = vmatprep.subr.mxu0 %v4059
  %4182 = vmatpush1.msra.mxu0 %v4058
  %4183 = vmatprep.subr.mxu0 %v4061
  %4184 = vmatpush1.msra.mxu0 %v4060
  %4185 = vmatprep.subr.mxu0 %v4063
  %4186 = vmatpush1.msra.mxu0 %v4062
  %4187 = vmatprep.subr.mxu0 %v4065
  %4188 = vmatpush1.msra.mxu0 %v4064
  %4189 = vmatprep.subr.mxu0 %v4067
  %4190 = vmatpush1.msra.mxu0 %v4066
  %4191 = vmatprep.subr.mxu0 %v4069
  %4192 = vmatpush1.msra.mxu0 %v4068
  %4193 = vmatprep.subr.mxu0 %v4071
  %4194 = vmatpush1.msra.mxu0 %v4070
  %4195 = vmatprep.subr.mxu0 %v4073
  %4196 = vmatpush1.msra.mxu0 %v4072
  %4197 = vmatprep.subr.mxu0 %v4075
  %4198 = vmatpush1.msra.mxu0 %v4074
  %4199 = vmatprep.subr.mxu0 %v4077
  %4200 = vmatpush1.msra.mxu0 %v4076
  %4201 = vmatprep.subr.mxu0 0.0
  %4202 = vmatpush1.msra.mxu0 0.0
  %4203 = vmatprep.subr.mxu0 0.0
  %4204 = vmatpush1.msra.mxu0 0.0
  %4205 = vmatprep.subr.mxu0 0.0
  %4206 = vmatpush1.msra.mxu0 0.0
  %4207 = vmatprep.subr.mxu0 0.0
  %4208 = vmatpush1.msra.mxu0 0.0
  %4209 = vmatprep.subr.mxu0 0.0
  %4210 = vmatpush1.msra.mxu0 0.0
  %4211 = vmatprep.subr.mxu0 0.0
  %4212 = vmatpush1.msra.mxu0 0.0
  %4213 = vmatprep.subr.mxu0 0.0
  %4214 = vmatpush1.msra.mxu0 0.0
  %4215 = vmatprep.subr.mxu0 0.0
  %4216 = vmatpush1.msra.mxu0 0.0
  %4217 = vmatprep.subr.mxu0 0.0
  %4218 = vmatpush1.msra.mxu0 0.0
  %4219 = vmatprep.subr.mxu0 0.0
  %4220 = vmatpush1.msra.mxu0 0.0
  %4221 = vmatprep.subr.mxu0 0.0
  %4222 = vmatpush1.msra.mxu0 0.0
  %4223 = vmatprep.subr.mxu0 0.0
  %4224 = vmatpush1.msra.mxu0 0.0
  %4225 = vmatprep.subr.mxu0 0.0
  %4226 = vmatpush1.msra.mxu0 0.0
  %4227 = vmatprep.subr.mxu0 0.0
  %4228 = vmatpush1.msra.mxu0 0.0
  %4229 = vmatprep.mubr.f32.mxu0 %v4092
  %4230 = vmatmul.mubr.f32.gmra.mrb[0].mxu0 %v3976
  %v4231 = vpop.f32.mrb[0].mxu0
  %v4232 = vadd.f32 %v4161, %v4231
  %v4233 = vpop.f32.mrb[0].mxu0
  %v4234 = vadd.f32 %v4163, %v4233
  %4235 = vdwg.mxu0
  %v4236 = vmax.f32 %v4232, 0.0
  %v4237 = vmax.f32 %v4234, 0.0
  %v4238 = vld [vmem:[#allocation8] sm:$0xff]
  %v4239 = vld [vmem:[#allocation8 + $0x8] sm:$0xff]
  %v4240 = vld [vmem:[#allocation8 + $0x10] sm:$0xff]
  %v4241 = vld [vmem:[#allocation8 + $0x18] sm:$0xff]
  %v4242 = vld [vmem:[#allocation8 + $0x20] sm:$0xff]
  %v4243 = vld [vmem:[#allocation8 + $0x28] sm:$0xff]
  %v4244 = vld [vmem:[#allocation8 + $0x30] sm:$0xff]
  %v4245 = vld [vmem:[#allocation8 + $0x38] sm:$0xff]
  %v4246 = vld [vmem:[#allocation8 + $0x40] sm:$0xff]
  %v4247 = vld [vmem:[#allocation8 + $0x48] sm:$0xff]
  %v4248 = vld [vmem:[#allocation8 + $0x50] sm:$0xff]
  %v4249 = vld [vmem:[#allocation8 + $0x58] sm:$0xff]
  %v4250 = vld [vmem:[#allocation8 + $0x60] sm:$0xff]
  %v4251 = vld [vmem:[#allocation8 + $0x68] sm:$0xff]
  %v4252 = vld [vmem:[#allocation8 + $0x70] sm:$0xff]
  %v4253 = vld [vmem:[#allocation8 + $0x78] sm:$0xff]
  %v4254 = vld [vmem:[#allocation8 + $0x80] sm:$0xff]
  %v4255 = vld [vmem:[#allocation8 + $0x88] sm:$0xff]
  %v4256 = vld [vmem:[#allocation8 + $0x90] sm:$0xff]
  %v4257 = vld [vmem:[#allocation8 + $0x98] sm:$0xff]
  %v4258 = vld [vmem:[#allocation8 + $0xa0] sm:$0xff]
  %v4259 = vld [vmem:[#allocation8 + $0xa8] sm:$0xff]
  %v4260 = vld [vmem:[#allocation8 + $0xb0] sm:$0xff]
  %v4261 = vld [vmem:[#allocation8 + $0xb8] sm:$0xff]
  %v4262 = vld [vmem:[#allocation8 + $0xc0] sm:$0xff]
  %v4263 = vld [vmem:[#allocation8 + $0xc8] sm:$0xff]
  %v4264 = vld [vmem:[#allocation8 + $0xd0] sm:$0xff]
  %v4265 = vld [vmem:[#allocation8 + $0xd8] sm:$0xff]
  %v4266 = vld [vmem:[#allocation8 + $0xe0] sm:$0xff]
  %v4267 = vld [vmem:[#allocation8 + $0xe8] sm:$0xff]
  %v4268 = vld [vmem:[#allocation8 + $0xf0] sm:$0xff]
  %v4269 = vld [vmem:[#allocation8 + $0xf8] sm:$0xff]
  %v4270 = vld [vmem:[#allocation8 + $0x100] sm:$0xff]
  %v4271 = vld [vmem:[#allocation8 + $0x108] sm:$0xff]
  %v4272 = vld [vmem:[#allocation8 + $0x110] sm:$0xff]
  %v4273 = vld [vmem:[#allocation8 + $0x118] sm:$0xff]
  %v4274 = vld [vmem:[#allocation8 + $0x120] sm:$0xff]
  %v4275 = vld [vmem:[#allocation8 + $0x128] sm:$0xff]
  %v4276 = vld [vmem:[#allocation8 + $0x130] sm:$0xff]
  %v4277 = vld [vmem:[#allocation8 + $0x138] sm:$0xff]
  %v4278 = vld [vmem:[#allocation8 + $0x140] sm:$0xff]
  %v4279 = vld [vmem:[#allocation8 + $0x148] sm:$0xff]
  %v4280 = vld [vmem:[#allocation8 + $0x150] sm:$0xff]
  %v4281 = vld [vmem:[#allocation8 + $0x158] sm:$0xff]
  %v4282 = vld [vmem:[#allocation8 + $0x160] sm:$0xff]
  %v4283 = vld [vmem:[#allocation8 + $0x168] sm:$0xff]
  %v4284 = vld [vmem:[#allocation8 + $0x170] sm:$0xff]
  %v4285 = vld [vmem:[#allocation8 + $0x178] sm:$0xff]
  %v4286 = vld [vmem:[#allocation8 + $0x180] sm:$0xff]
  %v4287 = vld [vmem:[#allocation8 + $0x188] sm:$0xff]
  %v4288 = vld [vmem:[%s2 + $0x9] sm:$0x3]
  %v4290 = vlaneseq
  %v4291 = vshrl.u32 %v4290, 7
  %v4292 = vsub.s32 0, %v4291
  %v4293 = vrot.slane %v4288, %v4292
  %v4294 = vlaneseq
  %v4295 = vshrl.u32 %v4294, 7
  %v4296 = vsub.s32 1, %v4295
  %v4297 = vrot.slane %v4288, %v4296
  %vm4300 = vcmask 588800
  %v4302 = vsel %vm4300, %v4237, 0
  %4304 = vmatprep.subr.mxu0 %v4239
  %4305 = vmatpush1.msra.mxu0 %v4238
  %4306 = vmatprep.subr.mxu0 %v4241
  %4307 = vmatpush1.msra.mxu0 %v4240
  %4308 = vmatprep.subr.mxu0 %v4243
  %4309 = vmatpush1.msra.mxu0 %v4242
  %4310 = vmatprep.subr.mxu0 %v4245
  %4311 = vmatpush1.msra.mxu0 %v4244
  %4312 = vmatprep.subr.mxu0 %v4247
  %4313 = vmatpush1.msra.mxu0 %v4246
  %4314 = vmatprep.subr.mxu0 %v4249
  %4315 = vmatpush1.msra.mxu0 %v4248
  %4316 = vmatprep.subr.mxu0 %v4251
  %4317 = vmatpush1.msra.mxu0 %v4250
  %4318 = vmatprep.subr.mxu0 %v4253
  %4319 = vmatpush1.msra.mxu0 %v4252
  %4320 = vmatprep.subr.mxu0 %v4255
  %4321 = vmatpush1.msra.mxu0 %v4254
  %4322 = vmatprep.subr.mxu0 %v4257
  %4323 = vmatpush1.msra.mxu0 %v4256
  %4324 = vmatprep.subr.mxu0 %v4259
  %4325 = vmatpush1.msra.mxu0 %v4258
  %4326 = vmatprep.subr.mxu0 %v4261
  %4327 = vmatpush1.msra.mxu0 %v4260
  %4328 = vmatprep.subr.mxu0 %v4263
  %4329 = vmatpush1.msra.mxu0 %v4262
  %4330 = vmatprep.subr.mxu0 %v4265
  %4331 = vmatpush1.msra.mxu0 %v4264
  %4332 = vmatprep.subr.mxu0 %v4267
  %4333 = vmatpush1.msra.mxu0 %v4266
  %4334 = vmatprep.subr.mxu0 %v4269
  %4335 = vmatpush1.msra.mxu0 %v4268
  %4336 = vmatprep.subr.mxu0 %v4271
  %4337 = vmatpush1.msra.mxu0 %v4270
  %4338 = vmatprep.subr.mxu0 %v4273
  %4339 = vmatpush1.msra.mxu0 %v4272
  %4340 = vmatprep.subr.mxu0 %v4275
  %4341 = vmatpush1.msra.mxu0 %v4274
  %4342 = vmatprep.subr.mxu0 %v4277
  %4343 = vmatpush1.msra.mxu0 %v4276
  %4344 = vmatprep.subr.mxu0 %v4279
  %4345 = vmatpush1.msra.mxu0 %v4278
  %4346 = vmatprep.subr.mxu0 %v4281
  %4347 = vmatpush1.msra.mxu0 %v4280
  %4348 = vmatprep.subr.mxu0 %v4283
  %4349 = vmatpush1.msra.mxu0 %v4282
  %4350 = vmatprep.subr.mxu0 %v4285
  %4351 = vmatpush1.msra.mxu0 %v4284
  %4352 = vmatprep.subr.mxu0 %v4287
  %4353 = vmatpush1.msra.mxu0 %v4286
  %4354 = vmatprep.subr.mxu0 0.0
  %4355 = vmatpush1.msra.mxu0 0.0
  %4356 = vmatprep.subr.mxu0 0.0
  %4357 = vmatpush1.msra.mxu0 0.0
  %4358 = vmatprep.subr.mxu0 0.0
  %4359 = vmatpush1.msra.mxu0 0.0
  %4360 = vmatprep.subr.mxu0 0.0
  %4361 = vmatpush1.msra.mxu0 0.0
  %4362 = vmatprep.subr.mxu0 0.0
  %4363 = vmatpush1.msra.mxu0 0.0
  %4364 = vmatprep.subr.mxu0 0.0
  %4365 = vmatpush1.msra.mxu0 0.0
  %4366 = vmatprep.subr.mxu0 0.0
  %4367 = vmatpush1.msra.mxu0 0.0
  %4368 = vmatprep.mubr.f32.mxu0 %v4302
  %4369 = vmatmul.mubr.f32.gmra.mrb[0].mxu0 %v4236
  %v4370 = vpop.f32.mrb[0].mxu0
  %v4371 = vadd.f32 %v4293, %v4370
  %v4372 = vpop.f32.mrb[0].mxu0
  %v4373 = vadd.f32 %v4297, %v4372
  %4374 = vdwg.mxu0
  %v4375 = vmax.f32 %v4371, 0.0
  %v4376 = vmax.f32 %v4373, 0.0
  %v4377 = vld [vmem:[%s3] sm:$0xff]
  %v4378 = vld [vmem:[%s3 + $0x8] sm:$0xff]
  %v4379 = vld [vmem:[%s3 + $0x10] sm:$0xff]
  %v4380 = vld [vmem:[%s3 + $0x18] sm:$0xff]
  %v4381 = vld [vmem:[%s3 + $0x20] sm:$0xff]
  %v4382 = vld [vmem:[%s3 + $0x28] sm:$0xff]
  %v4383 = vld [vmem:[%s3 + $0x30] sm:$0xff]
  %v4384 = vld [vmem:[%s3 + $0x38] sm:$0xff]
  %v4385 = vld [vmem:[%s3 + $0x40] sm:$0xff]
  %v4386 = vld [vmem:[%s3 + $0x48] sm:$0xff]
  %v4387 = vld [vmem:[%s3 + $0x50] sm:$0xff]
  %v4388 = vld [vmem:[%s3 + $0x58] sm:$0xff]
  %v4389 = vld [vmem:[%s3 + $0x60] sm:$0xff]
  %v4390 = vld [vmem:[%s3 + $0x68] sm:$0xff]
  %v4391 = vld [vmem:[%s3 + $0x70] sm:$0xff]
  %v4392 = vld [vmem:[%s3 + $0x78] sm:$0xff]
  %v4393 = vld [vmem:[%s3 + $0x80] sm:$0xff]
  %v4394 = vld [vmem:[%s3 + $0x88] sm:$0xff]
  %v4395 = vld [vmem:[%s3 + $0x90] sm:$0xff]
  %v4396 = vld [vmem:[%s3 + $0x98] sm:$0xff]
  %v4397 = vld [vmem:[%s3 + $0xa0] sm:$0xff]
  %v4398 = vld [vmem:[%s3 + $0xa8] sm:$0xff]
  %v4399 = vld [vmem:[%s3 + $0xb0] sm:$0xff]
  %v4400 = vld [vmem:[%s3 + $0xb8] sm:$0xff]
  %v4401 = vld [vmem:[%s3 + $0xc0] sm:$0xff]
  %v4402 = vld [vmem:[%s2 + $0xb] sm:$0x1]
  %v4404 = vlaneseq
  %v4405 = vshrl.u32 %v4404, 7
  %v4406 = vsub.s32 0, %v4405
  %v4407 = vrot.slane %v4402, %v4406
  %v4410 = vsel %vm4300, %v4376, 0
  %4412 = vmatprep.subr.mxu0 0.0
  %4413 = vmatpush1.msra.mxu0 %v4377
  %4414 = vmatprep.subr.mxu0 0.0
  %4415 = vmatpush1.msra.mxu0 %v4378
  %4416 = vmatprep.subr.mxu0 0.0
  %4417 = vmatpush1.msra.mxu0 %v4379
  %4418 = vmatprep.subr.mxu0 0.0
  %4419 = vmatpush1.msra.mxu0 %v4380
  %4420 = vmatprep.subr.mxu0 0.0
  %4421 = vmatpush1.msra.mxu0 %v4381
  %4422 = vmatprep.subr.mxu0 0.0
  %4423 = vmatpush1.msra.mxu0 %v4382
  %4424 = vmatprep.subr.mxu0 0.0
  %4425 = vmatpush1.msra.mxu0 %v4383
  %4426 = vmatprep.subr.mxu0 0.0
  %4427 = vmatpush1.msra.mxu0 %v4384
  %4428 = vmatprep.subr.mxu0 0.0
  %4429 = vmatpush1.msra.mxu0 %v4385
  %4430 = vmatprep.subr.mxu0 0.0
  %4431 = vmatpush1.msra.mxu0 %v4386
  %4432 = vmatprep.subr.mxu0 0.0
  %4433 = vmatpush1.msra.mxu0 %v4387
  %4434 = vmatprep.subr.mxu0 0.0
  %4435 = vmatpush1.msra.mxu0 %v4388
  %4436 = vmatprep.subr.mxu0 0.0
  %4437 = vmatpush1.msra.mxu0 %v4389
  %4438 = vmatprep.subr.mxu0 0.0
  %4439 = vmatpush1.msra.mxu0 %v4390
  %4440 = vmatprep.subr.mxu0 0.0
  %4441 = vmatpush1.msra.mxu0 %v4391
  %4442 = vmatprep.subr.mxu0 0.0
  %4443 = vmatpush1.msra.mxu0 %v4392
  %4444 = vmatprep.subr.mxu0 0.0
  %4445 = vmatpush1.msra.mxu0 %v4393
  %4446 = vmatprep.subr.mxu0 0.0
  %4447 = vmatpush1.msra.mxu0 %v4394
  %4448 = vmatprep.subr.mxu0 0.0
  %4449 = vmatpush1.msra.mxu0 %v4395
  %4450 = vmatprep.subr.mxu0 0.0
  %4451 = vmatpush1.msra.mxu0 %v4396
  %4452 = vmatprep.subr.mxu0 0.0
  %4453 = vmatpush1.msra.mxu0 %v4397
  %4454 = vmatprep.subr.mxu0 0.0
  %4455 = vmatpush1.msra.mxu0 %v4398
  %4456 = vmatprep.subr.mxu0 0.0
  %4457 = vmatpush1.msra.mxu0 %v4399
  %4458 = vmatprep.subr.mxu0 0.0
  %4459 = vmatpush1.msra.mxu0 %v4400
  %4460 = vmatprep.subr.mxu0 0.0
  %4461 = vmatpush1.msra.mxu0 %v4401
  %4462 = vmatprep.subr.mxu0 0.0
  %4463 = vmatpush1.msra.mxu0 0.0
  %4464 = vmatprep.subr.mxu0 0.0
  %4465 = vmatpush1.msra.mxu0 0.0
  %4466 = vmatprep.subr.mxu0 0.0
  %4467 = vmatpush1.msra.mxu0 0.0
  %4468 = vmatprep.subr.mxu0 0.0
  %4469 = vmatpush1.msra.mxu0 0.0
  %4470 = vmatprep.subr.mxu0 0.0
  %4471 = vmatpush1.msra.mxu0 0.0
  %4472 = vmatprep.subr.mxu0 0.0
  %4473 = vmatpush1.msra.mxu0 0.0
  %4474 = vmatprep.subr.mxu0 0.0
  %4475 = vmatpush1.msra.mxu0 0.0
  %4476 = vmatprep.mubr.f32.mxu0 %v4410
  %4477 = vmatmul.mubr.f32.gmra.mrb[0].mxu0 %v4375
  %v4478 = vpop.f32.mrb[0].mxu0
  %v4479 = vadd.f32 %v4407, %v4478
  %v4480 = vpop.f32.mrb[0].mxu0
  %4481 = vdwg.mxu0
  %vm4482 = vcmask 1024
  %4483 = vst.msk [vmem:[%s8] sm:$0x3] %vm4482, %v4479
  // Predicated region
  $region154: #{tpu_custom_call.1} parent=0 // pred_check
    _
  $region155: #{tpu_custom_call.1} parent=0 // pred_check_branch
    %4485 = sbr.rel (0) target = $region157
  $region156: #{tpu_custom_call.1} parent=0 // pred_region
    _
  $region157: #{tpu_custom_call.1} parent=0 // pred_fallthru
    _
  // Predicated region
  $region158: #{tpu_custom_call.1} parent=0 // pred_check
    _
  $region159: #{tpu_custom_call.1} parent=0 // pred_check_branch
    %4487 = sbr.rel (0) target = $region161
  $region160: #{tpu_custom_call.1} parent=0 // pred_region
    _
  $region161: #{tpu_custom_call.1} parent=0 // pred_fallthru
    _
  %4488 = vsyncmov [#allocation9]
  %s4489 = vpop.sfrf %4488
  %p4490 = scmp.eq.s32.totalorder %s4489, 0
  %p4491 = pneg %p4490
  %4493 = shalt.err (%p4491)
  %s4494 = scalar_lea.sflag [#allocation9], 1
  %4495 = vsyncmov %s4494
  %s4496 = vpop.sfrf %4495
  %p4497 = scmp.eq.s32.totalorder %s4496, 0
  %p4498 = pneg %p4497
  %4500 = shalt.err (%p4498)
  %s4501 = scalar_lea.sflag [#allocation9], 2
  %4502 = vsyncmov %s4501
  %s4503 = vpop.sfrf %4502
  %p4504 = scmp.eq.s32.totalorder %s4503, 0
  %p4505 = pneg %p4504
  %4507 = shalt.err (%p4505)
  %s4508 = scalar_lea.sflag [#allocation9], 3
  %4509 = vsyncmov %s4508
  %s4510 = vpop.sfrf %4509
  %p4511 = scmp.eq.s32.totalorder %s4510, 0
  %p4512 = pneg %p4511
  %4514 = shalt.err (%p4512)

</llo_original>
